<compile_context>
chip_gen: v7x
topology: tpu7x:2x2x1
jax: 0.10.0
libtpu: 0.0.40
codegen_flags: <defaults>
</compile_context>

<pallas_src>
import functools

import jax
import jax.numpy as jnp
from jax.experimental import pallas as pl
from jax.experimental.pallas import tpu as pltpu

LRELU_SLOPE = 0.2
BN_EPS = 1e-5

_TM_MAX = 512                      # output-pixel rows per grid step
_VMEM_LIMIT = 48 * 1024 * 1024     # headroom under v7x's 64 MiB physical VMEM


# ------------------------------ tiling helpers ------------------------------ #

def _round_up(x, m):
    return (x + m - 1) // m * m


def _cdiv(a, b):
    return -(-a // b)


def _tile_m(m):
    """M tile (multiple of 16 for bf16 sublane packing) and padded M."""
    m16 = _round_up(max(m, 1), 16)
    gm = _cdiv(m16, _TM_MAX)
    if gm == 1 and m16 > 256:          # give v7x's second TensorCore work
        gm = 2
    tm = _round_up(_cdiv(m16, gm), 16)
    m_pad = _round_up(m16, tm)
    return tm, m_pad


# ----------------------------- Pallas kernels ------------------------------ #

def _mm_bias_act_kernel(x_ref, w_ref, b_ref, o_ref, *, slope, act):
    """(TM, K_pad) @ (K_pad, OC) + bias (+ optional LeakyReLU).

    Weights/bias use constant index_maps -> DMA'd once and VMEM-resident across the
    whole M grid; x is the only streamed operand."""
    y = jnp.dot(x_ref[...], w_ref[...], preferred_element_type=jnp.float32)
    y = y + b_ref[...]
    if act:
        y = jnp.where(y >= 0, y, slope * y)
    o_ref[...] = y.astype(o_ref.dtype)


def _mm_stats_kernel(x_ref, w_ref, y_ref, st_ref):
    """Matmul (no bias: cancelled by train-mode BatchNorm) + streamed per-channel
    sum / sum-of-squares taken from the f32 accumulator.

    Zero-padded M rows of x give exactly-zero output rows (no bias), so they
    contribute zero to both sums and no masking is needed."""
    y = jnp.dot(x_ref[...], w_ref[...], preferred_element_type=jnp.float32)
    y_ref[...] = y.astype(y_ref.dtype)                 # bf16 intermediate to HBM
    s = jnp.sum(y, axis=0, keepdims=True)
    ss = jnp.sum(y * y, axis=0, keepdims=True)
    st_ref[...] = jnp.concatenate([s, ss], axis=0)[None]   # (1, 2, OC) slab


# --------------------------- pallas_call wrappers --------------------------- #

def _x_spec(tm, k_pad, gm):
    idx = lambda i: (i, 0)
    if gm >= 3:
        # Only the x tile streams from HBM once weights are resident; a deeper buffer
        # hides DMA latency on the low arithmetic-intensity layers.
        return pl.BlockSpec((tm, k_pad), idx, pipeline_mode=pl.Buffered(3))
    return pl.BlockSpec((tm, k_pad), idx)


def _prep_matmul(x_mat, w_mat):
    m, k = x_mat.shape
    oc = w_mat.shape[1]
    k_pad = _round_up(k, 128)
    tm, m_pad = _tile_m(m)
    gm = m_pad // tm
    xb = jnp.pad(x_mat, ((0, m_pad - m), (0, k_pad - k))).astype(jnp.bfloat16)
    wb = jnp.pad(w_mat, ((0, k_pad - k), (0, 0))).astype(jnp.bfloat16)
    return xb, wb, (m, m_pad, k_pad, oc, tm, gm)


def _matmul_bias_act(x_mat, w_mat, bias, *, act, out_dtype):
    xb, wb, (m, m_pad, k_pad, oc, tm, gm) = _prep_matmul(x_mat, w_mat)
    bias2 = bias.reshape(1, oc).astype(jnp.float32)
    out_bytes = jnp.dtype(out_dtype).itemsize
    y = pl.pallas_call(
        functools.partial(_mm_bias_act_kernel, slope=LRELU_SLOPE, act=act),
        grid=(gm,),
        in_specs=[
            _x_spec(tm, k_pad, gm),
            pl.BlockSpec((k_pad, oc), lambda i: (0, 0)),   # resident weights
            pl.BlockSpec((1, oc), lambda i: (0, 0)),       # resident bias
        ],
        out_specs=pl.BlockSpec((tm, oc), lambda i: (i, 0)),
        out_shape=jax.ShapeDtypeStruct((m_pad, oc), out_dtype),
        compiler_params=pltpu.CompilerParams(
            dimension_semantics=("parallel",),
            vmem_limit_bytes=_VMEM_LIMIT),
        cost_estimate=pl.CostEstimate(
            flops=2 * m_pad * k_pad * oc, transcendentals=0,
            bytes_accessed=m_pad * k_pad * 2 + k_pad * oc * 2 + m_pad * oc * out_bytes),
    )(xb, wb, bias2)
    return y, m


def _matmul_stats(x_mat, w_mat):
    xb, wb, (m, m_pad, k_pad, oc, tm, gm) = _prep_matmul(x_mat, w_mat)
    y, stats = pl.pallas_call(
        _mm_stats_kernel,
        grid=(gm,),
        in_specs=[
            _x_spec(tm, k_pad, gm),
            pl.BlockSpec((k_pad, oc), lambda i: (0, 0)),   # resident weights
        ],
        out_specs=[
            pl.BlockSpec((tm, oc), lambda i: (i, 0)),
            pl.BlockSpec((1, 2, oc), lambda i: (i, 0, 0)),
        ],
        out_shape=[
            jax.ShapeDtypeStruct((m_pad, oc), jnp.bfloat16),   # bf16 intermediate
            jax.ShapeDtypeStruct((gm, 2, oc), jnp.float32),    # per-tile sum / sumsq
        ],
        compiler_params=pltpu.CompilerParams(
            dimension_semantics=("parallel",),
            vmem_limit_bytes=_VMEM_LIMIT),
        cost_estimate=pl.CostEstimate(
            flops=2 * m_pad * k_pad * oc, transcendentals=0,
            bytes_accessed=(m_pad * k_pad * 2 + k_pad * oc * 2
                            + m_pad * oc * 2 + gm * 2 * oc * 4)),
    )(xb, wb)
    return y, stats, m


# ------------------------------- JAX glue ---------------------------------- #

def _bn_lrelu_fold(x_nhwc, scale, shift):
    """Folded BatchNorm scale/shift + LeakyReLU, applied in the CONSUMER's im2col
    producer so XLA fuses it into the gather (no standalone HBM pass)."""
    y = x_nhwc.astype(jnp.float32) * scale + shift
    return jnp.where(y >= 0, y, LRELU_SLOPE * y).astype(jnp.bfloat16)


def _im2col(x_nhwc, kh, kw, stride, pad, scale=None, shift=None):
    """(N,H,W,C) -> (N*OH*OW, KH*KW*C) patch matrix.  pad = ((top,bot),(left,right)).

    If scale/shift are given, the producer layer's folded BN + LeakyReLU is applied
    BEFORE zero padding, so padded pixels are zeros of the *normalized* activation,
    matching the reference module."""
    if scale is not None:
        x_nhwc = _bn_lrelu_fold(x_nhwc, scale, shift)
    x = jnp.pad(x_nhwc, ((0, 0), pad[0], pad[1], (0, 0)))
    n, h, w, c = x.shape
    oh = (h - kh) // stride + 1
    ow = (w - kw) // stride + 1
    cols = []
    for i in range(kh):
        for j in range(kw):
            cols.append(x[:, i:i + stride * oh:stride, j:j + stride * ow:stride, :])
    patches = jnp.stack(cols, axis=3)                      # (N, OH, OW, KH*KW, C)
    return patches.reshape(n * oh * ow, kh * kw * c), (n, oh, ow)


def _w_to_mat(w_ocihw):
    # PyTorch conv weight (OC, IC, KH, KW) -> (KH*KW*IC, OC) matching im2col order.
    oc, ic, kh, kw = w_ocihw.shape
    return jnp.transpose(w_ocihw, (2, 3, 1, 0)).reshape(kh * kw * ic, oc)


def _conv_lrelu(x_nhwc, w, b, *, stride, pad):
    kh, kw = w.shape[2], w.shape[3]
    x_mat, (n, oh, ow) = _im2col(x_nhwc, kh, kw, stride, pad)
    y, m = _matmul_bias_act(x_mat, _w_to_mat(w), b, act=True, out_dtype=jnp.bfloat16)
    return y[:m].reshape(n, oh, ow, w.shape[0])


def _conv_bn(x_nhwc, w, gamma, beta, *, stride, pad, in_scale=None, in_shift=None):
    """Conv (bias omitted: exactly cancelled by training-mode BatchNorm) returning the
    raw bf16 conv output plus folded BN+LeakyReLU scale/shift for the consumer."""
    kh, kw = w.shape[2], w.shape[3]
    x_mat, (n, oh, ow) = _im2col(x_nhwc, kh, kw, stride, pad, in_scale, in_shift)
    y, stats, m = _matmul_stats(x_mat, _w_to_mat(w))
    # Tiny per-channel finalize in plain JAX (gm x 2 x OC elements).
    s = jnp.sum(stats[:, 0, :], axis=0)
    ss = jnp.sum(stats[:, 1, :], axis=0)
    mean = s / m
    # NOTE: E[y^2]-E[y]^2 in f32; fine at init, could cancel for trained weights.
    var = jnp.maximum(ss / m - mean * mean, 0.0)   # biased var (BN forward, train mode)
    scale = gamma * jax.lax.rsqrt(var + BN_EPS)
    shift = beta - mean * scale
    return y[:m].reshape(n, oh, ow, w.shape[0]), scale, shift


def _conv_final(x_nhwc, w, b, *, stride, pad, in_scale, in_shift, oc_pad=128):
    # OC=1 would force lane-sparse masked stores; pad to 128 zero columns instead.
    kh, kw = w.shape[2], w.shape[3]
    oc = w.shape[0]
    x_mat, (n, oh, ow) = _im2col(x_nhwc, kh, kw, stride, pad, in_scale, in_shift)
    w_mat = jnp.pad(_w_to_mat(w), ((0, 0), (0, oc_pad - oc)))
    b_p = jnp.pad(b, (0, oc_pad - oc))
    y, m = _matmul_bias_act(x_mat, w_mat, b_p, act=False, out_dtype=jnp.float32)
    return y[:m, :oc].reshape(n, oh, ow, oc)


# ------------------------------ model wrapper ------------------------------- #

def init_params(key, input_channels=3):
    ks = jax.random.split(key, 4)

    def conv_w(k, oc, ic, kh=4, kw=4):
        fan_in = ic * kh * kw
        return jax.random.normal(k, (oc, ic, kh, kw), jnp.float32) / jnp.sqrt(fan_in)

    # b2/b3 are kept for parity with the PyTorch module but are mathematically
    # cancelled by the training-mode BatchNorm that follows, so forward skips them.
    return {
        "w1": conv_w(ks[0], 64, input_channels), "b1": jnp.zeros((64,), jnp.float32),
        "w2": conv_w(ks[1], 128, 64), "b2": jnp.zeros((128,), jnp.float32),
        "g2": jnp.ones((128,), jnp.float32), "be2": jnp.zeros((128,), jnp.float32),
        "w3": conv_w(ks[2], 256, 128), "b3": jnp.zeros((256,), jnp.float32),
        "g3": jnp.ones((256,), jnp.float32), "be3": jnp.zeros((256,), jnp.float32),
        "w4": conv_w(ks[3], 1, 256), "b4": jnp.zeros((1,), jnp.float32),
    }


def discriminator_forward(x_nchw, p):
    # NCHW -> NHWC, bf16 up front (halves first-layer gather traffic).
    x = jnp.transpose(x_nchw, (0, 2, 3, 1)).astype(jnp.bfloat16)

    x = _conv_lrelu(x, p["w1"], p["b1"], stride=2, pad=((1, 1), (1, 1)))      # (N, H/2, W/2, 64)
    y2, sc2, sh2 = _conv_bn(x, p["w2"], p["g2"], p["be2"],
                            stride=2, pad=((1, 1), (1, 1)))                   # raw conv2 out
    y3, sc3, sh3 = _conv_bn(y2, p["w3"], p["g3"], p["be3"],
                            stride=2, pad=((1, 1), (1, 1)),
                            in_scale=sc2, in_shift=sh2)                       # raw conv3 out
    # nn.ZeroPad2d((left=1,right=0,top=1,bottom=0)) + Conv2d(padding=1) folded into one
    # asymmetric pad ((top=2,bot=1),(left=2,right=1)); BN3+LReLU folded into the gather.
    out = _conv_final(y3, p["w4"], p["b4"], stride=1, pad=((2, 1), (2, 1)),
                      in_scale=sc3, in_shift=sh3)                             # (N, h, w, 1)

    return jnp.transpose(out, (0, 3, 1, 2))                                   # NHWC -> NCHW


if __name__ == "__main__":
    key = jax.random.PRNGKey(0)
    k_x, k_p = jax.random.split(key)

    # Small input consistent with the module: NCHW, 3 input channels, 16x16 spatial.
    x = jax.random.normal(k_x, (2, 3, 16, 16), jnp.float32)
    params = init_params(k_p, input_channels=3)

    fwd = jax.jit(discriminator_forward)
    out = jax.block_until_ready(fwd(x, params))

    assert out.shape == (2, 1, 2, 2), out.shape
    assert bool(jnp.all(jnp.isfinite(out)))
    print("KERNEL_OK")
</pallas_src>

<mosaic_0001>
module attributes {stable_mosaic.version = 11 : i64} {
  func.func @_mm_bias_act_kernel(%arg0: i32, %arg1: memref<128x128xbf16, #tpu.memory_space<vmem>>, %arg2: memref<128x64xbf16, #tpu.memory_space<vmem>>, %arg3: memref<1x64xf32, #tpu.memory_space<vmem>>, %arg4: memref<128x64xbf16, #tpu.memory_space<vmem>>) attributes {dimension_semantics = [#tpu.dimension_semantics<parallel>], iteration_bounds = array<i64: 1>, scalar_prefetch = 0 : i64, scratch_operands = 0 : i64, tpu.core_type = #tpu.core_type<tc>, window_params = [{transform_indices = @transform_0, window_bounds = array<i64: 128, 128>}, {pipeline_mode = #tpu.pipeline_mode<synchronous>, transform_indices = @transform_1, window_bounds = array<i64: 128, 64>}, {pipeline_mode = #tpu.pipeline_mode<synchronous>, transform_indices = @transform_2, window_bounds = array<i64: 1, 64>}, {transform_indices = @transform_3, window_bounds = array<i64: 128, 64>}]} {
    %c0 = arith.constant 0 : index
    %c0_0 = arith.constant 0 : index
    %0 = vector.load %arg1[%c0, %c0_0] : memref<128x128xbf16, #tpu.memory_space<vmem>>, vector<128x128xbf16>
    %c0_1 = arith.constant 0 : index
    %c0_2 = arith.constant 0 : index
    %1 = vector.load %arg2[%c0_1, %c0_2] : memref<128x64xbf16, #tpu.memory_space<vmem>>, vector<128x64xbf16>
    %cst = arith.constant dense<0.000000e+00> : vector<128x64xf32>
    %2 = tpu.matmul %0, %1, %cst {dimension_numbers = #tpu.dot_dimension_numbers<[1], [0], [0], [1], [0, 0, 1, 1], [], []>} : vector<128x128xbf16>, vector<128x64xbf16>, vector<128x64xf32> -> vector<128x64xf32>
    %c0_3 = arith.constant 0 : index
    %c0_4 = arith.constant 0 : index
    %3 = vector.load %arg3[%c0_3, %c0_4] : memref<1x64xf32, #tpu.memory_space<vmem>>, vector<1x64xf32>
    %4 = vector.broadcast %3 : vector<1x64xf32> to vector<128x64xf32>
    %5 = arith.addf %2, %4 : vector<128x64xf32>
    %cst_5 = arith.constant 0.000000e+00 : f32
    %6 = vector.broadcast %cst_5 : f32 to vector<128x64xf32>
    %7 = arith.cmpf oge, %5, %6 : vector<128x64xf32>
    %cst_6 = arith.constant 2.000000e-01 : f32
    %8 = vector.broadcast %cst_6 : f32 to vector<128x64xf32>
    %9 = arith.mulf %8, %5 : vector<128x64xf32>
    %10 = arith.select %7, %5, %9 : vector<128x64xi1>, vector<128x64xf32>
    %11 = arith.truncf %10 : vector<128x64xf32> to vector<128x64xbf16>
    %c0_7 = arith.constant 0 : index
    %c0_8 = arith.constant 0 : index
    %12 = vector.load %arg4[%c0_7, %c0_8] : memref<128x64xbf16, #tpu.memory_space<vmem>>, vector<128x64xbf16>
    tpu.vector_store %arg4[%c0_7, %c0_8], %11 {strides = array<i32>} : memref<128x64xbf16, #tpu.memory_space<vmem>>, vector<128x64xbf16>,
    return
  }
  func.func @transform_0(%arg0: i32) -> (i32, i32) {
    %c0_i32 = arith.constant 0 : i32
    %c0_i32_0 = arith.constant 0 : i32
    return %arg0, %c0_i32 : i32, i32
  }
  func.func @transform_1(%arg0: i32) -> (i32, i32) {
    %c0_i32 = arith.constant 0 : i32
    %c0_i32_0 = arith.constant 0 : i32
    %c0_i32_1 = arith.constant 0 : i32
    return %c0_i32, %c0_i32_0 : i32, i32
  }
  func.func @transform_2(%arg0: i32) -> (i32, i32) {
    %c0_i32 = arith.constant 0 : i32
    %c0_i32_0 = arith.constant 0 : i32
    %c0_i32_1 = arith.constant 0 : i32
    return %c0_i32, %c0_i32_0 : i32, i32
  }
  func.func @transform_3(%arg0: i32) -> (i32, i32) {
    %c0_i32 = arith.constant 0 : i32
    %c0_i32_0 = arith.constant 0 : i32
    return %arg0, %c0_i32 : i32, i32
  }
}

module attributes {stable_mosaic.version = 11 : i64} {
  func.func @_mm_stats_kernel(%arg0: i32, %arg1: memref<32x1024xbf16, #tpu.memory_space<vmem>>, %arg2: memref<1024x128xbf16, #tpu.memory_space<vmem>>, %arg3: memref<32x128xbf16, #tpu.memory_space<vmem>>, %arg4: memref<1x2x128xf32, #tpu.memory_space<vmem>>) attributes {dimension_semantics = [#tpu.dimension_semantics<parallel>], iteration_bounds = array<i64: 1>, scalar_prefetch = 0 : i64, scratch_operands = 0 : i64, tpu.core_type = #tpu.core_type<tc>, window_params = [{transform_indices = @transform_0, window_bounds = array<i64: 32, 1024>}, {pipeline_mode = #tpu.pipeline_mode<synchronous>, transform_indices = @transform_1, window_bounds = array<i64: 1024, 128>}, {transform_indices = @transform_2, window_bounds = array<i64: 32, 128>}, {transform_indices = @transform_3, window_bounds = array<i64: 1, 2, 128>}]} {
    %c0 = arith.constant 0 : index
    %c0_0 = arith.constant 0 : index
    %0 = vector.load %arg1[%c0, %c0_0] : memref<32x1024xbf16, #tpu.memory_space<vmem>>, vector<32x1024xbf16>
    %c0_1 = arith.constant 0 : index
    %c0_2 = arith.constant 0 : index
    %1 = vector.load %arg2[%c0_1, %c0_2] : memref<1024x128xbf16, #tpu.memory_space<vmem>>, vector<1024x128xbf16>
    %cst = arith.constant dense<0.000000e+00> : vector<32x128xf32>
    %2 = tpu.matmul %0, %1, %cst {dimension_numbers = #tpu.dot_dimension_numbers<[1], [0], [0], [1], [0, 0, 1, 1], [], []>} : vector<32x1024xbf16>, vector<1024x128xbf16>, vector<32x128xf32> -> vector<32x128xf32>
    %3 = arith.truncf %2 : vector<32x128xf32> to vector<32x128xbf16>
    %c0_3 = arith.constant 0 : index
    %c0_4 = arith.constant 0 : index
    %4 = vector.load %arg3[%c0_3, %c0_4] : memref<32x128xbf16, #tpu.memory_space<vmem>>, vector<32x128xbf16>
    tpu.vector_store %arg3[%c0_3, %c0_4], %3 {strides = array<i32>} : memref<32x128xbf16, #tpu.memory_space<vmem>>, vector<32x128xbf16>,
    %cst_5 = arith.constant dense<0.000000e+00> : vector<128xf32>
    %5 = vector.multi_reduction <add>, %2, %cst_5 [0] : vector<32x128xf32> to vector<128xf32>
    %6 = vector.shape_cast %5 : vector<128xf32> to vector<1x128xf32>
    %7 = arith.mulf %2, %2 : vector<32x128xf32>
    %cst_6 = arith.constant dense<0.000000e+00> : vector<128xf32>
    %8 = vector.multi_reduction <add>, %7, %cst_6 [0] : vector<32x128xf32> to vector<128xf32>
    %9 = vector.shape_cast %8 : vector<128xf32> to vector<1x128xf32>
    %10 = tpu.concatenate %6, %9 in 0 : vector<1x128xf32>, vector<1x128xf32> -> vector<2x128xf32>
    %11 = vector.shape_cast %10 : vector<2x128xf32> to vector<1x2x128xf32>
    %c0_7 = arith.constant 0 : index
    %c0_8 = arith.constant 0 : index
    %c0_9 = arith.constant 0 : index
    %12 = vector.load %arg4[%c0_7, %c0_8, %c0_9] : memref<1x2x128xf32, #tpu.memory_space<vmem>>, vector<1x2x128xf32>
    tpu.vector_store %arg4[%c0_7, %c0_8, %c0_9], %11 {strides = array<i32>} : memref<1x2x128xf32, #tpu.memory_space<vmem>>, vector<1x2x128xf32>,
    return
  }
  func.func @transform_0(%arg0: i32) -> (i32, i32) {
    %c0_i32 = arith.constant 0 : i32
    %c0_i32_0 = arith.constant 0 : i32
    return %arg0, %c0_i32 : i32, i32
  }
  func.func @transform_1(%arg0: i32) -> (i32, i32) {
    %c0_i32 = arith.constant 0 : i32
    %c0_i32_0 = arith.constant 0 : i32
    %c0_i32_1 = arith.constant 0 : i32
    return %c0_i32, %c0_i32_0 : i32, i32
  }
  func.func @transform_2(%arg0: i32) -> (i32, i32) {
    %c0_i32 = arith.constant 0 : i32
    %c0_i32_0 = arith.constant 0 : i32
    return %arg0, %c0_i32 : i32, i32
  }
  func.func @transform_3(%arg0: i32) -> (i32, i32, i32) {
    %c0_i32 = arith.constant 0 : i32
    %c0_i32_0 = arith.constant 0 : i32
    %c0_i32_1 = arith.constant 0 : i32
    return %arg0, %c0_i32, %c0_i32_0 : i32, i32, i32
  }
}

module attributes {stable_mosaic.version = 11 : i64} {
  func.func @_mm_stats_kernel(%arg0: i32, %arg1: memref<16x2048xbf16, #tpu.memory_space<vmem>>, %arg2: memref<2048x256xbf16, #tpu.memory_space<vmem>>, %arg3: memref<16x256xbf16, #tpu.memory_space<vmem>>, %arg4: memref<1x2x256xf32, #tpu.memory_space<vmem>>) attributes {dimension_semantics = [#tpu.dimension_semantics<parallel>], iteration_bounds = array<i64: 1>, scalar_prefetch = 0 : i64, scratch_operands = 0 : i64, tpu.core_type = #tpu.core_type<tc>, window_params = [{transform_indices = @transform_0, window_bounds = array<i64: 16, 2048>}, {pipeline_mode = #tpu.pipeline_mode<synchronous>, transform_indices = @transform_1, window_bounds = array<i64: 2048, 256>}, {transform_indices = @transform_2, window_bounds = array<i64: 16, 256>}, {transform_indices = @transform_3, window_bounds = array<i64: 1, 2, 256>}]} {
    %c0 = arith.constant 0 : index
    %c0_0 = arith.constant 0 : index
    %0 = vector.load %arg1[%c0, %c0_0] : memref<16x2048xbf16, #tpu.memory_space<vmem>>, vector<16x2048xbf16>
    %c0_1 = arith.constant 0 : index
    %c0_2 = arith.constant 0 : index
    %1 = vector.load %arg2[%c0_1, %c0_2] : memref<2048x256xbf16, #tpu.memory_space<vmem>>, vector<2048x256xbf16>
    %cst = arith.constant dense<0.000000e+00> : vector<16x256xf32>
    %2 = tpu.matmul %0, %1, %cst {dimension_numbers = #tpu.dot_dimension_numbers<[1], [0], [0], [1], [0, 0, 1, 1], [], []>} : vector<16x2048xbf16>, vector<2048x256xbf16>, vector<16x256xf32> -> vector<16x256xf32>
    %3 = arith.truncf %2 : vector<16x256xf32> to vector<16x256xbf16>
    %c0_3 = arith.constant 0 : index
    %c0_4 = arith.constant 0 : index
    %4 = vector.load %arg3[%c0_3, %c0_4] : memref<16x256xbf16, #tpu.memory_space<vmem>>, vector<16x256xbf16>
    tpu.vector_store %arg3[%c0_3, %c0_4], %3 {strides = array<i32>} : memref<16x256xbf16, #tpu.memory_space<vmem>>, vector<16x256xbf16>,
    %cst_5 = arith.constant dense<0.000000e+00> : vector<256xf32>
    %5 = vector.multi_reduction <add>, %2, %cst_5 [0] : vector<16x256xf32> to vector<256xf32>
    %6 = vector.shape_cast %5 : vector<256xf32> to vector<1x256xf32>
    %7 = arith.mulf %2, %2 : vector<16x256xf32>
    %cst_6 = arith.constant dense<0.000000e+00> : vector<256xf32>
    %8 = vector.multi_reduction <add>, %7, %cst_6 [0] : vector<16x256xf32> to vector<256xf32>
    %9 = vector.shape_cast %8 : vector<256xf32> to vector<1x256xf32>
    %10 = tpu.concatenate %6, %9 in 0 : vector<1x256xf32>, vector<1x256xf32> -> vector<2x256xf32>
    %11 = vector.shape_cast %10 : vector<2x256xf32> to vector<1x2x256xf32>
    %c0_7 = arith.constant 0 : index
    %c0_8 = arith.constant 0 : index
    %c0_9 = arith.constant 0 : index
    %12 = vector.load %arg4[%c0_7, %c0_8, %c0_9] : memref<1x2x256xf32, #tpu.memory_space<vmem>>, vector<1x2x256xf32>
    tpu.vector_store %arg4[%c0_7, %c0_8, %c0_9], %11 {strides = array<i32>} : memref<1x2x256xf32, #tpu.memory_space<vmem>>, vector<1x2x256xf32>,
    return
  }
  func.func @transform_0(%arg0: i32) -> (i32, i32) {
    %c0_i32 = arith.constant 0 : i32
    %c0_i32_0 = arith.constant 0 : i32
    return %arg0, %c0_i32 : i32, i32
  }
  func.func @transform_1(%arg0: i32) -> (i32, i32) {
    %c0_i32 = arith.constant 0 : i32
    %c0_i32_0 = arith.constant 0 : i32
    %c0_i32_1 = arith.constant 0 : i32
    return %c0_i32, %c0_i32_0 : i32, i32
  }
  func.func @transform_2(%arg0: i32) -> (i32, i32) {
    %c0_i32 = arith.constant 0 : i32
    %c0_i32_0 = arith.constant 0 : i32
    return %arg0, %c0_i32 : i32, i32
  }
  func.func @transform_3(%arg0: i32) -> (i32, i32, i32) {
    %c0_i32 = arith.constant 0 : i32
    %c0_i32_0 = arith.constant 0 : i32
    %c0_i32_1 = arith.constant 0 : i32
    return %arg0, %c0_i32, %c0_i32_0 : i32, i32, i32
  }
}

module attributes {stable_mosaic.version = 11 : i64} {
  func.func @_mm_bias_act_kernel(%arg0: i32, %arg1: memref<16x4096xbf16, #tpu.memory_space<vmem>>, %arg2: memref<4096x128xbf16, #tpu.memory_space<vmem>>, %arg3: memref<1x128xf32, #tpu.memory_space<vmem>>, %arg4: memref<16x128xf32, #tpu.memory_space<vmem>>) attributes {dimension_semantics = [#tpu.dimension_semantics<parallel>], iteration_bounds = array<i64: 1>, scalar_prefetch = 0 : i64, scratch_operands = 0 : i64, tpu.core_type = #tpu.core_type<tc>, window_params = [{transform_indices = @transform_0, window_bounds = array<i64: 16, 4096>}, {pipeline_mode = #tpu.pipeline_mode<synchronous>, transform_indices = @transform_1, window_bounds = array<i64: 4096, 128>}, {pipeline_mode = #tpu.pipeline_mode<synchronous>, transform_indices = @transform_2, window_bounds = array<i64: 1, 128>}, {transform_indices = @transform_3, window_bounds = array<i64: 16, 128>}]} {
    %c0 = arith.constant 0 : index
    %c0_0 = arith.constant 0 : index
    %0 = vector.load %arg1[%c0, %c0_0] : memref<16x4096xbf16, #tpu.memory_space<vmem>>, vector<16x4096xbf16>
    %c0_1 = arith.constant 0 : index
    %c0_2 = arith.constant 0 : index
    %1 = vector.load %arg2[%c0_1, %c0_2] : memref<4096x128xbf16, #tpu.memory_space<vmem>>, vector<4096x128xbf16>
    %cst = arith.constant dense<0.000000e+00> : vector<16x128xf32>
    %2 = tpu.matmul %0, %1, %cst {dimension_numbers = #tpu.dot_dimension_numbers<[1], [0], [0], [1], [0, 0, 1, 1], [], []>} : vector<16x4096xbf16>, vector<4096x128xbf16>, vector<16x128xf32> -> vector<16x128xf32>
    %c0_3 = arith.constant 0 : index
    %c0_4 = arith.constant 0 : index
    %3 = vector.load %arg3[%c0_3, %c0_4] : memref<1x128xf32, #tpu.memory_space<vmem>>, vector<1x128xf32>
    %4 = vector.broadcast %3 : vector<1x128xf32> to vector<16x128xf32>
    %5 = arith.addf %2, %4 : vector<16x128xf32>
    %c0_5 = arith.constant 0 : index
    %c0_6 = arith.constant 0 : index
    %6 = vector.load %arg4[%c0_5, %c0_6] : memref<16x128xf32, #tpu.memory_space<vmem>>, vector<16x128xf32>
    tpu.vector_store %arg4[%c0_5, %c0_6], %5 {strides = array<i32>} : memref<16x128xf32, #tpu.memory_space<vmem>>, vector<16x128xf32>,
    return
  }
  func.func @transform_0(%arg0: i32) -> (i32, i32) {
    %c0_i32 = arith.constant 0 : i32
    %c0_i32_0 = arith.constant 0 : i32
    return %arg0, %c0_i32 : i32, i32
  }
  func.func @transform_1(%arg0: i32) -> (i32, i32) {
    %c0_i32 = arith.constant 0 : i32
    %c0_i32_0 = arith.constant 0 : i32
    %c0_i32_1 = arith.constant 0 : i32
    return %c0_i32, %c0_i32_0 : i32, i32
  }
  func.func @transform_2(%arg0: i32) -> (i32, i32) {
    %c0_i32 = arith.constant 0 : i32
    %c0_i32_0 = arith.constant 0 : i32
    %c0_i32_1 = arith.constant 0 : i32
    return %c0_i32, %c0_i32_0 : i32, i32
  }
  func.func @transform_3(%arg0: i32) -> (i32, i32) {
    %c0_i32 = arith.constant 0 : i32
    %c0_i32_0 = arith.constant 0 : i32
    return %arg0, %c0_i32 : i32, i32
  }
}

</mosaic_0001>

<llo_original>
// kernel: discriminator_forward.4
$region0: #{discriminator_forward.4}
  #allocation0 [shape = 'u32[]', space=smem, size = 0x4, offset = 0x4, fixed_abs, tag = 'smem constant byte address 0x4 - core index']
  #allocation1 [shape = 'u32[144,128]{1,0:T(1,128)}', space=vmem, size = 0x12000, scoped, tag = 'internal scratch']
  %s0 = inlined_call_operand.vmem [shape: bf16[128,128], index: 0, kind: input, shape index: {}]
  %s1 = inlined_call_operand.vmem [shape: bf16[128,64], index: 1, kind: input, shape index: {}]
  %s2 = inlined_call_operand.hbm [shape: f32[1,64], index: 2, kind: input, shape index: {}]
  %s3 = inlined_call_operand.vmem [shape: bf16[128,64], index: 3, kind: output, shape index: {}]
  %s4 = sld [smem:[#allocation0]]
  $region26: #{discriminator_forward.4} parent=0
    _
  %s6 = ssub.s32 1, %s4
  %s7 = scalar_select 0, %s6, %s4
  $region1: #{discriminator_forward.4} parent=0
    #allocation2 [shape = 'u8[512]{0}', space=vmem, size = 0x400, scoped, tag = 'input window, operand 2, single buffered']
    #allocation3 [shape = 's32[1]{0}', space=sflag, size = 0x4, scoped, tag = 'scoped memory for discriminator_forward.4']
    %8 = vsyncpa [#allocation3], 0
    // Predicated region
    $region2: #{discriminator_forward.4} parent=1 // pred_check
      _
    $region3: #{discriminator_forward.4} parent=1 // pred_check_branch
      %10 = sbr.rel (0) target = $region5
    $region4: #{discriminator_forward.4} parent=1 // pred_region
      _
    $region5: #{discriminator_forward.4} parent=1 // pred_fallthru
      _
    // Predicated region
    $region6: #{discriminator_forward.4} parent=1 // pred_check
      _
    $region7: #{discriminator_forward.4} parent=1 // pred_check_branch
      %12 = sbr.rel (0) target = $region9
    $region8: #{discriminator_forward.4} parent=1 // pred_region
      _
    $region9: #{discriminator_forward.4} parent=1 // pred_fallthru
      _
    // Predicated region
    $region10: #{discriminator_forward.4} parent=1 // pred_check
      _
    $region11: #{discriminator_forward.4} parent=1 // pred_check_branch
      %14 = sbr.rel (0) target = $region13
    $region12: #{discriminator_forward.4} parent=1 // pred_region
      %s16 = ssub.s32 16, 16
      %17 = vsyncadd [#allocation3], %s16
      %s19 = sshll.u32 [#allocation2], 4
      %s20 = int_to_ptr.vmem [resolvable:$true] %s19
      %22 = dma.hbm_to_vmem [thread:$0]  %s2, 16, %s20, [#allocation3]
    $region13: #{discriminator_forward.4} parent=1 // pred_fallthru
      _
    // Predicated region
    $region14: #{discriminator_forward.4} parent=1 // pred_check
      _
    $region15: #{discriminator_forward.4} parent=1 // pred_check_branch
      %24 = sbr.rel (0) target = $region17
    $region16: #{discriminator_forward.4} parent=1 // pred_region
      %25 = dma.done [#allocation3], 16
    $region17: #{discriminator_forward.4} parent=1 // pred_fallthru
      _
    %v27 = vld [vmem:[%s0] sm:$0xf]
    %v28 = vld [vmem:[%s0 + $0x4] sm:$0xf]
    %v29 = vld [vmem:[%s0 + $0x8] sm:$0xf]
    %v30 = vld [vmem:[%s0 + $0xc] sm:$0xf]
    %v31 = vld [vmem:[%s0 + $0x10] sm:$0xf]
    %v32 = vld [vmem:[%s0 + $0x14] sm:$0xf]
    %v33 = vld [vmem:[%s0 + $0x18] sm:$0xf]
    %v34 = vld [vmem:[%s0 + $0x1c] sm:$0xf]
    %v35 = vld [vmem:[%s0 + $0x20] sm:$0xf]
    %v36 = vld [vmem:[%s0 + $0x24] sm:$0xf]
    %v37 = vld [vmem:[%s0 + $0x28] sm:$0xf]
    %v38 = vld [vmem:[%s0 + $0x2c] sm:$0xf]
    %v39 = vld [vmem:[%s0 + $0x30] sm:$0xf]
    %v40 = vld [vmem:[%s0 + $0x34] sm:$0xf]
    %v41 = vld [vmem:[%s0 + $0x38] sm:$0xf]
    %v42 = vld [vmem:[%s0 + $0x3c] sm:$0xf]
    %v43 = vld [vmem:[%s1] sm:$0xf]
    %v44 = vld [vmem:[%s1 + $0x4] sm:$0xf]
    %v45 = vld [vmem:[%s1 + $0x8] sm:$0xf]
    %v46 = vld [vmem:[%s1 + $0xc] sm:$0xf]
    %v47 = vld [vmem:[%s1 + $0x10] sm:$0xf]
    %v48 = vld [vmem:[%s1 + $0x14] sm:$0xf]
    %v49 = vld [vmem:[%s1 + $0x18] sm:$0xf]
    %v50 = vld [vmem:[%s1 + $0x1c] sm:$0xf]
    %v51 = vld [vmem:[%s1 + $0x20] sm:$0xf]
    %v52 = vld [vmem:[%s1 + $0x24] sm:$0xf]
    %v53 = vld [vmem:[%s1 + $0x28] sm:$0xf]
    %v54 = vld [vmem:[%s1 + $0x2c] sm:$0xf]
    %v55 = vld [vmem:[%s1 + $0x30] sm:$0xf]
    %v56 = vld [vmem:[%s1 + $0x34] sm:$0xf]
    %v57 = vld [vmem:[%s1 + $0x38] sm:$0xf]
    %v58 = vld [vmem:[%s1 + $0x3c] sm:$0xf]
    %v59 = vld [vmem:[#allocation2] sm:$0x1]
    %v61 = vlaneseq
    %v62 = vshrl.u32 %v61, 7
    %v63 = vsub.s32 0, %v62
    %v64 = vrot.slane %v59, %v63
    %v82 = vunpack.c.l.b16 %v27
    %v83 = vunpack.c.l.b16 %v28
    %v84 = vunpack.c.l.b16 %v29
    %v85 = vunpack.c.l.b16 %v30
    %v86 = vunpack.c.l.b16 %v31
    %v87 = vunpack.c.l.b16 %v32
    %v88 = vunpack.c.l.b16 %v33
    %v89 = vunpack.c.l.b16 %v34
    %v90 = vunpack.c.l.b16 %v35
    %v91 = vunpack.c.l.b16 %v36
    %v92 = vunpack.c.l.b16 %v37
    %v93 = vunpack.c.l.b16 %v38
    %v94 = vunpack.c.l.b16 %v39
    %v95 = vunpack.c.l.b16 %v40
    %v96 = vunpack.c.l.b16 %v41
    %v97 = vunpack.c.l.b16 %v42
    %v98 = vpack.c.b16 %v83, %v82
    %v99 = vpack.c.b16 %v85, %v84
    %v100 = vpack.c.b16 %v87, %v86
    %v101 = vpack.c.b16 %v89, %v88
    %v102 = vpack.c.b16 %v91, %v90
    %v103 = vpack.c.b16 %v93, %v92
    %v104 = vpack.c.b16 %v95, %v94
    %v105 = vpack.c.b16 %v97, %v96
    %v130 = vunpack.c.l.b16 %v43
    %v131 = vunpack.c.l.b16 %v44
    %v132 = vunpack.c.l.b16 %v45
    %v133 = vunpack.c.l.b16 %v46
    %v134 = vunpack.c.l.b16 %v47
    %v135 = vunpack.c.l.b16 %v48
    %v136 = vunpack.c.l.b16 %v49
    %v137 = vunpack.c.l.b16 %v50
    %v138 = vunpack.c.l.b16 %v51
    %v139 = vunpack.c.l.b16 %v52
    %v140 = vunpack.c.l.b16 %v53
    %v141 = vunpack.c.l.b16 %v54
    %v142 = vunpack.c.l.b16 %v55
    %v143 = vunpack.c.l.b16 %v56
    %v144 = vunpack.c.l.b16 %v57
    %v145 = vunpack.c.l.b16 %v58
    %v146 = vpack.c.b16 %v131, %v130
    %v147 = vpack.c.b16 %v133, %v132
    %v148 = vpack.c.b16 %v135, %v134
    %v149 = vpack.c.b16 %v137, %v136
    %v150 = vpack.c.b16 %v139, %v138
    %v151 = vpack.c.b16 %v141, %v140
    %v152 = vpack.c.b16 %v143, %v142
    %v153 = vpack.c.b16 %v145, %v144
    %162 = vmatprep.subr.bf16.mxu0 0
    %163 = vmatpush1.bf16.msra.mxu0 %v146
    %164 = vmatprep.subr.bf16.mxu0 0
    %165 = vmatpush1.bf16.msra.mxu0 %v147
    %166 = vmatprep.subr.bf16.mxu0 0
    %167 = vmatpush1.bf16.msra.mxu0 %v148
    %168 = vmatprep.subr.bf16.mxu0 0
    %169 = vmatpush1.bf16.msra.mxu0 %v149
    %170 = vmatprep.subr.bf16.mxu0 0
    %171 = vmatpush1.bf16.msra.mxu0 %v150
    %172 = vmatprep.subr.bf16.mxu0 0
    %173 = vmatpush1.bf16.msra.mxu0 %v151
    %174 = vmatprep.subr.bf16.mxu0 0
    %175 = vmatpush1.bf16.msra.mxu0 %v152
    %176 = vmatprep.subr.bf16.mxu0 0
    %177 = vmatpush1.bf16.msra.mxu0 %v153
    %178 = vmatprep.subr.bf16.mxu0 0
    %179 = vmatpush1.bf16.msra.mxu0 0
    %180 = vmatprep.subr.bf16.mxu0 0
    %181 = vmatpush1.bf16.msra.mxu0 0
    %182 = vmatprep.subr.bf16.mxu0 0
    %183 = vmatpush1.bf16.msra.mxu0 0
    %184 = vmatprep.subr.bf16.mxu0 0
    %185 = vmatpush1.bf16.msra.mxu0 0
    %186 = vmatprep.subr.bf16.mxu0 0
    %187 = vmatpush1.bf16.msra.mxu0 0
    %188 = vmatprep.subr.bf16.mxu0 0
    %189 = vmatpush1.bf16.msra.mxu0 0
    %190 = vmatprep.subr.bf16.mxu0 0
    %191 = vmatpush1.bf16.msra.mxu0 0
    %192 = vmatprep.subr.bf16.mxu0 0
    %193 = vmatpush1.bf16.msra.mxu0 0
    %194 = vmatprep.mubr.bf16.mxu0 0
    %195 = vmatmul.mubr.bf16.gmra.mrb[0].mxu0 %v98
    %v196 = vpop.f32.mrb[0].mxu0
    %v197 = vadd.f32 %v64, %v196
    %v198 = vpop.f32.mrb[0].mxu0
    %v199 = vpop.f32.mrb[0].mxu0
    %v200 = vadd.f32 %v64, %v199
    %v201 = vpop.f32.mrb[0].mxu0
    %202 = vmatprep.mubr.bf16.mxu0 0
    %203 = vmatmul.mubr.bf16.gmra.mrb[0].mxu0 %v99
    %v204 = vpop.f32.mrb[0].mxu0
    %v205 = vadd.f32 %v64, %v204
    %v206 = vpop.f32.mrb[0].mxu0
    %v207 = vpop.f32.mrb[0].mxu0
    %v208 = vadd.f32 %v64, %v207
    %v209 = vpop.f32.mrb[0].mxu0
    %210 = vmatprep.mubr.bf16.mxu0 0
    %211 = vmatmul.mubr.bf16.gmra.mrb[0].mxu0 %v100
    %v212 = vpop.f32.mrb[0].mxu0
    %v213 = vadd.f32 %v64, %v212
    %v214 = vpop.f32.mrb[0].mxu0
    %v215 = vpop.f32.mrb[0].mxu0
    %v216 = vadd.f32 %v64, %v215
    %v217 = vpop.f32.mrb[0].mxu0
    %218 = vmatprep.mubr.bf16.mxu0 0
    %219 = vmatmul.mubr.bf16.gmra.mrb[0].mxu0 %v101
    %v220 = vpop.f32.mrb[0].mxu0
    %v221 = vadd.f32 %v64, %v220
    %v222 = vpop.f32.mrb[0].mxu0
    %v223 = vpop.f32.mrb[0].mxu0
    %v224 = vadd.f32 %v64, %v223
    %v225 = vpop.f32.mrb[0].mxu0
    %226 = vmatprep.mubr.bf16.mxu0 0
    %227 = vmatmul.mubr.bf16.gmra.mrb[0].mxu0 %v102
    %v228 = vpop.f32.mrb[0].mxu0
    %v229 = vadd.f32 %v64, %v228
    %v230 = vpop.f32.mrb[0].mxu0
    %v231 = vpop.f32.mrb[0].mxu0
    %v232 = vadd.f32 %v64, %v231
    %v233 = vpop.f32.mrb[0].mxu0
    %234 = vmatprep.mubr.bf16.mxu0 0
    %235 = vmatmul.mubr.bf16.gmra.mrb[0].mxu0 %v103
    %v236 = vpop.f32.mrb[0].mxu0
    %v237 = vadd.f32 %v64, %v236
    %v238 = vpop.f32.mrb[0].mxu0
    %v239 = vpop.f32.mrb[0].mxu0
    %v240 = vadd.f32 %v64, %v239
    %v241 = vpop.f32.mrb[0].mxu0
    %242 = vmatprep.mubr.bf16.mxu0 0
    %243 = vmatmul.mubr.bf16.gmra.mrb[0].mxu0 %v104
    %v244 = vpop.f32.mrb[0].mxu0
    %v245 = vadd.f32 %v64, %v244
    %v246 = vpop.f32.mrb[0].mxu0
    %v247 = vpop.f32.mrb[0].mxu0
    %v248 = vadd.f32 %v64, %v247
    %v249 = vpop.f32.mrb[0].mxu0
    %250 = vmatprep.mubr.bf16.mxu0 0
    %251 = vmatmul.mubr.bf16.gmra.mrb[0].mxu0 %v105
    %v252 = vpop.f32.mrb[0].mxu0
    %v253 = vadd.f32 %v64, %v252
    %v254 = vpop.f32.mrb[0].mxu0
    %v255 = vpop.f32.mrb[0].mxu0
    %v256 = vadd.f32 %v64, %v255
    %v257 = vpop.f32.mrb[0].mxu0
    %258 = vdwg.mxu0
    %vm259 = vcmp.ge.f32.partialorder %v197, 0.0
    %vm260 = vcmp.ge.f32.partialorder %v200, 0.0
    %vm261 = vcmp.ge.f32.partialorder %v205, 0.0
    %vm262 = vcmp.ge.f32.partialorder %v208, 0.0
    %vm263 = vcmp.ge.f32.partialorder %v213, 0.0
    %vm264 = vcmp.ge.f32.partialorder %v216, 0.0
    %vm265 = vcmp.ge.f32.partialorder %v221, 0.0
    %vm266 = vcmp.ge.f32.partialorder %v224, 0.0
    %vm267 = vcmp.ge.f32.partialorder %v229, 0.0
    %vm268 = vcmp.ge.f32.partialorder %v232, 0.0
    %vm269 = vcmp.ge.f32.partialorder %v237, 0.0
    %vm270 = vcmp.ge.f32.partialorder %v240, 0.0
    %vm271 = vcmp.ge.f32.partialorder %v245, 0.0
    %vm272 = vcmp.ge.f32.partialorder %v248, 0.0
    %vm273 = vcmp.ge.f32.partialorder %v253, 0.0
    %vm274 = vcmp.ge.f32.partialorder %v256, 0.0
    %v275 = vmul.f32 %v197, 0.2
    %v276 = vmul.f32 %v200, 0.2
    %v277 = vmul.f32 %v205, 0.2
    %v278 = vmul.f32 %v208, 0.2
    %v279 = vmul.f32 %v213, 0.2
    %v280 = vmul.f32 %v216, 0.2
    %v281 = vmul.f32 %v221, 0.2
    %v282 = vmul.f32 %v224, 0.2
    %v283 = vmul.f32 %v229, 0.2
    %v284 = vmul.f32 %v232, 0.2
    %v285 = vmul.f32 %v237, 0.2
    %v286 = vmul.f32 %v240, 0.2
    %v287 = vmul.f32 %v245, 0.2
    %v288 = vmul.f32 %v248, 0.2
    %v289 = vmul.f32 %v253, 0.2
    %v290 = vmul.f32 %v256, 0.2
    %v291 = vsel %vm259, %v197, %v275
    %v292 = vsel %vm260, %v200, %v276
    %v293 = vsel %vm261, %v205, %v277
    %v294 = vsel %vm262, %v208, %v278
    %v295 = vsel %vm263, %v213, %v279
    %v296 = vsel %vm264, %v216, %v280
    %v297 = vsel %vm265, %v221, %v281
    %v298 = vsel %vm266, %v224, %v282
    %v299 = vsel %vm267, %v229, %v283
    %v300 = vsel %vm268, %v232, %v284
    %v301 = vsel %vm269, %v237, %v285
    %v302 = vsel %vm270, %v240, %v286
    %v303 = vsel %vm271, %v245, %v287
    %v304 = vsel %vm272, %v248, %v288
    %v305 = vsel %vm273, %v253, %v289
    %v306 = vsel %vm274, %v256, %v290
    %v307 = vpack.c.bf16 %v292, %v291
    %v308 = vpack.c.bf16 %v294, %v293
    %v309 = vpack.c.bf16 %v296, %v295
    %v310 = vpack.c.bf16 %v298, %v297
    %v311 = vpack.c.bf16 %v300, %v299
    %v312 = vpack.c.bf16 %v302, %v301
    %v313 = vpack.c.bf16 %v304, %v303
    %v314 = vpack.c.bf16 %v306, %v305
    %v323 = vunpack.c.l.b16 %v307
    %v324 = vunpack.c.h.b16 %v307
    %v325 = vunpack.c.l.b16 %v308
    %v326 = vunpack.c.h.b16 %v308
    %v327 = vunpack.c.l.b16 %v309
    %v328 = vunpack.c.h.b16 %v309
    %v329 = vunpack.c.l.b16 %v310
    %v330 = vunpack.c.h.b16 %v310
    %v331 = vunpack.c.l.b16 %v311
    %v332 = vunpack.c.h.b16 %v311
    %v333 = vunpack.c.l.b16 %v312
    %v334 = vunpack.c.h.b16 %v312
    %v335 = vunpack.c.l.b16 %v313
    %v336 = vunpack.c.h.b16 %v313
    %v337 = vunpack.c.l.b16 %v314
    %v338 = vunpack.c.h.b16 %v314
    %v339 = vpack.c.b16 %v323, %v323
    %v340 = vpack.c.b16 %v324, %v324
    %v341 = vpack.c.b16 %v325, %v325
    %v342 = vpack.c.b16 %v326, %v326
    %v343 = vpack.c.b16 %v327, %v327
    %v344 = vpack.c.b16 %v328, %v328
    %v345 = vpack.c.b16 %v329, %v329
    %v346 = vpack.c.b16 %v330, %v330
    %v347 = vpack.c.b16 %v331, %v331
    %v348 = vpack.c.b16 %v332, %v332
    %v349 = vpack.c.b16 %v333, %v333
    %v350 = vpack.c.b16 %v334, %v334
    %v351 = vpack.c.b16 %v335, %v335
    %v352 = vpack.c.b16 %v336, %v336
    %v353 = vpack.c.b16 %v337, %v337
    %v354 = vpack.c.b16 %v338, %v338
    %vm371 = vcmask 519168
    %372 = vst.msk [vmem:[%s3] sm:$0xf] %vm371, %v339
    %373 = vst.msk [vmem:[%s3 + $0x4] sm:$0xf] %vm371, %v340
    %374 = vst.msk [vmem:[%s3 + $0x8] sm:$0xf] %vm371, %v341
    %375 = vst.msk [vmem:[%s3 + $0xc] sm:$0xf] %vm371, %v342
    %376 = vst.msk [vmem:[%s3 + $0x10] sm:$0xf] %vm371, %v343
    %377 = vst.msk [vmem:[%s3 + $0x14] sm:$0xf] %vm371, %v344
    %378 = vst.msk [vmem:[%s3 + $0x18] sm:$0xf] %vm371, %v345
    %379 = vst.msk [vmem:[%s3 + $0x1c] sm:$0xf] %vm371, %v346
    %380 = vst.msk [vmem:[%s3 + $0x20] sm:$0xf] %vm371, %v347
    %381 = vst.msk [vmem:[%s3 + $0x24] sm:$0xf] %vm371, %v348
    %382 = vst.msk [vmem:[%s3 + $0x28] sm:$0xf] %vm371, %v349
    %383 = vst.msk [vmem:[%s3 + $0x2c] sm:$0xf] %vm371, %v350
    %384 = vst.msk [vmem:[%s3 + $0x30] sm:$0xf] %vm371, %v351
    %385 = vst.msk [vmem:[%s3 + $0x34] sm:$0xf] %vm371, %v352
    %386 = vst.msk [vmem:[%s3 + $0x38] sm:$0xf] %vm371, %v353
    %387 = vst.msk [vmem:[%s3 + $0x3c] sm:$0xf] %vm371, %v354
    // Predicated region
    $region18: #{discriminator_forward.4} parent=1 // pred_check
      _
    $region19: #{discriminator_forward.4} parent=1 // pred_check_branch
      %389 = sbr.rel (0) target = $region21
    $region20: #{discriminator_forward.4} parent=1 // pred_region
      _
    $region21: #{discriminator_forward.4} parent=1 // pred_fallthru
      _
    // Predicated region
    $region22: #{discriminator_forward.4} parent=1 // pred_check
      _
    $region23: #{discriminator_forward.4} parent=1 // pred_check_branch
      %391 = sbr.rel (0) target = $region25
    $region24: #{discriminator_forward.4} parent=1 // pred_region
      _
    $region25: #{discriminator_forward.4} parent=1 // pred_fallthru
      _
    %392 = vsyncpa [#allocation3], 1

// kernel: discriminator_forward.5
$region0: #{discriminator_forward.5}
  #allocation0 [shape = 'u32[]', space=smem, size = 0x4, offset = 0x4, fixed_abs, tag = 'smem constant byte address 0x4 - core index']
  #allocation1 [shape = 'u32[144,128]{1,0:T(1,128)}', space=vmem, size = 0x12000, scoped, tag = 'internal scratch']
  %s0 = inlined_call_operand.vmem [shape: bf16[32,1024], index: 0, kind: input, shape index: {}]
  %s1 = inlined_call_operand.vmem [shape: bf16[1024,128], index: 1, kind: input, shape index: {}]
  %s2 = inlined_call_operand.vmem [shape: bf16[32,128], index: 2, kind: output, shape index: {0}]
  %s3 = inlined_call_operand.vmem [shape: f32[1,2,128], index: 3, kind: output, shape index: {1}]
  %4 = xla_tuple %s2, %s3
  %s5 = sld [smem:[#allocation0]]
  $region26: #{discriminator_forward.5} parent=0
    _
  %s7 = ssub.s32 1, %s5
  %s8 = scalar_select 0, %s7, %s5
  // Predicated region
  $region2: #{discriminator_forward.5} parent=0 // pred_check
    _
  $region3: #{discriminator_forward.5} parent=0 // pred_check_branch
    %10 = sbr.rel (0) target = $region5
  $region4: #{discriminator_forward.5} parent=0 // pred_region
    _
  $region5: #{discriminator_forward.5} parent=0 // pred_fallthru
    _
  // Predicated region
  $region6: #{discriminator_forward.5} parent=0 // pred_check
    _
  $region7: #{discriminator_forward.5} parent=0 // pred_check_branch
    %12 = sbr.rel (0) target = $region9
  $region8: #{discriminator_forward.5} parent=0 // pred_region
    _
  $region9: #{discriminator_forward.5} parent=0 // pred_fallthru
    _
  %v14 = vld [vmem:[%s0] sm:$0xff]
  %v15 = vld [vmem:[%s0 + $0x8] sm:$0xff]
  %v16 = vld [vmem:[%s0 + $0x10] sm:$0xff]
  %v17 = vld [vmem:[%s0 + $0x18] sm:$0xff]
  %v18 = vld [vmem:[%s0 + $0x20] sm:$0xff]
  %v19 = vld [vmem:[%s0 + $0x28] sm:$0xff]
  %v20 = vld [vmem:[%s0 + $0x30] sm:$0xff]
  %v21 = vld [vmem:[%s0 + $0x38] sm:$0xff]
  %v22 = vld [vmem:[%s0 + $0x40] sm:$0xff]
  %v23 = vld [vmem:[%s0 + $0x48] sm:$0xff]
  %v24 = vld [vmem:[%s0 + $0x50] sm:$0xff]
  %v25 = vld [vmem:[%s0 + $0x58] sm:$0xff]
  %v26 = vld [vmem:[%s0 + $0x60] sm:$0xff]
  %v27 = vld [vmem:[%s0 + $0x68] sm:$0xff]
  %v28 = vld [vmem:[%s0 + $0x70] sm:$0xff]
  %v29 = vld [vmem:[%s0 + $0x78] sm:$0xff]
  %v30 = vld [vmem:[%s1] sm:$0xf]
  %v31 = vld [vmem:[%s1 + $0x4] sm:$0xf]
  %v32 = vld [vmem:[%s1 + $0x8] sm:$0xf]
  %v33 = vld [vmem:[%s1 + $0xc] sm:$0xf]
  %v34 = vld [vmem:[%s1 + $0x10] sm:$0xf]
  %v35 = vld [vmem:[%s1 + $0x14] sm:$0xf]
  %v36 = vld [vmem:[%s1 + $0x18] sm:$0xf]
  %v37 = vld [vmem:[%s1 + $0x1c] sm:$0xf]
  %v38 = vld [vmem:[%s1 + $0x20] sm:$0xf]
  %v39 = vld [vmem:[%s1 + $0x24] sm:$0xf]
  %v40 = vld [vmem:[%s1 + $0x28] sm:$0xf]
  %v41 = vld [vmem:[%s1 + $0x2c] sm:$0xf]
  %v42 = vld [vmem:[%s1 + $0x30] sm:$0xf]
  %v43 = vld [vmem:[%s1 + $0x34] sm:$0xf]
  %v44 = vld [vmem:[%s1 + $0x38] sm:$0xf]
  %v45 = vld [vmem:[%s1 + $0x3c] sm:$0xf]
  %v46 = vld [vmem:[%s1 + $0x40] sm:$0xf]
  %v47 = vld [vmem:[%s1 + $0x44] sm:$0xf]
  %v48 = vld [vmem:[%s1 + $0x48] sm:$0xf]
  %v49 = vld [vmem:[%s1 + $0x4c] sm:$0xf]
  %v50 = vld [vmem:[%s1 + $0x50] sm:$0xf]
  %v51 = vld [vmem:[%s1 + $0x54] sm:$0xf]
  %v52 = vld [vmem:[%s1 + $0x58] sm:$0xf]
  %v53 = vld [vmem:[%s1 + $0x5c] sm:$0xf]
  %v54 = vld [vmem:[%s1 + $0x60] sm:$0xf]
  %v55 = vld [vmem:[%s1 + $0x64] sm:$0xf]
  %v56 = vld [vmem:[%s1 + $0x68] sm:$0xf]
  %v57 = vld [vmem:[%s1 + $0x6c] sm:$0xf]
  %v58 = vld [vmem:[%s1 + $0x70] sm:$0xf]
  %v59 = vld [vmem:[%s1 + $0x74] sm:$0xf]
  %v60 = vld [vmem:[%s1 + $0x78] sm:$0xf]
  %v61 = vld [vmem:[%s1 + $0x7c] sm:$0xf]
  %v62 = vld [vmem:[%s1 + $0x80] sm:$0xf]
  %v63 = vld [vmem:[%s1 + $0x84] sm:$0xf]
  %v64 = vld [vmem:[%s1 + $0x88] sm:$0xf]
  %v65 = vld [vmem:[%s1 + $0x8c] sm:$0xf]
  %v66 = vld [vmem:[%s1 + $0x90] sm:$0xf]
  %v67 = vld [vmem:[%s1 + $0x94] sm:$0xf]
  %v68 = vld [vmem:[%s1 + $0x98] sm:$0xf]
  %v69 = vld [vmem:[%s1 + $0x9c] sm:$0xf]
  %v70 = vld [vmem:[%s1 + $0xa0] sm:$0xf]
  %v71 = vld [vmem:[%s1 + $0xa4] sm:$0xf]
  %v72 = vld [vmem:[%s1 + $0xa8] sm:$0xf]
  %v73 = vld [vmem:[%s1 + $0xac] sm:$0xf]
  %v74 = vld [vmem:[%s1 + $0xb0] sm:$0xf]
  %v75 = vld [vmem:[%s1 + $0xb4] sm:$0xf]
  %v76 = vld [vmem:[%s1 + $0xb8] sm:$0xf]
  %v77 = vld [vmem:[%s1 + $0xbc] sm:$0xf]
  %v78 = vld [vmem:[%s1 + $0xc0] sm:$0xf]
  %v79 = vld [vmem:[%s1 + $0xc4] sm:$0xf]
  %v80 = vld [vmem:[%s1 + $0xc8] sm:$0xf]
  %v81 = vld [vmem:[%s1 + $0xcc] sm:$0xf]
  %v82 = vld [vmem:[%s1 + $0xd0] sm:$0xf]
  %v83 = vld [vmem:[%s1 + $0xd4] sm:$0xf]
  %v84 = vld [vmem:[%s1 + $0xd8] sm:$0xf]
  %v85 = vld [vmem:[%s1 + $0xdc] sm:$0xf]
  %v86 = vld [vmem:[%s1 + $0xe0] sm:$0xf]
  %v87 = vld [vmem:[%s1 + $0xe4] sm:$0xf]
  %v88 = vld [vmem:[%s1 + $0xe8] sm:$0xf]
  %v89 = vld [vmem:[%s1 + $0xec] sm:$0xf]
  %v90 = vld [vmem:[%s1 + $0xf0] sm:$0xf]
  %v91 = vld [vmem:[%s1 + $0xf4] sm:$0xf]
  %v92 = vld [vmem:[%s1 + $0xf8] sm:$0xf]
  %v93 = vld [vmem:[%s1 + $0xfc] sm:$0xf]
  %v94 = vld [vmem:[%s1 + $0x100] sm:$0xf]
  %v95 = vld [vmem:[%s1 + $0x104] sm:$0xf]
  %v96 = vld [vmem:[%s1 + $0x108] sm:$0xf]
  %v97 = vld [vmem:[%s1 + $0x10c] sm:$0xf]
  %v98 = vld [vmem:[%s1 + $0x110] sm:$0xf]
  %v99 = vld [vmem:[%s1 + $0x114] sm:$0xf]
  %v100 = vld [vmem:[%s1 + $0x118] sm:$0xf]
  %v101 = vld [vmem:[%s1 + $0x11c] sm:$0xf]
  %v102 = vld [vmem:[%s1 + $0x120] sm:$0xf]
  %v103 = vld [vmem:[%s1 + $0x124] sm:$0xf]
  %v104 = vld [vmem:[%s1 + $0x128] sm:$0xf]
  %v105 = vld [vmem:[%s1 + $0x12c] sm:$0xf]
  %v106 = vld [vmem:[%s1 + $0x130] sm:$0xf]
  %v107 = vld [vmem:[%s1 + $0x134] sm:$0xf]
  %v108 = vld [vmem:[%s1 + $0x138] sm:$0xf]
  %v109 = vld [vmem:[%s1 + $0x13c] sm:$0xf]
  %v110 = vld [vmem:[%s1 + $0x140] sm:$0xf]
  %v111 = vld [vmem:[%s1 + $0x144] sm:$0xf]
  %v112 = vld [vmem:[%s1 + $0x148] sm:$0xf]
  %v113 = vld [vmem:[%s1 + $0x14c] sm:$0xf]
  %v114 = vld [vmem:[%s1 + $0x150] sm:$0xf]
  %v115 = vld [vmem:[%s1 + $0x154] sm:$0xf]
  %v116 = vld [vmem:[%s1 + $0x158] sm:$0xf]
  %v117 = vld [vmem:[%s1 + $0x15c] sm:$0xf]
  %v118 = vld [vmem:[%s1 + $0x160] sm:$0xf]
  %v119 = vld [vmem:[%s1 + $0x164] sm:$0xf]
  %v120 = vld [vmem:[%s1 + $0x168] sm:$0xf]
  %v121 = vld [vmem:[%s1 + $0x16c] sm:$0xf]
  %v122 = vld [vmem:[%s1 + $0x170] sm:$0xf]
  %v123 = vld [vmem:[%s1 + $0x174] sm:$0xf]
  %v124 = vld [vmem:[%s1 + $0x178] sm:$0xf]
  %v125 = vld [vmem:[%s1 + $0x17c] sm:$0xf]
  %v126 = vld [vmem:[%s1 + $0x180] sm:$0xf]
  %v127 = vld [vmem:[%s1 + $0x184] sm:$0xf]
  %v128 = vld [vmem:[%s1 + $0x188] sm:$0xf]
  %v129 = vld [vmem:[%s1 + $0x18c] sm:$0xf]
  %v130 = vld [vmem:[%s1 + $0x190] sm:$0xf]
  %v131 = vld [vmem:[%s1 + $0x194] sm:$0xf]
  %v132 = vld [vmem:[%s1 + $0x198] sm:$0xf]
  %v133 = vld [vmem:[%s1 + $0x19c] sm:$0xf]
  %v134 = vld [vmem:[%s1 + $0x1a0] sm:$0xf]
  %v135 = vld [vmem:[%s1 + $0x1a4] sm:$0xf]
  %v136 = vld [vmem:[%s1 + $0x1a8] sm:$0xf]
  %v137 = vld [vmem:[%s1 + $0x1ac] sm:$0xf]
  %v138 = vld [vmem:[%s1 + $0x1b0] sm:$0xf]
  %v139 = vld [vmem:[%s1 + $0x1b4] sm:$0xf]
  %v140 = vld [vmem:[%s1 + $0x1b8] sm:$0xf]
  %v141 = vld [vmem:[%s1 + $0x1bc] sm:$0xf]
  %v142 = vld [vmem:[%s1 + $0x1c0] sm:$0xf]
  %v143 = vld [vmem:[%s1 + $0x1c4] sm:$0xf]
  %v144 = vld [vmem:[%s1 + $0x1c8] sm:$0xf]
  %v145 = vld [vmem:[%s1 + $0x1cc] sm:$0xf]
  %v146 = vld [vmem:[%s1 + $0x1d0] sm:$0xf]
  %v147 = vld [vmem:[%s1 + $0x1d4] sm:$0xf]
  %v148 = vld [vmem:[%s1 + $0x1d8] sm:$0xf]
  %v149 = vld [vmem:[%s1 + $0x1dc] sm:$0xf]
  %v150 = vld [vmem:[%s1 + $0x1e0] sm:$0xf]
  %v151 = vld [vmem:[%s1 + $0x1e4] sm:$0xf]
  %v152 = vld [vmem:[%s1 + $0x1e8] sm:$0xf]
  %v153 = vld [vmem:[%s1 + $0x1ec] sm:$0xf]
  %v154 = vld [vmem:[%s1 + $0x1f0] sm:$0xf]
  %v155 = vld [vmem:[%s1 + $0x1f4] sm:$0xf]
  %v156 = vld [vmem:[%s1 + $0x1f8] sm:$0xf]
  %v157 = vld [vmem:[%s1 + $0x1fc] sm:$0xf]
  %v174 = vunpack.c.l.b16 %v14
  %v175 = vunpack.c.h.b16 %v14
  %v176 = vunpack.c.l.b16 %v15
  %v177 = vunpack.c.h.b16 %v15
  %v178 = vunpack.c.l.b16 %v16
  %v179 = vunpack.c.h.b16 %v16
  %v180 = vunpack.c.l.b16 %v17
  %v181 = vunpack.c.h.b16 %v17
  %v182 = vunpack.c.l.b16 %v18
  %v183 = vunpack.c.h.b16 %v18
  %v184 = vunpack.c.l.b16 %v19
  %v185 = vunpack.c.h.b16 %v19
  %v186 = vunpack.c.l.b16 %v20
  %v187 = vunpack.c.h.b16 %v20
  %v188 = vunpack.c.l.b16 %v21
  %v189 = vunpack.c.h.b16 %v21
  %v190 = vunpack.c.l.b16 %v22
  %v191 = vunpack.c.h.b16 %v22
  %v192 = vunpack.c.l.b16 %v23
  %v193 = vunpack.c.h.b16 %v23
  %v194 = vunpack.c.l.b16 %v24
  %v195 = vunpack.c.h.b16 %v24
  %v196 = vunpack.c.l.b16 %v25
  %v197 = vunpack.c.h.b16 %v25
  %v198 = vunpack.c.l.b16 %v26
  %v199 = vunpack.c.h.b16 %v26
  %v200 = vunpack.c.l.b16 %v27
  %v201 = vunpack.c.h.b16 %v27
  %v202 = vunpack.c.l.b16 %v28
  %v203 = vunpack.c.h.b16 %v28
  %v204 = vunpack.c.l.b16 %v29
  %v205 = vunpack.c.h.b16 %v29
  %v206 = vpack.c.b16 %v182, %v174
  %v207 = vpack.c.b16 %v183, %v175
  %v208 = vpack.c.b16 %v184, %v176
  %v209 = vpack.c.b16 %v185, %v177
  %v210 = vpack.c.b16 %v186, %v178
  %v211 = vpack.c.b16 %v187, %v179
  %v212 = vpack.c.b16 %v188, %v180
  %v213 = vpack.c.b16 %v189, %v181
  %v214 = vpack.c.b16 %v198, %v190
  %v215 = vpack.c.b16 %v199, %v191
  %v216 = vpack.c.b16 %v200, %v192
  %v217 = vpack.c.b16 %v201, %v193
  %v218 = vpack.c.b16 %v202, %v194
  %v219 = vpack.c.b16 %v203, %v195
  %v220 = vpack.c.b16 %v204, %v196
  %v221 = vpack.c.b16 %v205, %v197
  %v366 = vunpack.c.l.b16 %v30
  %v367 = vunpack.c.l.b16 %v31
  %v368 = vunpack.c.l.b16 %v32
  %v369 = vunpack.c.l.b16 %v33
  %v370 = vunpack.c.l.b16 %v34
  %v371 = vunpack.c.l.b16 %v35
  %v372 = vunpack.c.l.b16 %v36
  %v373 = vunpack.c.l.b16 %v37
  %v374 = vunpack.c.l.b16 %v38
  %v375 = vunpack.c.l.b16 %v39
  %v376 = vunpack.c.l.b16 %v40
  %v377 = vunpack.c.l.b16 %v41
  %v378 = vunpack.c.l.b16 %v42
  %v379 = vunpack.c.l.b16 %v43
  %v380 = vunpack.c.l.b16 %v44
  %v381 = vunpack.c.l.b16 %v45
  %v382 = vunpack.c.l.b16 %v46
  %v383 = vunpack.c.l.b16 %v47
  %v384 = vunpack.c.l.b16 %v48
  %v385 = vunpack.c.l.b16 %v49
  %v386 = vunpack.c.l.b16 %v50
  %v387 = vunpack.c.l.b16 %v51
  %v388 = vunpack.c.l.b16 %v52
  %v389 = vunpack.c.l.b16 %v53
  %v390 = vunpack.c.l.b16 %v54
  %v391 = vunpack.c.l.b16 %v55
  %v392 = vunpack.c.l.b16 %v56
  %v393 = vunpack.c.l.b16 %v57
  %v394 = vunpack.c.l.b16 %v58
  %v395 = vunpack.c.l.b16 %v59
  %v396 = vunpack.c.l.b16 %v60
  %v397 = vunpack.c.l.b16 %v61
  %v398 = vunpack.c.l.b16 %v62
  %v399 = vunpack.c.l.b16 %v63
  %v400 = vunpack.c.l.b16 %v64
  %v401 = vunpack.c.l.b16 %v65
  %v402 = vunpack.c.l.b16 %v66
  %v403 = vunpack.c.l.b16 %v67
  %v404 = vunpack.c.l.b16 %v68
  %v405 = vunpack.c.l.b16 %v69
  %v406 = vunpack.c.l.b16 %v70
  %v407 = vunpack.c.l.b16 %v71
  %v408 = vunpack.c.l.b16 %v72
  %v409 = vunpack.c.l.b16 %v73
  %v410 = vunpack.c.l.b16 %v74
  %v411 = vunpack.c.l.b16 %v75
  %v412 = vunpack.c.l.b16 %v76
  %v413 = vunpack.c.l.b16 %v77
  %v414 = vunpack.c.l.b16 %v78
  %v415 = vunpack.c.l.b16 %v79
  %v416 = vunpack.c.l.b16 %v80
  %v417 = vunpack.c.l.b16 %v81
  %v418 = vunpack.c.l.b16 %v82
  %v419 = vunpack.c.l.b16 %v83
  %v420 = vunpack.c.l.b16 %v84
  %v421 = vunpack.c.l.b16 %v85
  %v422 = vunpack.c.l.b16 %v86
  %v423 = vunpack.c.l.b16 %v87
  %v424 = vunpack.c.l.b16 %v88
  %v425 = vunpack.c.l.b16 %v89
  %v426 = vunpack.c.l.b16 %v90
  %v427 = vunpack.c.l.b16 %v91
  %v428 = vunpack.c.l.b16 %v92
  %v429 = vunpack.c.l.b16 %v93
  %v430 = vunpack.c.l.b16 %v94
  %v431 = vunpack.c.l.b16 %v95
  %v432 = vunpack.c.l.b16 %v96
  %v433 = vunpack.c.l.b16 %v97
  %v434 = vunpack.c.l.b16 %v98
  %v435 = vunpack.c.l.b16 %v99
  %v436 = vunpack.c.l.b16 %v100
  %v437 = vunpack.c.l.b16 %v101
  %v438 = vunpack.c.l.b16 %v102
  %v439 = vunpack.c.l.b16 %v103
  %v440 = vunpack.c.l.b16 %v104
  %v441 = vunpack.c.l.b16 %v105
  %v442 = vunpack.c.l.b16 %v106
  %v443 = vunpack.c.l.b16 %v107
  %v444 = vunpack.c.l.b16 %v108
  %v445 = vunpack.c.l.b16 %v109
  %v446 = vunpack.c.l.b16 %v110
  %v447 = vunpack.c.l.b16 %v111
  %v448 = vunpack.c.l.b16 %v112
  %v449 = vunpack.c.l.b16 %v113
  %v450 = vunpack.c.l.b16 %v114
  %v451 = vunpack.c.l.b16 %v115
  %v452 = vunpack.c.l.b16 %v116
  %v453 = vunpack.c.l.b16 %v117
  %v454 = vunpack.c.l.b16 %v118
  %v455 = vunpack.c.l.b16 %v119
  %v456 = vunpack.c.l.b16 %v120
  %v457 = vunpack.c.l.b16 %v121
  %v458 = vunpack.c.l.b16 %v122
  %v459 = vunpack.c.l.b16 %v123
  %v460 = vunpack.c.l.b16 %v124
  %v461 = vunpack.c.l.b16 %v125
  %v462 = vunpack.c.l.b16 %v126
  %v463 = vunpack.c.l.b16 %v127
  %v464 = vunpack.c.l.b16 %v128
  %v465 = vunpack.c.l.b16 %v129
  %v466 = vunpack.c.l.b16 %v130
  %v467 = vunpack.c.l.b16 %v131
  %v468 = vunpack.c.l.b16 %v132
  %v469 = vunpack.c.l.b16 %v133
  %v470 = vunpack.c.l.b16 %v134
  %v471 = vunpack.c.l.b16 %v135
  %v472 = vunpack.c.l.b16 %v136
  %v473 = vunpack.c.l.b16 %v137
  %v474 = vunpack.c.l.b16 %v138
  %v475 = vunpack.c.l.b16 %v139
  %v476 = vunpack.c.l.b16 %v140
  %v477 = vunpack.c.l.b16 %v141
  %v478 = vunpack.c.l.b16 %v142
  %v479 = vunpack.c.l.b16 %v143
  %v480 = vunpack.c.l.b16 %v144
  %v481 = vunpack.c.l.b16 %v145
  %v482 = vunpack.c.l.b16 %v146
  %v483 = vunpack.c.l.b16 %v147
  %v484 = vunpack.c.l.b16 %v148
  %v485 = vunpack.c.l.b16 %v149
  %v486 = vunpack.c.l.b16 %v150
  %v487 = vunpack.c.l.b16 %v151
  %v488 = vunpack.c.l.b16 %v152
  %v489 = vunpack.c.l.b16 %v153
  %v490 = vunpack.c.l.b16 %v154
  %v491 = vunpack.c.l.b16 %v155
  %v492 = vunpack.c.l.b16 %v156
  %v493 = vunpack.c.l.b16 %v157
  %v494 = vpack.c.b16 %v367, %v366
  %v495 = vpack.c.b16 %v369, %v368
  %v496 = vpack.c.b16 %v371, %v370
  %v497 = vpack.c.b16 %v373, %v372
  %v498 = vpack.c.b16 %v375, %v374
  %v499 = vpack.c.b16 %v377, %v376
  %v500 = vpack.c.b16 %v379, %v378
  %v501 = vpack.c.b16 %v381, %v380
  %v502 = vpack.c.b16 %v383, %v382
  %v503 = vpack.c.b16 %v385, %v384
  %v504 = vpack.c.b16 %v387, %v386
  %v505 = vpack.c.b16 %v389, %v388
  %v506 = vpack.c.b16 %v391, %v390
  %v507 = vpack.c.b16 %v393, %v392
  %v508 = vpack.c.b16 %v395, %v394
  %v509 = vpack.c.b16 %v397, %v396
  %v510 = vpack.c.b16 %v399, %v398
  %v511 = vpack.c.b16 %v401, %v400
  %v512 = vpack.c.b16 %v403, %v402
  %v513 = vpack.c.b16 %v405, %v404
  %v514 = vpack.c.b16 %v407, %v406
  %v515 = vpack.c.b16 %v409, %v408
  %v516 = vpack.c.b16 %v411, %v410
  %v517 = vpack.c.b16 %v413, %v412
  %v518 = vpack.c.b16 %v415, %v414
  %v519 = vpack.c.b16 %v417, %v416
  %v520 = vpack.c.b16 %v419, %v418
  %v521 = vpack.c.b16 %v421, %v420
  %v522 = vpack.c.b16 %v423, %v422
  %v523 = vpack.c.b16 %v425, %v424
  %v524 = vpack.c.b16 %v427, %v426
  %v525 = vpack.c.b16 %v429, %v428
  %v526 = vpack.c.b16 %v431, %v430
  %v527 = vpack.c.b16 %v433, %v432
  %v528 = vpack.c.b16 %v435, %v434
  %v529 = vpack.c.b16 %v437, %v436
  %v530 = vpack.c.b16 %v439, %v438
  %v531 = vpack.c.b16 %v441, %v440
  %v532 = vpack.c.b16 %v443, %v442
  %v533 = vpack.c.b16 %v445, %v444
  %v534 = vpack.c.b16 %v447, %v446
  %v535 = vpack.c.b16 %v449, %v448
  %v536 = vpack.c.b16 %v451, %v450
  %v537 = vpack.c.b16 %v453, %v452
  %v538 = vpack.c.b16 %v455, %v454
  %v539 = vpack.c.b16 %v457, %v456
  %v540 = vpack.c.b16 %v459, %v458
  %v541 = vpack.c.b16 %v461, %v460
  %v542 = vpack.c.b16 %v463, %v462
  %v543 = vpack.c.b16 %v465, %v464
  %v544 = vpack.c.b16 %v467, %v466
  %v545 = vpack.c.b16 %v469, %v468
  %v546 = vpack.c.b16 %v471, %v470
  %v547 = vpack.c.b16 %v473, %v472
  %v548 = vpack.c.b16 %v475, %v474
  %v549 = vpack.c.b16 %v477, %v476
  %v550 = vpack.c.b16 %v479, %v478
  %v551 = vpack.c.b16 %v481, %v480
  %v552 = vpack.c.b16 %v483, %v482
  %v553 = vpack.c.b16 %v485, %v484
  %v554 = vpack.c.b16 %v487, %v486
  %v555 = vpack.c.b16 %v489, %v488
  %v556 = vpack.c.b16 %v491, %v490
  %v557 = vpack.c.b16 %v493, %v492
  %622 = vmatprep.subr.bf16.mxu0 0
  %623 = vmatpush1.bf16.msra.mxu0 %v494
  %624 = vmatprep.subr.bf16.mxu0 0
  %625 = vmatpush1.bf16.msra.mxu0 %v495
  %626 = vmatprep.subr.bf16.mxu0 0
  %627 = vmatpush1.bf16.msra.mxu0 %v496
  %628 = vmatprep.subr.bf16.mxu0 0
  %629 = vmatpush1.bf16.msra.mxu0 %v497
  %630 = vmatprep.subr.bf16.mxu0 0
  %631 = vmatpush1.bf16.msra.mxu0 %v498
  %632 = vmatprep.subr.bf16.mxu0 0
  %633 = vmatpush1.bf16.msra.mxu0 %v499
  %634 = vmatprep.subr.bf16.mxu0 0
  %635 = vmatpush1.bf16.msra.mxu0 %v500
  %636 = vmatprep.subr.bf16.mxu0 0
  %637 = vmatpush1.bf16.msra.mxu0 %v501
  %638 = vmatprep.subr.bf16.mxu0 0
  %639 = vmatpush1.bf16.msra.mxu0 %v502
  %640 = vmatprep.subr.bf16.mxu0 0
  %641 = vmatpush1.bf16.msra.mxu0 %v503
  %642 = vmatprep.subr.bf16.mxu0 0
  %643 = vmatpush1.bf16.msra.mxu0 %v504
  %644 = vmatprep.subr.bf16.mxu0 0
  %645 = vmatpush1.bf16.msra.mxu0 %v505
  %646 = vmatprep.subr.bf16.mxu0 0
  %647 = vmatpush1.bf16.msra.mxu0 %v506
  %648 = vmatprep.subr.bf16.mxu0 0
  %649 = vmatpush1.bf16.msra.mxu0 %v507
  %650 = vmatprep.subr.bf16.mxu0 0
  %651 = vmatpush1.bf16.msra.mxu0 %v508
  %652 = vmatprep.subr.bf16.mxu0 0
  %653 = vmatpush1.bf16.msra.mxu0 %v509
  %654 = vmatprep.mubr.bf16.mxu0 %v207
  %655 = vmatmul.mubr.bf16.gmra.mrb[0].mxu0 %v206
  %v656 = vpop.f32.mrb[0].mxu0
  %v657 = vadd.f32 0.0, %v656
  %v658 = vpop.f32.mrb[0].mxu0
  %v659 = vpop.f32.mrb[0].mxu0
  %v660 = vadd.f32 0.0, %v659
  %v661 = vpop.f32.mrb[0].mxu0
  %662 = vmatprep.mubr.bf16.mxu0 %v215
  %663 = vmatmul.mubr.bf16.gmra.mrb[0].mxu0 %v214
  %v664 = vpop.f32.mrb[0].mxu0
  %v665 = vadd.f32 0.0, %v664
  %v666 = vpop.f32.mrb[0].mxu0
  %v667 = vpop.f32.mrb[0].mxu0
  %v668 = vadd.f32 0.0, %v667
  %v669 = vpop.f32.mrb[0].mxu0
  %670 = vdwg.mxu0
  %671 = vmatprep.subr.bf16.mxu0 0
  %672 = vmatpush1.bf16.msra.mxu0 %v510
  %673 = vmatprep.subr.bf16.mxu0 0
  %674 = vmatpush1.bf16.msra.mxu0 %v511
  %675 = vmatprep.subr.bf16.mxu0 0
  %676 = vmatpush1.bf16.msra.mxu0 %v512
  %677 = vmatprep.subr.bf16.mxu0 0
  %678 = vmatpush1.bf16.msra.mxu0 %v513
  %679 = vmatprep.subr.bf16.mxu0 0
  %680 = vmatpush1.bf16.msra.mxu0 %v514
  %681 = vmatprep.subr.bf16.mxu0 0
  %682 = vmatpush1.bf16.msra.mxu0 %v515
  %683 = vmatprep.subr.bf16.mxu0 0
  %684 = vmatpush1.bf16.msra.mxu0 %v516
  %685 = vmatprep.subr.bf16.mxu0 0
  %686 = vmatpush1.bf16.msra.mxu0 %v517
  %687 = vmatprep.subr.bf16.mxu0 0
  %688 = vmatpush1.bf16.msra.mxu0 %v518
  %689 = vmatprep.subr.bf16.mxu0 0
  %690 = vmatpush1.bf16.msra.mxu0 %v519
  %691 = vmatprep.subr.bf16.mxu0 0
  %692 = vmatpush1.bf16.msra.mxu0 %v520
  %693 = vmatprep.subr.bf16.mxu0 0
  %694 = vmatpush1.bf16.msra.mxu0 %v521
  %695 = vmatprep.subr.bf16.mxu0 0
  %696 = vmatpush1.bf16.msra.mxu0 %v522
  %697 = vmatprep.subr.bf16.mxu0 0
  %698 = vmatpush1.bf16.msra.mxu0 %v523
  %699 = vmatprep.subr.bf16.mxu0 0
  %700 = vmatpush1.bf16.msra.mxu0 %v524
  %701 = vmatprep.subr.bf16.mxu0 0
  %702 = vmatpush1.bf16.msra.mxu0 %v525
  %703 = vmatprep.mubr.bf16.mxu0 %v209
  %704 = vmatmul.mubr.bf16.gmra.mrb[0].mxu0 %v208
  %v705 = vpop.f32.mrb[0].mxu0
  %v706 = vadd.f32 %v657, %v705
  %v707 = vpop.f32.mrb[0].mxu0
  %v708 = vpop.f32.mrb[0].mxu0
  %v709 = vadd.f32 %v660, %v708
  %v710 = vpop.f32.mrb[0].mxu0
  %711 = vmatprep.mubr.bf16.mxu0 %v217
  %712 = vmatmul.mubr.bf16.gmra.mrb[0].mxu0 %v216
  %v713 = vpop.f32.mrb[0].mxu0
  %v714 = vadd.f32 %v665, %v713
  %v715 = vpop.f32.mrb[0].mxu0
  %v716 = vpop.f32.mrb[0].mxu0
  %v717 = vadd.f32 %v668, %v716
  %v718 = vpop.f32.mrb[0].mxu0
  %719 = vdwg.mxu0
  %720 = vmatprep.subr.bf16.mxu0 0
  %721 = vmatpush1.bf16.msra.mxu0 %v526
  %722 = vmatprep.subr.bf16.mxu0 0
  %723 = vmatpush1.bf16.msra.mxu0 %v527
  %724 = vmatprep.subr.bf16.mxu0 0
  %725 = vmatpush1.bf16.msra.mxu0 %v528
  %726 = vmatprep.subr.bf16.mxu0 0
  %727 = vmatpush1.bf16.msra.mxu0 %v529
  %728 = vmatprep.subr.bf16.mxu0 0
  %729 = vmatpush1.bf16.msra.mxu0 %v530
  %730 = vmatprep.subr.bf16.mxu0 0
  %731 = vmatpush1.bf16.msra.mxu0 %v531
  %732 = vmatprep.subr.bf16.mxu0 0
  %733 = vmatpush1.bf16.msra.mxu0 %v532
  %734 = vmatprep.subr.bf16.mxu0 0
  %735 = vmatpush1.bf16.msra.mxu0 %v533
  %736 = vmatprep.subr.bf16.mxu0 0
  %737 = vmatpush1.bf16.msra.mxu0 %v534
  %738 = vmatprep.subr.bf16.mxu0 0
  %739 = vmatpush1.bf16.msra.mxu0 %v535
  %740 = vmatprep.subr.bf16.mxu0 0
  %741 = vmatpush1.bf16.msra.mxu0 %v536
  %742 = vmatprep.subr.bf16.mxu0 0
  %743 = vmatpush1.bf16.msra.mxu0 %v537
  %744 = vmatprep.subr.bf16.mxu0 0
  %745 = vmatpush1.bf16.msra.mxu0 %v538
  %746 = vmatprep.subr.bf16.mxu0 0
  %747 = vmatpush1.bf16.msra.mxu0 %v539
  %748 = vmatprep.subr.bf16.mxu0 0
  %749 = vmatpush1.bf16.msra.mxu0 %v540
  %750 = vmatprep.subr.bf16.mxu0 0
  %751 = vmatpush1.bf16.msra.mxu0 %v541
  %752 = vmatprep.mubr.bf16.mxu0 %v211
  %753 = vmatmul.mubr.bf16.gmra.mrb[0].mxu0 %v210
  %v754 = vpop.f32.mrb[0].mxu0
  %v755 = vadd.f32 %v706, %v754
  %v756 = vpop.f32.mrb[0].mxu0
  %v757 = vpop.f32.mrb[0].mxu0
  %v758 = vadd.f32 %v709, %v757
  %v759 = vpop.f32.mrb[0].mxu0
  %760 = vmatprep.mubr.bf16.mxu0 %v219
  %761 = vmatmul.mubr.bf16.gmra.mrb[0].mxu0 %v218
  %v762 = vpop.f32.mrb[0].mxu0
  %v763 = vadd.f32 %v714, %v762
  %v764 = vpop.f32.mrb[0].mxu0
  %v765 = vpop.f32.mrb[0].mxu0
  %v766 = vadd.f32 %v717, %v765
  %v767 = vpop.f32.mrb[0].mxu0
  %768 = vdwg.mxu0
  %769 = vmatprep.subr.bf16.mxu0 0
  %770 = vmatpush1.bf16.msra.mxu0 %v542
  %771 = vmatprep.subr.bf16.mxu0 0
  %772 = vmatpush1.bf16.msra.mxu0 %v543
  %773 = vmatprep.subr.bf16.mxu0 0
  %774 = vmatpush1.bf16.msra.mxu0 %v544
  %775 = vmatprep.subr.bf16.mxu0 0
  %776 = vmatpush1.bf16.msra.mxu0 %v545
  %777 = vmatprep.subr.bf16.mxu0 0
  %778 = vmatpush1.bf16.msra.mxu0 %v546
  %779 = vmatprep.subr.bf16.mxu0 0
  %780 = vmatpush1.bf16.msra.mxu0 %v547
  %781 = vmatprep.subr.bf16.mxu0 0
  %782 = vmatpush1.bf16.msra.mxu0 %v548
  %783 = vmatprep.subr.bf16.mxu0 0
  %784 = vmatpush1.bf16.msra.mxu0 %v549
  %785 = vmatprep.subr.bf16.mxu0 0
  %786 = vmatpush1.bf16.msra.mxu0 %v550
  %787 = vmatprep.subr.bf16.mxu0 0
  %788 = vmatpush1.bf16.msra.mxu0 %v551
  %789 = vmatprep.subr.bf16.mxu0 0
  %790 = vmatpush1.bf16.msra.mxu0 %v552
  %791 = vmatprep.subr.bf16.mxu0 0
  %792 = vmatpush1.bf16.msra.mxu0 %v553
  %793 = vmatprep.subr.bf16.mxu0 0
  %794 = vmatpush1.bf16.msra.mxu0 %v554
  %795 = vmatprep.subr.bf16.mxu0 0
  %796 = vmatpush1.bf16.msra.mxu0 %v555
  %797 = vmatprep.subr.bf16.mxu0 0
  %798 = vmatpush1.bf16.msra.mxu0 %v556
  %799 = vmatprep.subr.bf16.mxu0 0
  %800 = vmatpush1.bf16.msra.mxu0 %v557
  %801 = vmatprep.mubr.bf16.mxu0 %v213
  %802 = vmatmul.mubr.bf16.gmra.mrb[0].mxu0 %v212
  %v803 = vpop.f32.mrb[0].mxu0
  %v804 = vadd.f32 %v755, %v803
  %v805 = vpop.f32.mrb[0].mxu0
  %v806 = vpop.f32.mrb[0].mxu0
  %v807 = vadd.f32 %v758, %v806
  %v808 = vpop.f32.mrb[0].mxu0
  %809 = vmatprep.mubr.bf16.mxu0 %v221
  %810 = vmatmul.mubr.bf16.gmra.mrb[0].mxu0 %v220
  %v811 = vpop.f32.mrb[0].mxu0
  %v812 = vadd.f32 %v763, %v811
  %v813 = vpop.f32.mrb[0].mxu0
  %v814 = vpop.f32.mrb[0].mxu0
  %v815 = vadd.f32 %v766, %v814
  %v816 = vpop.f32.mrb[0].mxu0
  %817 = vdwg.mxu0
  %v818 = vpack.c.bf16 %v807, %v804
  %v819 = vpack.c.bf16 %v815, %v812
  %v822 = vunpack.c.l.b16 %v818
  %v823 = vunpack.c.h.b16 %v818
  %v824 = vunpack.c.l.b16 %v819
  %v825 = vunpack.c.h.b16 %v819
  %v826 = vpack.c.b16 %v822, %v822
  %v827 = vpack.c.b16 %v823, %v823
  %v828 = vpack.c.b16 %v824, %v824
  %v829 = vpack.c.b16 %v825, %v825
  %834 = vst [vmem:[%s2] sm:$0xf] %v826
  %835 = vst [vmem:[%s2 + $0x4] sm:$0xf] %v827
  %836 = vst [vmem:[%s2 + $0x8] sm:$0xf] %v828
  %837 = vst [vmem:[%s2 + $0xc] sm:$0xf] %v829
  %v838 = vadd.f32 %v804, %v807
  %v839 = vadd.f32 %v838, %v812
  %v840 = vadd.f32 %v839, %v815
  %v841 = vrot.slane %v840, 4
  %v842 = vadd.f32 %v840, %v841
  %v843 = vrot.slane %v842, 2
  %v844 = vadd.f32 %v842, %v843
  %v845 = vrot.slane %v844, 1
  %v846 = vadd.f32 %v844, %v845
  %v847 = vmul.f32 %v804, %v804
  %v848 = vmul.f32 %v807, %v807
  %v849 = vmul.f32 %v812, %v812
  %v850 = vmul.f32 %v815, %v815
  %v851 = vadd.f32 %v847, %v848
  %v852 = vadd.f32 %v851, %v849
  %v853 = vadd.f32 %v852, %v850
  %v854 = vrot.slane %v853, 4
  %v855 = vadd.f32 %v853, %v854
  %v856 = vrot.slane %v855, 2
  %v857 = vadd.f32 %v855, %v856
  %v858 = vrot.slane %v857, 1
  %v859 = vadd.f32 %v857, %v858
  %vm860 = vcmask 1040384
  %v861 = vsel %vm860, %v846, %v859
  %862 = vst [vmem:[%s3] sm:$0x3] %v861
  // Predicated region
  $region10: #{discriminator_forward.5} parent=0 // pred_check
    _
  $region11: #{discriminator_forward.5} parent=0 // pred_check_branch
    %864 = sbr.rel (0) target = $region13
  $region12: #{discriminator_forward.5} parent=0 // pred_region
    _
  $region13: #{discriminator_forward.5} parent=0 // pred_fallthru
    _
  // Predicated region
  $region14: #{discriminator_forward.5} parent=0 // pred_check
    _
  $region15: #{discriminator_forward.5} parent=0 // pred_check_branch
    %866 = sbr.rel (0) target = $region17
  $region16: #{discriminator_forward.5} parent=0 // pred_region
    _
  $region17: #{discriminator_forward.5} parent=0 // pred_fallthru
    _
  // Predicated region
  $region18: #{discriminator_forward.5} parent=0 // pred_check
    _
  $region19: #{discriminator_forward.5} parent=0 // pred_check_branch
    %868 = sbr.rel (0) target = $region21
  $region20: #{discriminator_forward.5} parent=0 // pred_region
    _
  $region21: #{discriminator_forward.5} parent=0 // pred_fallthru
    _
  // Predicated region
  $region22: #{discriminator_forward.5} parent=0 // pred_check
    _
  $region23: #{discriminator_forward.5} parent=0 // pred_check_branch
    %870 = sbr.rel (0) target = $region25
  $region24: #{discriminator_forward.5} parent=0 // pred_region
    _
  $region25: #{discriminator_forward.5} parent=0 // pred_fallthru
    _

// kernel: discriminator_forward.6
$region0: #{discriminator_forward.6}
  #allocation0 [shape = 'u32[]', space=smem, size = 0x4, offset = 0x4, fixed_abs, tag = 'smem constant byte address 0x4 - core index']
  #allocation1 [shape = 'u32[144,128]{1,0:T(1,128)}', space=vmem, size = 0x12000, scoped, tag = 'internal scratch']
  %s0 = inlined_call_operand.vmem [shape: bf16[16,2048], index: 0, kind: input, shape index: {}]
  %s1 = inlined_call_operand.vmem [shape: bf16[2048,256], index: 1, kind: input, shape index: {}]
  %s2 = inlined_call_operand.vmem [shape: bf16[16,256], index: 2, kind: output, shape index: {0}]
  %s3 = inlined_call_operand.vmem [shape: f32[1,2,256], index: 3, kind: output, shape index: {1}]
  %4 = xla_tuple %s2, %s3
  %s5 = sld [smem:[#allocation0]]
  $region26: #{discriminator_forward.6} parent=0
    _
  %s7 = ssub.s32 1, %s5
  %s8 = scalar_select 0, %s7, %s5
  // Predicated region
  $region2: #{discriminator_forward.6} parent=0 // pred_check
    _
  $region3: #{discriminator_forward.6} parent=0 // pred_check_branch
    %10 = sbr.rel (0) target = $region5
  $region4: #{discriminator_forward.6} parent=0 // pred_region
    _
  $region5: #{discriminator_forward.6} parent=0 // pred_fallthru
    _
  // Predicated region
  $region6: #{discriminator_forward.6} parent=0 // pred_check
    _
  $region7: #{discriminator_forward.6} parent=0 // pred_check_branch
    %12 = sbr.rel (0) target = $region9
  $region8: #{discriminator_forward.6} parent=0 // pred_region
    _
  $region9: #{discriminator_forward.6} parent=0 // pred_fallthru
    _
  %v13 = vld [vmem:[%s0] sm:$0xff]
  %v14 = vld [vmem:[%s0 + $0x8] sm:$0xff]
  %v15 = vld [vmem:[%s0 + $0x10] sm:$0xff]
  %v16 = vld [vmem:[%s0 + $0x18] sm:$0xff]
  %v17 = vld [vmem:[%s0 + $0x20] sm:$0xff]
  %v18 = vld [vmem:[%s0 + $0x28] sm:$0xff]
  %v19 = vld [vmem:[%s0 + $0x30] sm:$0xff]
  %v20 = vld [vmem:[%s0 + $0x38] sm:$0xff]
  %v21 = vld [vmem:[%s0 + $0x40] sm:$0xff]
  %v22 = vld [vmem:[%s0 + $0x48] sm:$0xff]
  %v23 = vld [vmem:[%s0 + $0x50] sm:$0xff]
  %v24 = vld [vmem:[%s0 + $0x58] sm:$0xff]
  %v25 = vld [vmem:[%s0 + $0x60] sm:$0xff]
  %v26 = vld [vmem:[%s0 + $0x68] sm:$0xff]
  %v27 = vld [vmem:[%s0 + $0x70] sm:$0xff]
  %v28 = vld [vmem:[%s0 + $0x78] sm:$0xff]
  %v29 = vld [vmem:[%s1] sm:$0xff]
  %v30 = vld [vmem:[%s1 + $0x8] sm:$0xff]
  %v31 = vld [vmem:[%s1 + $0x10] sm:$0xff]
  %v32 = vld [vmem:[%s1 + $0x18] sm:$0xff]
  %v33 = vld [vmem:[%s1 + $0x20] sm:$0xff]
  %v34 = vld [vmem:[%s1 + $0x28] sm:$0xff]
  %v35 = vld [vmem:[%s1 + $0x30] sm:$0xff]
  %v36 = vld [vmem:[%s1 + $0x38] sm:$0xff]
  %v37 = vld [vmem:[%s1 + $0x40] sm:$0xff]
  %v38 = vld [vmem:[%s1 + $0x48] sm:$0xff]
  %v39 = vld [vmem:[%s1 + $0x50] sm:$0xff]
  %v40 = vld [vmem:[%s1 + $0x58] sm:$0xff]
  %v41 = vld [vmem:[%s1 + $0x60] sm:$0xff]
  %v42 = vld [vmem:[%s1 + $0x68] sm:$0xff]
  %v43 = vld [vmem:[%s1 + $0x70] sm:$0xff]
  %v44 = vld [vmem:[%s1 + $0x78] sm:$0xff]
  %v45 = vld [vmem:[%s1 + $0x80] sm:$0xff]
  %v46 = vld [vmem:[%s1 + $0x88] sm:$0xff]
  %v47 = vld [vmem:[%s1 + $0x90] sm:$0xff]
  %v48 = vld [vmem:[%s1 + $0x98] sm:$0xff]
  %v49 = vld [vmem:[%s1 + $0xa0] sm:$0xff]
  %v50 = vld [vmem:[%s1 + $0xa8] sm:$0xff]
  %v51 = vld [vmem:[%s1 + $0xb0] sm:$0xff]
  %v52 = vld [vmem:[%s1 + $0xb8] sm:$0xff]
  %v53 = vld [vmem:[%s1 + $0xc0] sm:$0xff]
  %v54 = vld [vmem:[%s1 + $0xc8] sm:$0xff]
  %v55 = vld [vmem:[%s1 + $0xd0] sm:$0xff]
  %v56 = vld [vmem:[%s1 + $0xd8] sm:$0xff]
  %v57 = vld [vmem:[%s1 + $0xe0] sm:$0xff]
  %v58 = vld [vmem:[%s1 + $0xe8] sm:$0xff]
  %v59 = vld [vmem:[%s1 + $0xf0] sm:$0xff]
  %v60 = vld [vmem:[%s1 + $0xf8] sm:$0xff]
  %v61 = vld [vmem:[%s1 + $0x100] sm:$0xff]
  %v62 = vld [vmem:[%s1 + $0x108] sm:$0xff]
  %v63 = vld [vmem:[%s1 + $0x110] sm:$0xff]
  %v64 = vld [vmem:[%s1 + $0x118] sm:$0xff]
  %v65 = vld [vmem:[%s1 + $0x120] sm:$0xff]
  %v66 = vld [vmem:[%s1 + $0x128] sm:$0xff]
  %v67 = vld [vmem:[%s1 + $0x130] sm:$0xff]
  %v68 = vld [vmem:[%s1 + $0x138] sm:$0xff]
  %v69 = vld [vmem:[%s1 + $0x140] sm:$0xff]
  %v70 = vld [vmem:[%s1 + $0x148] sm:$0xff]
  %v71 = vld [vmem:[%s1 + $0x150] sm:$0xff]
  %v72 = vld [vmem:[%s1 + $0x158] sm:$0xff]
  %v73 = vld [vmem:[%s1 + $0x160] sm:$0xff]
  %v74 = vld [vmem:[%s1 + $0x168] sm:$0xff]
  %v75 = vld [vmem:[%s1 + $0x170] sm:$0xff]
  %v76 = vld [vmem:[%s1 + $0x178] sm:$0xff]
  %v77 = vld [vmem:[%s1 + $0x180] sm:$0xff]
  %v78 = vld [vmem:[%s1 + $0x188] sm:$0xff]
  %v79 = vld [vmem:[%s1 + $0x190] sm:$0xff]
  %v80 = vld [vmem:[%s1 + $0x198] sm:$0xff]
  %v81 = vld [vmem:[%s1 + $0x1a0] sm:$0xff]
  %v82 = vld [vmem:[%s1 + $0x1a8] sm:$0xff]
  %v83 = vld [vmem:[%s1 + $0x1b0] sm:$0xff]
  %v84 = vld [vmem:[%s1 + $0x1b8] sm:$0xff]
  %v85 = vld [vmem:[%s1 + $0x1c0] sm:$0xff]
  %v86 = vld [vmem:[%s1 + $0x1c8] sm:$0xff]
  %v87 = vld [vmem:[%s1 + $0x1d0] sm:$0xff]
  %v88 = vld [vmem:[%s1 + $0x1d8] sm:$0xff]
  %v89 = vld [vmem:[%s1 + $0x1e0] sm:$0xff]
  %v90 = vld [vmem:[%s1 + $0x1e8] sm:$0xff]
  %v91 = vld [vmem:[%s1 + $0x1f0] sm:$0xff]
  %v92 = vld [vmem:[%s1 + $0x1f8] sm:$0xff]
  %v93 = vld [vmem:[%s1 + $0x200] sm:$0xff]
  %v94 = vld [vmem:[%s1 + $0x208] sm:$0xff]
  %v95 = vld [vmem:[%s1 + $0x210] sm:$0xff]
  %v96 = vld [vmem:[%s1 + $0x218] sm:$0xff]
  %v97 = vld [vmem:[%s1 + $0x220] sm:$0xff]
  %v98 = vld [vmem:[%s1 + $0x228] sm:$0xff]
  %v99 = vld [vmem:[%s1 + $0x230] sm:$0xff]
  %v100 = vld [vmem:[%s1 + $0x238] sm:$0xff]
  %v101 = vld [vmem:[%s1 + $0x240] sm:$0xff]
  %v102 = vld [vmem:[%s1 + $0x248] sm:$0xff]
  %v103 = vld [vmem:[%s1 + $0x250] sm:$0xff]
  %v104 = vld [vmem:[%s1 + $0x258] sm:$0xff]
  %v105 = vld [vmem:[%s1 + $0x260] sm:$0xff]
  %v106 = vld [vmem:[%s1 + $0x268] sm:$0xff]
  %v107 = vld [vmem:[%s1 + $0x270] sm:$0xff]
  %v108 = vld [vmem:[%s1 + $0x278] sm:$0xff]
  %v109 = vld [vmem:[%s1 + $0x280] sm:$0xff]
  %v110 = vld [vmem:[%s1 + $0x288] sm:$0xff]
  %v111 = vld [vmem:[%s1 + $0x290] sm:$0xff]
  %v112 = vld [vmem:[%s1 + $0x298] sm:$0xff]
  %v113 = vld [vmem:[%s1 + $0x2a0] sm:$0xff]
  %v114 = vld [vmem:[%s1 + $0x2a8] sm:$0xff]
  %v115 = vld [vmem:[%s1 + $0x2b0] sm:$0xff]
  %v116 = vld [vmem:[%s1 + $0x2b8] sm:$0xff]
  %v117 = vld [vmem:[%s1 + $0x2c0] sm:$0xff]
  %v118 = vld [vmem:[%s1 + $0x2c8] sm:$0xff]
  %v119 = vld [vmem:[%s1 + $0x2d0] sm:$0xff]
  %v120 = vld [vmem:[%s1 + $0x2d8] sm:$0xff]
  %v121 = vld [vmem:[%s1 + $0x2e0] sm:$0xff]
  %v122 = vld [vmem:[%s1 + $0x2e8] sm:$0xff]
  %v123 = vld [vmem:[%s1 + $0x2f0] sm:$0xff]
  %v124 = vld [vmem:[%s1 + $0x2f8] sm:$0xff]
  %v125 = vld [vmem:[%s1 + $0x300] sm:$0xff]
  %v126 = vld [vmem:[%s1 + $0x308] sm:$0xff]
  %v127 = vld [vmem:[%s1 + $0x310] sm:$0xff]
  %v128 = vld [vmem:[%s1 + $0x318] sm:$0xff]
  %v129 = vld [vmem:[%s1 + $0x320] sm:$0xff]
  %v130 = vld [vmem:[%s1 + $0x328] sm:$0xff]
  %v131 = vld [vmem:[%s1 + $0x330] sm:$0xff]
  %v132 = vld [vmem:[%s1 + $0x338] sm:$0xff]
  %v133 = vld [vmem:[%s1 + $0x340] sm:$0xff]
  %v134 = vld [vmem:[%s1 + $0x348] sm:$0xff]
  %v135 = vld [vmem:[%s1 + $0x350] sm:$0xff]
  %v136 = vld [vmem:[%s1 + $0x358] sm:$0xff]
  %v137 = vld [vmem:[%s1 + $0x360] sm:$0xff]
  %v138 = vld [vmem:[%s1 + $0x368] sm:$0xff]
  %v139 = vld [vmem:[%s1 + $0x370] sm:$0xff]
  %v140 = vld [vmem:[%s1 + $0x378] sm:$0xff]
  %v141 = vld [vmem:[%s1 + $0x380] sm:$0xff]
  %v142 = vld [vmem:[%s1 + $0x388] sm:$0xff]
  %v143 = vld [vmem:[%s1 + $0x390] sm:$0xff]
  %v144 = vld [vmem:[%s1 + $0x398] sm:$0xff]
  %v145 = vld [vmem:[%s1 + $0x3a0] sm:$0xff]
  %v146 = vld [vmem:[%s1 + $0x3a8] sm:$0xff]
  %v147 = vld [vmem:[%s1 + $0x3b0] sm:$0xff]
  %v148 = vld [vmem:[%s1 + $0x3b8] sm:$0xff]
  %v149 = vld [vmem:[%s1 + $0x3c0] sm:$0xff]
  %v150 = vld [vmem:[%s1 + $0x3c8] sm:$0xff]
  %v151 = vld [vmem:[%s1 + $0x3d0] sm:$0xff]
  %v152 = vld [vmem:[%s1 + $0x3d8] sm:$0xff]
  %v153 = vld [vmem:[%s1 + $0x3e0] sm:$0xff]
  %v154 = vld [vmem:[%s1 + $0x3e8] sm:$0xff]
  %v155 = vld [vmem:[%s1 + $0x3f0] sm:$0xff]
  %v156 = vld [vmem:[%s1 + $0x3f8] sm:$0xff]
  %v157 = vld [vmem:[%s1 + $0x400] sm:$0xff]
  %v158 = vld [vmem:[%s1 + $0x408] sm:$0xff]
  %v159 = vld [vmem:[%s1 + $0x410] sm:$0xff]
  %v160 = vld [vmem:[%s1 + $0x418] sm:$0xff]
  %v161 = vld [vmem:[%s1 + $0x420] sm:$0xff]
  %v162 = vld [vmem:[%s1 + $0x428] sm:$0xff]
  %v163 = vld [vmem:[%s1 + $0x430] sm:$0xff]
  %v164 = vld [vmem:[%s1 + $0x438] sm:$0xff]
  %v165 = vld [vmem:[%s1 + $0x440] sm:$0xff]
  %v166 = vld [vmem:[%s1 + $0x448] sm:$0xff]
  %v167 = vld [vmem:[%s1 + $0x450] sm:$0xff]
  %v168 = vld [vmem:[%s1 + $0x458] sm:$0xff]
  %v169 = vld [vmem:[%s1 + $0x460] sm:$0xff]
  %v170 = vld [vmem:[%s1 + $0x468] sm:$0xff]
  %v171 = vld [vmem:[%s1 + $0x470] sm:$0xff]
  %v172 = vld [vmem:[%s1 + $0x478] sm:$0xff]
  %v173 = vld [vmem:[%s1 + $0x480] sm:$0xff]
  %v174 = vld [vmem:[%s1 + $0x488] sm:$0xff]
  %v175 = vld [vmem:[%s1 + $0x490] sm:$0xff]
  %v176 = vld [vmem:[%s1 + $0x498] sm:$0xff]
  %v177 = vld [vmem:[%s1 + $0x4a0] sm:$0xff]
  %v178 = vld [vmem:[%s1 + $0x4a8] sm:$0xff]
  %v179 = vld [vmem:[%s1 + $0x4b0] sm:$0xff]
  %v180 = vld [vmem:[%s1 + $0x4b8] sm:$0xff]
  %v181 = vld [vmem:[%s1 + $0x4c0] sm:$0xff]
  %v182 = vld [vmem:[%s1 + $0x4c8] sm:$0xff]
  %v183 = vld [vmem:[%s1 + $0x4d0] sm:$0xff]
  %v184 = vld [vmem:[%s1 + $0x4d8] sm:$0xff]
  %v185 = vld [vmem:[%s1 + $0x4e0] sm:$0xff]
  %v186 = vld [vmem:[%s1 + $0x4e8] sm:$0xff]
  %v187 = vld [vmem:[%s1 + $0x4f0] sm:$0xff]
  %v188 = vld [vmem:[%s1 + $0x4f8] sm:$0xff]
  %v189 = vld [vmem:[%s1 + $0x500] sm:$0xff]
  %v190 = vld [vmem:[%s1 + $0x508] sm:$0xff]
  %v191 = vld [vmem:[%s1 + $0x510] sm:$0xff]
  %v192 = vld [vmem:[%s1 + $0x518] sm:$0xff]
  %v193 = vld [vmem:[%s1 + $0x520] sm:$0xff]
  %v194 = vld [vmem:[%s1 + $0x528] sm:$0xff]
  %v195 = vld [vmem:[%s1 + $0x530] sm:$0xff]
  %v196 = vld [vmem:[%s1 + $0x538] sm:$0xff]
  %v197 = vld [vmem:[%s1 + $0x540] sm:$0xff]
  %v198 = vld [vmem:[%s1 + $0x548] sm:$0xff]
  %v199 = vld [vmem:[%s1 + $0x550] sm:$0xff]
  %v200 = vld [vmem:[%s1 + $0x558] sm:$0xff]
  %v201 = vld [vmem:[%s1 + $0x560] sm:$0xff]
  %v202 = vld [vmem:[%s1 + $0x568] sm:$0xff]
  %v203 = vld [vmem:[%s1 + $0x570] sm:$0xff]
  %v204 = vld [vmem:[%s1 + $0x578] sm:$0xff]
  %v205 = vld [vmem:[%s1 + $0x580] sm:$0xff]
  %v206 = vld [vmem:[%s1 + $0x588] sm:$0xff]
  %v207 = vld [vmem:[%s1 + $0x590] sm:$0xff]
  %v208 = vld [vmem:[%s1 + $0x598] sm:$0xff]
  %v209 = vld [vmem:[%s1 + $0x5a0] sm:$0xff]
  %v210 = vld [vmem:[%s1 + $0x5a8] sm:$0xff]
  %v211 = vld [vmem:[%s1 + $0x5b0] sm:$0xff]
  %v212 = vld [vmem:[%s1 + $0x5b8] sm:$0xff]
  %v213 = vld [vmem:[%s1 + $0x5c0] sm:$0xff]
  %v214 = vld [vmem:[%s1 + $0x5c8] sm:$0xff]
  %v215 = vld [vmem:[%s1 + $0x5d0] sm:$0xff]
  %v216 = vld [vmem:[%s1 + $0x5d8] sm:$0xff]
  %v217 = vld [vmem:[%s1 + $0x5e0] sm:$0xff]
  %v218 = vld [vmem:[%s1 + $0x5e8] sm:$0xff]
  %v219 = vld [vmem:[%s1 + $0x5f0] sm:$0xff]
  %v220 = vld [vmem:[%s1 + $0x5f8] sm:$0xff]
  %v221 = vld [vmem:[%s1 + $0x600] sm:$0xff]
  %v222 = vld [vmem:[%s1 + $0x608] sm:$0xff]
  %v223 = vld [vmem:[%s1 + $0x610] sm:$0xff]
  %v224 = vld [vmem:[%s1 + $0x618] sm:$0xff]
  %v225 = vld [vmem:[%s1 + $0x620] sm:$0xff]
  %v226 = vld [vmem:[%s1 + $0x628] sm:$0xff]
  %v227 = vld [vmem:[%s1 + $0x630] sm:$0xff]
  %v228 = vld [vmem:[%s1 + $0x638] sm:$0xff]
  %v229 = vld [vmem:[%s1 + $0x640] sm:$0xff]
  %v230 = vld [vmem:[%s1 + $0x648] sm:$0xff]
  %v231 = vld [vmem:[%s1 + $0x650] sm:$0xff]
  %v232 = vld [vmem:[%s1 + $0x658] sm:$0xff]
  %v233 = vld [vmem:[%s1 + $0x660] sm:$0xff]
  %v234 = vld [vmem:[%s1 + $0x668] sm:$0xff]
  %v235 = vld [vmem:[%s1 + $0x670] sm:$0xff]
  %v236 = vld [vmem:[%s1 + $0x678] sm:$0xff]
  %v237 = vld [vmem:[%s1 + $0x680] sm:$0xff]
  %v238 = vld [vmem:[%s1 + $0x688] sm:$0xff]
  %v239 = vld [vmem:[%s1 + $0x690] sm:$0xff]
  %v240 = vld [vmem:[%s1 + $0x698] sm:$0xff]
  %v241 = vld [vmem:[%s1 + $0x6a0] sm:$0xff]
  %v242 = vld [vmem:[%s1 + $0x6a8] sm:$0xff]
  %v243 = vld [vmem:[%s1 + $0x6b0] sm:$0xff]
  %v244 = vld [vmem:[%s1 + $0x6b8] sm:$0xff]
  %v245 = vld [vmem:[%s1 + $0x6c0] sm:$0xff]
  %v246 = vld [vmem:[%s1 + $0x6c8] sm:$0xff]
  %v247 = vld [vmem:[%s1 + $0x6d0] sm:$0xff]
  %v248 = vld [vmem:[%s1 + $0x6d8] sm:$0xff]
  %v249 = vld [vmem:[%s1 + $0x6e0] sm:$0xff]
  %v250 = vld [vmem:[%s1 + $0x6e8] sm:$0xff]
  %v251 = vld [vmem:[%s1 + $0x6f0] sm:$0xff]
  %v252 = vld [vmem:[%s1 + $0x6f8] sm:$0xff]
  %v253 = vld [vmem:[%s1 + $0x700] sm:$0xff]
  %v254 = vld [vmem:[%s1 + $0x708] sm:$0xff]
  %v255 = vld [vmem:[%s1 + $0x710] sm:$0xff]
  %v256 = vld [vmem:[%s1 + $0x718] sm:$0xff]
  %v257 = vld [vmem:[%s1 + $0x720] sm:$0xff]
  %v258 = vld [vmem:[%s1 + $0x728] sm:$0xff]
  %v259 = vld [vmem:[%s1 + $0x730] sm:$0xff]
  %v260 = vld [vmem:[%s1 + $0x738] sm:$0xff]
  %v261 = vld [vmem:[%s1 + $0x740] sm:$0xff]
  %v262 = vld [vmem:[%s1 + $0x748] sm:$0xff]
  %v263 = vld [vmem:[%s1 + $0x750] sm:$0xff]
  %v264 = vld [vmem:[%s1 + $0x758] sm:$0xff]
  %v265 = vld [vmem:[%s1 + $0x760] sm:$0xff]
  %v266 = vld [vmem:[%s1 + $0x768] sm:$0xff]
  %v267 = vld [vmem:[%s1 + $0x770] sm:$0xff]
  %v268 = vld [vmem:[%s1 + $0x778] sm:$0xff]
  %v269 = vld [vmem:[%s1 + $0x780] sm:$0xff]
  %v270 = vld [vmem:[%s1 + $0x788] sm:$0xff]
  %v271 = vld [vmem:[%s1 + $0x790] sm:$0xff]
  %v272 = vld [vmem:[%s1 + $0x798] sm:$0xff]
  %v273 = vld [vmem:[%s1 + $0x7a0] sm:$0xff]
  %v274 = vld [vmem:[%s1 + $0x7a8] sm:$0xff]
  %v275 = vld [vmem:[%s1 + $0x7b0] sm:$0xff]
  %v276 = vld [vmem:[%s1 + $0x7b8] sm:$0xff]
  %v277 = vld [vmem:[%s1 + $0x7c0] sm:$0xff]
  %v278 = vld [vmem:[%s1 + $0x7c8] sm:$0xff]
  %v279 = vld [vmem:[%s1 + $0x7d0] sm:$0xff]
  %v280 = vld [vmem:[%s1 + $0x7d8] sm:$0xff]
  %v281 = vld [vmem:[%s1 + $0x7e0] sm:$0xff]
  %v282 = vld [vmem:[%s1 + $0x7e8] sm:$0xff]
  %v283 = vld [vmem:[%s1 + $0x7f0] sm:$0xff]
  %v284 = vld [vmem:[%s1 + $0x7f8] sm:$0xff]
  %v301 = vunpack.c.l.b16 %v13
  %v302 = vunpack.c.h.b16 %v13
  %v303 = vunpack.c.l.b16 %v14
  %v304 = vunpack.c.h.b16 %v14
  %v305 = vunpack.c.l.b16 %v15
  %v306 = vunpack.c.h.b16 %v15
  %v307 = vunpack.c.l.b16 %v16
  %v308 = vunpack.c.h.b16 %v16
  %v309 = vunpack.c.l.b16 %v17
  %v310 = vunpack.c.h.b16 %v17
  %v311 = vunpack.c.l.b16 %v18
  %v312 = vunpack.c.h.b16 %v18
  %v313 = vunpack.c.l.b16 %v19
  %v314 = vunpack.c.h.b16 %v19
  %v315 = vunpack.c.l.b16 %v20
  %v316 = vunpack.c.h.b16 %v20
  %v317 = vunpack.c.l.b16 %v21
  %v318 = vunpack.c.h.b16 %v21
  %v319 = vunpack.c.l.b16 %v22
  %v320 = vunpack.c.h.b16 %v22
  %v321 = vunpack.c.l.b16 %v23
  %v322 = vunpack.c.h.b16 %v23
  %v323 = vunpack.c.l.b16 %v24
  %v324 = vunpack.c.h.b16 %v24
  %v325 = vunpack.c.l.b16 %v25
  %v326 = vunpack.c.h.b16 %v25
  %v327 = vunpack.c.l.b16 %v26
  %v328 = vunpack.c.h.b16 %v26
  %v329 = vunpack.c.l.b16 %v27
  %v330 = vunpack.c.h.b16 %v27
  %v331 = vunpack.c.l.b16 %v28
  %v332 = vunpack.c.h.b16 %v28
  %v333 = vpack.c.b16 %v317, %v301
  %v334 = vpack.c.b16 %v318, %v302
  %v335 = vpack.c.b16 %v319, %v303
  %v336 = vpack.c.b16 %v320, %v304
  %v337 = vpack.c.b16 %v321, %v305
  %v338 = vpack.c.b16 %v322, %v306
  %v339 = vpack.c.b16 %v323, %v307
  %v340 = vpack.c.b16 %v324, %v308
  %v341 = vpack.c.b16 %v325, %v309
  %v342 = vpack.c.b16 %v326, %v310
  %v343 = vpack.c.b16 %v327, %v311
  %v344 = vpack.c.b16 %v328, %v312
  %v345 = vpack.c.b16 %v329, %v313
  %v346 = vpack.c.b16 %v330, %v314
  %v347 = vpack.c.b16 %v331, %v315
  %v348 = vpack.c.b16 %v332, %v316
  %v621 = vunpack.c.l.b16 %v29
  %v622 = vunpack.c.h.b16 %v29
  %v623 = vunpack.c.l.b16 %v30
  %v624 = vunpack.c.h.b16 %v30
  %v625 = vunpack.c.l.b16 %v31
  %v626 = vunpack.c.h.b16 %v31
  %v627 = vunpack.c.l.b16 %v32
  %v628 = vunpack.c.h.b16 %v32
  %v629 = vunpack.c.l.b16 %v33
  %v630 = vunpack.c.h.b16 %v33
  %v631 = vunpack.c.l.b16 %v34
  %v632 = vunpack.c.h.b16 %v34
  %v633 = vunpack.c.l.b16 %v35
  %v634 = vunpack.c.h.b16 %v35
  %v635 = vunpack.c.l.b16 %v36
  %v636 = vunpack.c.h.b16 %v36
  %v637 = vunpack.c.l.b16 %v37
  %v638 = vunpack.c.h.b16 %v37
  %v639 = vunpack.c.l.b16 %v38
  %v640 = vunpack.c.h.b16 %v38
  %v641 = vunpack.c.l.b16 %v39
  %v642 = vunpack.c.h.b16 %v39
  %v643 = vunpack.c.l.b16 %v40
  %v644 = vunpack.c.h.b16 %v40
  %v645 = vunpack.c.l.b16 %v41
  %v646 = vunpack.c.h.b16 %v41
  %v647 = vunpack.c.l.b16 %v42
  %v648 = vunpack.c.h.b16 %v42
  %v649 = vunpack.c.l.b16 %v43
  %v650 = vunpack.c.h.b16 %v43
  %v651 = vunpack.c.l.b16 %v44
  %v652 = vunpack.c.h.b16 %v44
  %v653 = vunpack.c.l.b16 %v45
  %v654 = vunpack.c.h.b16 %v45
  %v655 = vunpack.c.l.b16 %v46
  %v656 = vunpack.c.h.b16 %v46
  %v657 = vunpack.c.l.b16 %v47
  %v658 = vunpack.c.h.b16 %v47
  %v659 = vunpack.c.l.b16 %v48
  %v660 = vunpack.c.h.b16 %v48
  %v661 = vunpack.c.l.b16 %v49
  %v662 = vunpack.c.h.b16 %v49
  %v663 = vunpack.c.l.b16 %v50
  %v664 = vunpack.c.h.b16 %v50
  %v665 = vunpack.c.l.b16 %v51
  %v666 = vunpack.c.h.b16 %v51
  %v667 = vunpack.c.l.b16 %v52
  %v668 = vunpack.c.h.b16 %v52
  %v669 = vunpack.c.l.b16 %v53
  %v670 = vunpack.c.h.b16 %v53
  %v671 = vunpack.c.l.b16 %v54
  %v672 = vunpack.c.h.b16 %v54
  %v673 = vunpack.c.l.b16 %v55
  %v674 = vunpack.c.h.b16 %v55
  %v675 = vunpack.c.l.b16 %v56
  %v676 = vunpack.c.h.b16 %v56
  %v677 = vunpack.c.l.b16 %v57
  %v678 = vunpack.c.h.b16 %v57
  %v679 = vunpack.c.l.b16 %v58
  %v680 = vunpack.c.h.b16 %v58
  %v681 = vunpack.c.l.b16 %v59
  %v682 = vunpack.c.h.b16 %v59
  %v683 = vunpack.c.l.b16 %v60
  %v684 = vunpack.c.h.b16 %v60
  %v685 = vunpack.c.l.b16 %v61
  %v686 = vunpack.c.h.b16 %v61
  %v687 = vunpack.c.l.b16 %v62
  %v688 = vunpack.c.h.b16 %v62
  %v689 = vunpack.c.l.b16 %v63
  %v690 = vunpack.c.h.b16 %v63
  %v691 = vunpack.c.l.b16 %v64
  %v692 = vunpack.c.h.b16 %v64
  %v693 = vunpack.c.l.b16 %v65
  %v694 = vunpack.c.h.b16 %v65
  %v695 = vunpack.c.l.b16 %v66
  %v696 = vunpack.c.h.b16 %v66
  %v697 = vunpack.c.l.b16 %v67
  %v698 = vunpack.c.h.b16 %v67
  %v699 = vunpack.c.l.b16 %v68
  %v700 = vunpack.c.h.b16 %v68
  %v701 = vunpack.c.l.b16 %v69
  %v702 = vunpack.c.h.b16 %v69
  %v703 = vunpack.c.l.b16 %v70
  %v704 = vunpack.c.h.b16 %v70
  %v705 = vunpack.c.l.b16 %v71
  %v706 = vunpack.c.h.b16 %v71
  %v707 = vunpack.c.l.b16 %v72
  %v708 = vunpack.c.h.b16 %v72
  %v709 = vunpack.c.l.b16 %v73
  %v710 = vunpack.c.h.b16 %v73
  %v711 = vunpack.c.l.b16 %v74
  %v712 = vunpack.c.h.b16 %v74
  %v713 = vunpack.c.l.b16 %v75
  %v714 = vunpack.c.h.b16 %v75
  %v715 = vunpack.c.l.b16 %v76
  %v716 = vunpack.c.h.b16 %v76
  %v717 = vunpack.c.l.b16 %v77
  %v718 = vunpack.c.h.b16 %v77
  %v719 = vunpack.c.l.b16 %v78
  %v720 = vunpack.c.h.b16 %v78
  %v721 = vunpack.c.l.b16 %v79
  %v722 = vunpack.c.h.b16 %v79
  %v723 = vunpack.c.l.b16 %v80
  %v724 = vunpack.c.h.b16 %v80
  %v725 = vunpack.c.l.b16 %v81
  %v726 = vunpack.c.h.b16 %v81
  %v727 = vunpack.c.l.b16 %v82
  %v728 = vunpack.c.h.b16 %v82
  %v729 = vunpack.c.l.b16 %v83
  %v730 = vunpack.c.h.b16 %v83
  %v731 = vunpack.c.l.b16 %v84
  %v732 = vunpack.c.h.b16 %v84
  %v733 = vunpack.c.l.b16 %v85
  %v734 = vunpack.c.h.b16 %v85
  %v735 = vunpack.c.l.b16 %v86
  %v736 = vunpack.c.h.b16 %v86
  %v737 = vunpack.c.l.b16 %v87
  %v738 = vunpack.c.h.b16 %v87
  %v739 = vunpack.c.l.b16 %v88
  %v740 = vunpack.c.h.b16 %v88
  %v741 = vunpack.c.l.b16 %v89
  %v742 = vunpack.c.h.b16 %v89
  %v743 = vunpack.c.l.b16 %v90
  %v744 = vunpack.c.h.b16 %v90
  %v745 = vunpack.c.l.b16 %v91
  %v746 = vunpack.c.h.b16 %v91
  %v747 = vunpack.c.l.b16 %v92
  %v748 = vunpack.c.h.b16 %v92
  %v749 = vunpack.c.l.b16 %v93
  %v750 = vunpack.c.h.b16 %v93
  %v751 = vunpack.c.l.b16 %v94
  %v752 = vunpack.c.h.b16 %v94
  %v753 = vunpack.c.l.b16 %v95
  %v754 = vunpack.c.h.b16 %v95
  %v755 = vunpack.c.l.b16 %v96
  %v756 = vunpack.c.h.b16 %v96
  %v757 = vunpack.c.l.b16 %v97
  %v758 = vunpack.c.h.b16 %v97
  %v759 = vunpack.c.l.b16 %v98
  %v760 = vunpack.c.h.b16 %v98
  %v761 = vunpack.c.l.b16 %v99
  %v762 = vunpack.c.h.b16 %v99
  %v763 = vunpack.c.l.b16 %v100
  %v764 = vunpack.c.h.b16 %v100
  %v765 = vunpack.c.l.b16 %v101
  %v766 = vunpack.c.h.b16 %v101
  %v767 = vunpack.c.l.b16 %v102
  %v768 = vunpack.c.h.b16 %v102
  %v769 = vunpack.c.l.b16 %v103
  %v770 = vunpack.c.h.b16 %v103
  %v771 = vunpack.c.l.b16 %v104
  %v772 = vunpack.c.h.b16 %v104
  %v773 = vunpack.c.l.b16 %v105
  %v774 = vunpack.c.h.b16 %v105
  %v775 = vunpack.c.l.b16 %v106
  %v776 = vunpack.c.h.b16 %v106
  %v777 = vunpack.c.l.b16 %v107
  %v778 = vunpack.c.h.b16 %v107
  %v779 = vunpack.c.l.b16 %v108
  %v780 = vunpack.c.h.b16 %v108
  %v781 = vunpack.c.l.b16 %v109
  %v782 = vunpack.c.h.b16 %v109
  %v783 = vunpack.c.l.b16 %v110
  %v784 = vunpack.c.h.b16 %v110
  %v785 = vunpack.c.l.b16 %v111
  %v786 = vunpack.c.h.b16 %v111
  %v787 = vunpack.c.l.b16 %v112
  %v788 = vunpack.c.h.b16 %v112
  %v789 = vunpack.c.l.b16 %v113
  %v790 = vunpack.c.h.b16 %v113
  %v791 = vunpack.c.l.b16 %v114
  %v792 = vunpack.c.h.b16 %v114
  %v793 = vunpack.c.l.b16 %v115
  %v794 = vunpack.c.h.b16 %v115
  %v795 = vunpack.c.l.b16 %v116
  %v796 = vunpack.c.h.b16 %v116
  %v797 = vunpack.c.l.b16 %v117
  %v798 = vunpack.c.h.b16 %v117
  %v799 = vunpack.c.l.b16 %v118
  %v800 = vunpack.c.h.b16 %v118
  %v801 = vunpack.c.l.b16 %v119
  %v802 = vunpack.c.h.b16 %v119
  %v803 = vunpack.c.l.b16 %v120
  %v804 = vunpack.c.h.b16 %v120
  %v805 = vunpack.c.l.b16 %v121
  %v806 = vunpack.c.h.b16 %v121
  %v807 = vunpack.c.l.b16 %v122
  %v808 = vunpack.c.h.b16 %v122
  %v809 = vunpack.c.l.b16 %v123
  %v810 = vunpack.c.h.b16 %v123
  %v811 = vunpack.c.l.b16 %v124
  %v812 = vunpack.c.h.b16 %v124
  %v813 = vunpack.c.l.b16 %v125
  %v814 = vunpack.c.h.b16 %v125
  %v815 = vunpack.c.l.b16 %v126
  %v816 = vunpack.c.h.b16 %v126
  %v817 = vunpack.c.l.b16 %v127
  %v818 = vunpack.c.h.b16 %v127
  %v819 = vunpack.c.l.b16 %v128
  %v820 = vunpack.c.h.b16 %v128
  %v821 = vunpack.c.l.b16 %v129
  %v822 = vunpack.c.h.b16 %v129
  %v823 = vunpack.c.l.b16 %v130
  %v824 = vunpack.c.h.b16 %v130
  %v825 = vunpack.c.l.b16 %v131
  %v826 = vunpack.c.h.b16 %v131
  %v827 = vunpack.c.l.b16 %v132
  %v828 = vunpack.c.h.b16 %v132
  %v829 = vunpack.c.l.b16 %v133
  %v830 = vunpack.c.h.b16 %v133
  %v831 = vunpack.c.l.b16 %v134
  %v832 = vunpack.c.h.b16 %v134
  %v833 = vunpack.c.l.b16 %v135
  %v834 = vunpack.c.h.b16 %v135
  %v835 = vunpack.c.l.b16 %v136
  %v836 = vunpack.c.h.b16 %v136
  %v837 = vunpack.c.l.b16 %v137
  %v838 = vunpack.c.h.b16 %v137
  %v839 = vunpack.c.l.b16 %v138
  %v840 = vunpack.c.h.b16 %v138
  %v841 = vunpack.c.l.b16 %v139
  %v842 = vunpack.c.h.b16 %v139
  %v843 = vunpack.c.l.b16 %v140
  %v844 = vunpack.c.h.b16 %v140
  %v845 = vunpack.c.l.b16 %v141
  %v846 = vunpack.c.h.b16 %v141
  %v847 = vunpack.c.l.b16 %v142
  %v848 = vunpack.c.h.b16 %v142
  %v849 = vunpack.c.l.b16 %v143
  %v850 = vunpack.c.h.b16 %v143
  %v851 = vunpack.c.l.b16 %v144
  %v852 = vunpack.c.h.b16 %v144
  %v853 = vunpack.c.l.b16 %v145
  %v854 = vunpack.c.h.b16 %v145
  %v855 = vunpack.c.l.b16 %v146
  %v856 = vunpack.c.h.b16 %v146
  %v857 = vunpack.c.l.b16 %v147
  %v858 = vunpack.c.h.b16 %v147
  %v859 = vunpack.c.l.b16 %v148
  %v860 = vunpack.c.h.b16 %v148
  %v861 = vunpack.c.l.b16 %v149
  %v862 = vunpack.c.h.b16 %v149
  %v863 = vunpack.c.l.b16 %v150
  %v864 = vunpack.c.h.b16 %v150
  %v865 = vunpack.c.l.b16 %v151
  %v866 = vunpack.c.h.b16 %v151
  %v867 = vunpack.c.l.b16 %v152
  %v868 = vunpack.c.h.b16 %v152
  %v869 = vunpack.c.l.b16 %v153
  %v870 = vunpack.c.h.b16 %v153
  %v871 = vunpack.c.l.b16 %v154
  %v872 = vunpack.c.h.b16 %v154
  %v873 = vunpack.c.l.b16 %v155
  %v874 = vunpack.c.h.b16 %v155
  %v875 = vunpack.c.l.b16 %v156
  %v876 = vunpack.c.h.b16 %v156
  %v877 = vunpack.c.l.b16 %v157
  %v878 = vunpack.c.h.b16 %v157
  %v879 = vunpack.c.l.b16 %v158
  %v880 = vunpack.c.h.b16 %v158
  %v881 = vunpack.c.l.b16 %v159
  %v882 = vunpack.c.h.b16 %v159
  %v883 = vunpack.c.l.b16 %v160
  %v884 = vunpack.c.h.b16 %v160
  %v885 = vunpack.c.l.b16 %v161
  %v886 = vunpack.c.h.b16 %v161
  %v887 = vunpack.c.l.b16 %v162
  %v888 = vunpack.c.h.b16 %v162
  %v889 = vunpack.c.l.b16 %v163
  %v890 = vunpack.c.h.b16 %v163
  %v891 = vunpack.c.l.b16 %v164
  %v892 = vunpack.c.h.b16 %v164
  %v893 = vunpack.c.l.b16 %v165
  %v894 = vunpack.c.h.b16 %v165
  %v895 = vunpack.c.l.b16 %v166
  %v896 = vunpack.c.h.b16 %v166
  %v897 = vunpack.c.l.b16 %v167
  %v898 = vunpack.c.h.b16 %v167
  %v899 = vunpack.c.l.b16 %v168
  %v900 = vunpack.c.h.b16 %v168
  %v901 = vunpack.c.l.b16 %v169
  %v902 = vunpack.c.h.b16 %v169
  %v903 = vunpack.c.l.b16 %v170
  %v904 = vunpack.c.h.b16 %v170
  %v905 = vunpack.c.l.b16 %v171
  %v906 = vunpack.c.h.b16 %v171
  %v907 = vunpack.c.l.b16 %v172
  %v908 = vunpack.c.h.b16 %v172
  %v909 = vunpack.c.l.b16 %v173
  %v910 = vunpack.c.h.b16 %v173
  %v911 = vunpack.c.l.b16 %v174
  %v912 = vunpack.c.h.b16 %v174
  %v913 = vunpack.c.l.b16 %v175
  %v914 = vunpack.c.h.b16 %v175
  %v915 = vunpack.c.l.b16 %v176
  %v916 = vunpack.c.h.b16 %v176
  %v917 = vunpack.c.l.b16 %v177
  %v918 = vunpack.c.h.b16 %v177
  %v919 = vunpack.c.l.b16 %v178
  %v920 = vunpack.c.h.b16 %v178
  %v921 = vunpack.c.l.b16 %v179
  %v922 = vunpack.c.h.b16 %v179
  %v923 = vunpack.c.l.b16 %v180
  %v924 = vunpack.c.h.b16 %v180
  %v925 = vunpack.c.l.b16 %v181
  %v926 = vunpack.c.h.b16 %v181
  %v927 = vunpack.c.l.b16 %v182
  %v928 = vunpack.c.h.b16 %v182
  %v929 = vunpack.c.l.b16 %v183
  %v930 = vunpack.c.h.b16 %v183
  %v931 = vunpack.c.l.b16 %v184
  %v932 = vunpack.c.h.b16 %v184
  %v933 = vunpack.c.l.b16 %v185
  %v934 = vunpack.c.h.b16 %v185
  %v935 = vunpack.c.l.b16 %v186
  %v936 = vunpack.c.h.b16 %v186
  %v937 = vunpack.c.l.b16 %v187
  %v938 = vunpack.c.h.b16 %v187
  %v939 = vunpack.c.l.b16 %v188
  %v940 = vunpack.c.h.b16 %v188
  %v941 = vunpack.c.l.b16 %v189
  %v942 = vunpack.c.h.b16 %v189
  %v943 = vunpack.c.l.b16 %v190
  %v944 = vunpack.c.h.b16 %v190
  %v945 = vunpack.c.l.b16 %v191
  %v946 = vunpack.c.h.b16 %v191
  %v947 = vunpack.c.l.b16 %v192
  %v948 = vunpack.c.h.b16 %v192
  %v949 = vunpack.c.l.b16 %v193
  %v950 = vunpack.c.h.b16 %v193
  %v951 = vunpack.c.l.b16 %v194
  %v952 = vunpack.c.h.b16 %v194
  %v953 = vunpack.c.l.b16 %v195
  %v954 = vunpack.c.h.b16 %v195
  %v955 = vunpack.c.l.b16 %v196
  %v956 = vunpack.c.h.b16 %v196
  %v957 = vunpack.c.l.b16 %v197
  %v958 = vunpack.c.h.b16 %v197
  %v959 = vunpack.c.l.b16 %v198
  %v960 = vunpack.c.h.b16 %v198
  %v961 = vunpack.c.l.b16 %v199
  %v962 = vunpack.c.h.b16 %v199
  %v963 = vunpack.c.l.b16 %v200
  %v964 = vunpack.c.h.b16 %v200
  %v965 = vunpack.c.l.b16 %v201
  %v966 = vunpack.c.h.b16 %v201
  %v967 = vunpack.c.l.b16 %v202
  %v968 = vunpack.c.h.b16 %v202
  %v969 = vunpack.c.l.b16 %v203
  %v970 = vunpack.c.h.b16 %v203
  %v971 = vunpack.c.l.b16 %v204
  %v972 = vunpack.c.h.b16 %v204
  %v973 = vunpack.c.l.b16 %v205
  %v974 = vunpack.c.h.b16 %v205
  %v975 = vunpack.c.l.b16 %v206
  %v976 = vunpack.c.h.b16 %v206
  %v977 = vunpack.c.l.b16 %v207
  %v978 = vunpack.c.h.b16 %v207
  %v979 = vunpack.c.l.b16 %v208
  %v980 = vunpack.c.h.b16 %v208
  %v981 = vunpack.c.l.b16 %v209
  %v982 = vunpack.c.h.b16 %v209
  %v983 = vunpack.c.l.b16 %v210
  %v984 = vunpack.c.h.b16 %v210
  %v985 = vunpack.c.l.b16 %v211
  %v986 = vunpack.c.h.b16 %v211
  %v987 = vunpack.c.l.b16 %v212
  %v988 = vunpack.c.h.b16 %v212
  %v989 = vunpack.c.l.b16 %v213
  %v990 = vunpack.c.h.b16 %v213
  %v991 = vunpack.c.l.b16 %v214
  %v992 = vunpack.c.h.b16 %v214
  %v993 = vunpack.c.l.b16 %v215
  %v994 = vunpack.c.h.b16 %v215
  %v995 = vunpack.c.l.b16 %v216
  %v996 = vunpack.c.h.b16 %v216
  %v997 = vunpack.c.l.b16 %v217
  %v998 = vunpack.c.h.b16 %v217
  %v999 = vunpack.c.l.b16 %v218
  %v1000 = vunpack.c.h.b16 %v218
  %v1001 = vunpack.c.l.b16 %v219
  %v1002 = vunpack.c.h.b16 %v219
  %v1003 = vunpack.c.l.b16 %v220
  %v1004 = vunpack.c.h.b16 %v220
  %v1005 = vunpack.c.l.b16 %v221
  %v1006 = vunpack.c.h.b16 %v221
  %v1007 = vunpack.c.l.b16 %v222
  %v1008 = vunpack.c.h.b16 %v222
  %v1009 = vunpack.c.l.b16 %v223
  %v1010 = vunpack.c.h.b16 %v223
  %v1011 = vunpack.c.l.b16 %v224
  %v1012 = vunpack.c.h.b16 %v224
  %v1013 = vunpack.c.l.b16 %v225
  %v1014 = vunpack.c.h.b16 %v225
  %v1015 = vunpack.c.l.b16 %v226
  %v1016 = vunpack.c.h.b16 %v226
  %v1017 = vunpack.c.l.b16 %v227
  %v1018 = vunpack.c.h.b16 %v227
  %v1019 = vunpack.c.l.b16 %v228
  %v1020 = vunpack.c.h.b16 %v228
  %v1021 = vunpack.c.l.b16 %v229
  %v1022 = vunpack.c.h.b16 %v229
  %v1023 = vunpack.c.l.b16 %v230
  %v1024 = vunpack.c.h.b16 %v230
  %v1025 = vunpack.c.l.b16 %v231
  %v1026 = vunpack.c.h.b16 %v231
  %v1027 = vunpack.c.l.b16 %v232
  %v1028 = vunpack.c.h.b16 %v232
  %v1029 = vunpack.c.l.b16 %v233
  %v1030 = vunpack.c.h.b16 %v233
  %v1031 = vunpack.c.l.b16 %v234
  %v1032 = vunpack.c.h.b16 %v234
  %v1033 = vunpack.c.l.b16 %v235
  %v1034 = vunpack.c.h.b16 %v235
  %v1035 = vunpack.c.l.b16 %v236
  %v1036 = vunpack.c.h.b16 %v236
  %v1037 = vunpack.c.l.b16 %v237
  %v1038 = vunpack.c.h.b16 %v237
  %v1039 = vunpack.c.l.b16 %v238
  %v1040 = vunpack.c.h.b16 %v238
  %v1041 = vunpack.c.l.b16 %v239
  %v1042 = vunpack.c.h.b16 %v239
  %v1043 = vunpack.c.l.b16 %v240
  %v1044 = vunpack.c.h.b16 %v240
  %v1045 = vunpack.c.l.b16 %v241
  %v1046 = vunpack.c.h.b16 %v241
  %v1047 = vunpack.c.l.b16 %v242
  %v1048 = vunpack.c.h.b16 %v242
  %v1049 = vunpack.c.l.b16 %v243
  %v1050 = vunpack.c.h.b16 %v243
  %v1051 = vunpack.c.l.b16 %v244
  %v1052 = vunpack.c.h.b16 %v244
  %v1053 = vunpack.c.l.b16 %v245
  %v1054 = vunpack.c.h.b16 %v245
  %v1055 = vunpack.c.l.b16 %v246
  %v1056 = vunpack.c.h.b16 %v246
  %v1057 = vunpack.c.l.b16 %v247
  %v1058 = vunpack.c.h.b16 %v247
  %v1059 = vunpack.c.l.b16 %v248
  %v1060 = vunpack.c.h.b16 %v248
  %v1061 = vunpack.c.l.b16 %v249
  %v1062 = vunpack.c.h.b16 %v249
  %v1063 = vunpack.c.l.b16 %v250
  %v1064 = vunpack.c.h.b16 %v250
  %v1065 = vunpack.c.l.b16 %v251
  %v1066 = vunpack.c.h.b16 %v251
  %v1067 = vunpack.c.l.b16 %v252
  %v1068 = vunpack.c.h.b16 %v252
  %v1069 = vunpack.c.l.b16 %v253
  %v1070 = vunpack.c.h.b16 %v253
  %v1071 = vunpack.c.l.b16 %v254
  %v1072 = vunpack.c.h.b16 %v254
  %v1073 = vunpack.c.l.b16 %v255
  %v1074 = vunpack.c.h.b16 %v255
  %v1075 = vunpack.c.l.b16 %v256
  %v1076 = vunpack.c.h.b16 %v256
  %v1077 = vunpack.c.l.b16 %v257
  %v1078 = vunpack.c.h.b16 %v257
  %v1079 = vunpack.c.l.b16 %v258
  %v1080 = vunpack.c.h.b16 %v258
  %v1081 = vunpack.c.l.b16 %v259
  %v1082 = vunpack.c.h.b16 %v259
  %v1083 = vunpack.c.l.b16 %v260
  %v1084 = vunpack.c.h.b16 %v260
  %v1085 = vunpack.c.l.b16 %v261
  %v1086 = vunpack.c.h.b16 %v261
  %v1087 = vunpack.c.l.b16 %v262
  %v1088 = vunpack.c.h.b16 %v262
  %v1089 = vunpack.c.l.b16 %v263
  %v1090 = vunpack.c.h.b16 %v263
  %v1091 = vunpack.c.l.b16 %v264
  %v1092 = vunpack.c.h.b16 %v264
  %v1093 = vunpack.c.l.b16 %v265
  %v1094 = vunpack.c.h.b16 %v265
  %v1095 = vunpack.c.l.b16 %v266
  %v1096 = vunpack.c.h.b16 %v266
  %v1097 = vunpack.c.l.b16 %v267
  %v1098 = vunpack.c.h.b16 %v267
  %v1099 = vunpack.c.l.b16 %v268
  %v1100 = vunpack.c.h.b16 %v268
  %v1101 = vunpack.c.l.b16 %v269
  %v1102 = vunpack.c.h.b16 %v269
  %v1103 = vunpack.c.l.b16 %v270
  %v1104 = vunpack.c.h.b16 %v270
  %v1105 = vunpack.c.l.b16 %v271
  %v1106 = vunpack.c.h.b16 %v271
  %v1107 = vunpack.c.l.b16 %v272
  %v1108 = vunpack.c.h.b16 %v272
  %v1109 = vunpack.c.l.b16 %v273
  %v1110 = vunpack.c.h.b16 %v273
  %v1111 = vunpack.c.l.b16 %v274
  %v1112 = vunpack.c.h.b16 %v274
  %v1113 = vunpack.c.l.b16 %v275
  %v1114 = vunpack.c.h.b16 %v275
  %v1115 = vunpack.c.l.b16 %v276
  %v1116 = vunpack.c.h.b16 %v276
  %v1117 = vunpack.c.l.b16 %v277
  %v1118 = vunpack.c.h.b16 %v277
  %v1119 = vunpack.c.l.b16 %v278
  %v1120 = vunpack.c.h.b16 %v278
  %v1121 = vunpack.c.l.b16 %v279
  %v1122 = vunpack.c.h.b16 %v279
  %v1123 = vunpack.c.l.b16 %v280
  %v1124 = vunpack.c.h.b16 %v280
  %v1125 = vunpack.c.l.b16 %v281
  %v1126 = vunpack.c.h.b16 %v281
  %v1127 = vunpack.c.l.b16 %v282
  %v1128 = vunpack.c.h.b16 %v282
  %v1129 = vunpack.c.l.b16 %v283
  %v1130 = vunpack.c.h.b16 %v283
  %v1131 = vunpack.c.l.b16 %v284
  %v1132 = vunpack.c.h.b16 %v284
  %v1133 = vpack.c.b16 %v623, %v621
  %v1134 = vpack.c.b16 %v624, %v622
  %v1135 = vpack.c.b16 %v627, %v625
  %v1136 = vpack.c.b16 %v628, %v626
  %v1137 = vpack.c.b16 %v631, %v629
  %v1138 = vpack.c.b16 %v632, %v630
  %v1139 = vpack.c.b16 %v635, %v633
  %v1140 = vpack.c.b16 %v636, %v634
  %v1141 = vpack.c.b16 %v639, %v637
  %v1142 = vpack.c.b16 %v640, %v638
  %v1143 = vpack.c.b16 %v643, %v641
  %v1144 = vpack.c.b16 %v644, %v642
  %v1145 = vpack.c.b16 %v647, %v645
  %v1146 = vpack.c.b16 %v648, %v646
  %v1147 = vpack.c.b16 %v651, %v649
  %v1148 = vpack.c.b16 %v652, %v650
  %v1149 = vpack.c.b16 %v655, %v653
  %v1150 = vpack.c.b16 %v656, %v654
  %v1151 = vpack.c.b16 %v659, %v657
  %v1152 = vpack.c.b16 %v660, %v658
  %v1153 = vpack.c.b16 %v663, %v661
  %v1154 = vpack.c.b16 %v664, %v662
  %v1155 = vpack.c.b16 %v667, %v665
  %v1156 = vpack.c.b16 %v668, %v666
  %v1157 = vpack.c.b16 %v671, %v669
  %v1158 = vpack.c.b16 %v672, %v670
  %v1159 = vpack.c.b16 %v675, %v673
  %v1160 = vpack.c.b16 %v676, %v674
  %v1161 = vpack.c.b16 %v679, %v677
  %v1162 = vpack.c.b16 %v680, %v678
  %v1163 = vpack.c.b16 %v683, %v681
  %v1164 = vpack.c.b16 %v684, %v682
  %v1165 = vpack.c.b16 %v687, %v685
  %v1166 = vpack.c.b16 %v688, %v686
  %v1167 = vpack.c.b16 %v691, %v689
  %v1168 = vpack.c.b16 %v692, %v690
  %v1169 = vpack.c.b16 %v695, %v693
  %v1170 = vpack.c.b16 %v696, %v694
  %v1171 = vpack.c.b16 %v699, %v697
  %v1172 = vpack.c.b16 %v700, %v698
  %v1173 = vpack.c.b16 %v703, %v701
  %v1174 = vpack.c.b16 %v704, %v702
  %v1175 = vpack.c.b16 %v707, %v705
  %v1176 = vpack.c.b16 %v708, %v706
  %v1177 = vpack.c.b16 %v711, %v709
  %v1178 = vpack.c.b16 %v712, %v710
  %v1179 = vpack.c.b16 %v715, %v713
  %v1180 = vpack.c.b16 %v716, %v714
  %v1181 = vpack.c.b16 %v719, %v717
  %v1182 = vpack.c.b16 %v720, %v718
  %v1183 = vpack.c.b16 %v723, %v721
  %v1184 = vpack.c.b16 %v724, %v722
  %v1185 = vpack.c.b16 %v727, %v725
  %v1186 = vpack.c.b16 %v728, %v726
  %v1187 = vpack.c.b16 %v731, %v729
  %v1188 = vpack.c.b16 %v732, %v730
  %v1189 = vpack.c.b16 %v735, %v733
  %v1190 = vpack.c.b16 %v736, %v734
  %v1191 = vpack.c.b16 %v739, %v737
  %v1192 = vpack.c.b16 %v740, %v738
  %v1193 = vpack.c.b16 %v743, %v741
  %v1194 = vpack.c.b16 %v744, %v742
  %v1195 = vpack.c.b16 %v747, %v745
  %v1196 = vpack.c.b16 %v748, %v746
  %v1197 = vpack.c.b16 %v751, %v749
  %v1198 = vpack.c.b16 %v752, %v750
  %v1199 = vpack.c.b16 %v755, %v753
  %v1200 = vpack.c.b16 %v756, %v754
  %v1201 = vpack.c.b16 %v759, %v757
  %v1202 = vpack.c.b16 %v760, %v758
  %v1203 = vpack.c.b16 %v763, %v761
  %v1204 = vpack.c.b16 %v764, %v762
  %v1205 = vpack.c.b16 %v767, %v765
  %v1206 = vpack.c.b16 %v768, %v766
  %v1207 = vpack.c.b16 %v771, %v769
  %v1208 = vpack.c.b16 %v772, %v770
  %v1209 = vpack.c.b16 %v775, %v773
  %v1210 = vpack.c.b16 %v776, %v774
  %v1211 = vpack.c.b16 %v779, %v777
  %v1212 = vpack.c.b16 %v780, %v778
  %v1213 = vpack.c.b16 %v783, %v781
  %v1214 = vpack.c.b16 %v784, %v782
  %v1215 = vpack.c.b16 %v787, %v785
  %v1216 = vpack.c.b16 %v788, %v786
  %v1217 = vpack.c.b16 %v791, %v789
  %v1218 = vpack.c.b16 %v792, %v790
  %v1219 = vpack.c.b16 %v795, %v793
  %v1220 = vpack.c.b16 %v796, %v794
  %v1221 = vpack.c.b16 %v799, %v797
  %v1222 = vpack.c.b16 %v800, %v798
  %v1223 = vpack.c.b16 %v803, %v801
  %v1224 = vpack.c.b16 %v804, %v802
  %v1225 = vpack.c.b16 %v807, %v805
  %v1226 = vpack.c.b16 %v808, %v806
  %v1227 = vpack.c.b16 %v811, %v809
  %v1228 = vpack.c.b16 %v812, %v810
  %v1229 = vpack.c.b16 %v815, %v813
  %v1230 = vpack.c.b16 %v816, %v814
  %v1231 = vpack.c.b16 %v819, %v817
  %v1232 = vpack.c.b16 %v820, %v818
  %v1233 = vpack.c.b16 %v823, %v821
  %v1234 = vpack.c.b16 %v824, %v822
  %v1235 = vpack.c.b16 %v827, %v825
  %v1236 = vpack.c.b16 %v828, %v826
  %v1237 = vpack.c.b16 %v831, %v829
  %v1238 = vpack.c.b16 %v832, %v830
  %v1239 = vpack.c.b16 %v835, %v833
  %v1240 = vpack.c.b16 %v836, %v834
  %v1241 = vpack.c.b16 %v839, %v837
  %v1242 = vpack.c.b16 %v840, %v838
  %v1243 = vpack.c.b16 %v843, %v841
  %v1244 = vpack.c.b16 %v844, %v842
  %v1245 = vpack.c.b16 %v847, %v845
  %v1246 = vpack.c.b16 %v848, %v846
  %v1247 = vpack.c.b16 %v851, %v849
  %v1248 = vpack.c.b16 %v852, %v850
  %v1249 = vpack.c.b16 %v855, %v853
  %v1250 = vpack.c.b16 %v856, %v854
  %v1251 = vpack.c.b16 %v859, %v857
  %v1252 = vpack.c.b16 %v860, %v858
  %v1253 = vpack.c.b16 %v863, %v861
  %v1254 = vpack.c.b16 %v864, %v862
  %v1255 = vpack.c.b16 %v867, %v865
  %v1256 = vpack.c.b16 %v868, %v866
  %v1257 = vpack.c.b16 %v871, %v869
  %v1258 = vpack.c.b16 %v872, %v870
  %v1259 = vpack.c.b16 %v875, %v873
  %v1260 = vpack.c.b16 %v876, %v874
  %v1261 = vpack.c.b16 %v879, %v877
  %v1262 = vpack.c.b16 %v880, %v878
  %v1263 = vpack.c.b16 %v883, %v881
  %v1264 = vpack.c.b16 %v884, %v882
  %v1265 = vpack.c.b16 %v887, %v885
  %v1266 = vpack.c.b16 %v888, %v886
  %v1267 = vpack.c.b16 %v891, %v889
  %v1268 = vpack.c.b16 %v892, %v890
  %v1269 = vpack.c.b16 %v895, %v893
  %v1270 = vpack.c.b16 %v896, %v894
  %v1271 = vpack.c.b16 %v899, %v897
  %v1272 = vpack.c.b16 %v900, %v898
  %v1273 = vpack.c.b16 %v903, %v901
  %v1274 = vpack.c.b16 %v904, %v902
  %v1275 = vpack.c.b16 %v907, %v905
  %v1276 = vpack.c.b16 %v908, %v906
  %v1277 = vpack.c.b16 %v911, %v909
  %v1278 = vpack.c.b16 %v912, %v910
  %v1279 = vpack.c.b16 %v915, %v913
  %v1280 = vpack.c.b16 %v916, %v914
  %v1281 = vpack.c.b16 %v919, %v917
  %v1282 = vpack.c.b16 %v920, %v918
  %v1283 = vpack.c.b16 %v923, %v921
  %v1284 = vpack.c.b16 %v924, %v922
  %v1285 = vpack.c.b16 %v927, %v925
  %v1286 = vpack.c.b16 %v928, %v926
  %v1287 = vpack.c.b16 %v931, %v929
  %v1288 = vpack.c.b16 %v932, %v930
  %v1289 = vpack.c.b16 %v935, %v933
  %v1290 = vpack.c.b16 %v936, %v934
  %v1291 = vpack.c.b16 %v939, %v937
  %v1292 = vpack.c.b16 %v940, %v938
  %v1293 = vpack.c.b16 %v943, %v941
  %v1294 = vpack.c.b16 %v944, %v942
  %v1295 = vpack.c.b16 %v947, %v945
  %v1296 = vpack.c.b16 %v948, %v946
  %v1297 = vpack.c.b16 %v951, %v949
  %v1298 = vpack.c.b16 %v952, %v950
  %v1299 = vpack.c.b16 %v955, %v953
  %v1300 = vpack.c.b16 %v956, %v954
  %v1301 = vpack.c.b16 %v959, %v957
  %v1302 = vpack.c.b16 %v960, %v958
  %v1303 = vpack.c.b16 %v963, %v961
  %v1304 = vpack.c.b16 %v964, %v962
  %v1305 = vpack.c.b16 %v967, %v965
  %v1306 = vpack.c.b16 %v968, %v966
  %v1307 = vpack.c.b16 %v971, %v969
  %v1308 = vpack.c.b16 %v972, %v970
  %v1309 = vpack.c.b16 %v975, %v973
  %v1310 = vpack.c.b16 %v976, %v974
  %v1311 = vpack.c.b16 %v979, %v977
  %v1312 = vpack.c.b16 %v980, %v978
  %v1313 = vpack.c.b16 %v983, %v981
  %v1314 = vpack.c.b16 %v984, %v982
  %v1315 = vpack.c.b16 %v987, %v985
  %v1316 = vpack.c.b16 %v988, %v986
  %v1317 = vpack.c.b16 %v991, %v989
  %v1318 = vpack.c.b16 %v992, %v990
  %v1319 = vpack.c.b16 %v995, %v993
  %v1320 = vpack.c.b16 %v996, %v994
  %v1321 = vpack.c.b16 %v999, %v997
  %v1322 = vpack.c.b16 %v1000, %v998
  %v1323 = vpack.c.b16 %v1003, %v1001
  %v1324 = vpack.c.b16 %v1004, %v1002
  %v1325 = vpack.c.b16 %v1007, %v1005
  %v1326 = vpack.c.b16 %v1008, %v1006
  %v1327 = vpack.c.b16 %v1011, %v1009
  %v1328 = vpack.c.b16 %v1012, %v1010
  %v1329 = vpack.c.b16 %v1015, %v1013
  %v1330 = vpack.c.b16 %v1016, %v1014
  %v1331 = vpack.c.b16 %v1019, %v1017
  %v1332 = vpack.c.b16 %v1020, %v1018
  %v1333 = vpack.c.b16 %v1023, %v1021
  %v1334 = vpack.c.b16 %v1024, %v1022
  %v1335 = vpack.c.b16 %v1027, %v1025
  %v1336 = vpack.c.b16 %v1028, %v1026
  %v1337 = vpack.c.b16 %v1031, %v1029
  %v1338 = vpack.c.b16 %v1032, %v1030
  %v1339 = vpack.c.b16 %v1035, %v1033
  %v1340 = vpack.c.b16 %v1036, %v1034
  %v1341 = vpack.c.b16 %v1039, %v1037
  %v1342 = vpack.c.b16 %v1040, %v1038
  %v1343 = vpack.c.b16 %v1043, %v1041
  %v1344 = vpack.c.b16 %v1044, %v1042
  %v1345 = vpack.c.b16 %v1047, %v1045
  %v1346 = vpack.c.b16 %v1048, %v1046
  %v1347 = vpack.c.b16 %v1051, %v1049
  %v1348 = vpack.c.b16 %v1052, %v1050
  %v1349 = vpack.c.b16 %v1055, %v1053
  %v1350 = vpack.c.b16 %v1056, %v1054
  %v1351 = vpack.c.b16 %v1059, %v1057
  %v1352 = vpack.c.b16 %v1060, %v1058
  %v1353 = vpack.c.b16 %v1063, %v1061
  %v1354 = vpack.c.b16 %v1064, %v1062
  %v1355 = vpack.c.b16 %v1067, %v1065
  %v1356 = vpack.c.b16 %v1068, %v1066
  %v1357 = vpack.c.b16 %v1071, %v1069
  %v1358 = vpack.c.b16 %v1072, %v1070
  %v1359 = vpack.c.b16 %v1075, %v1073
  %v1360 = vpack.c.b16 %v1076, %v1074
  %v1361 = vpack.c.b16 %v1079, %v1077
  %v1362 = vpack.c.b16 %v1080, %v1078
  %v1363 = vpack.c.b16 %v1083, %v1081
  %v1364 = vpack.c.b16 %v1084, %v1082
  %v1365 = vpack.c.b16 %v1087, %v1085
  %v1366 = vpack.c.b16 %v1088, %v1086
  %v1367 = vpack.c.b16 %v1091, %v1089
  %v1368 = vpack.c.b16 %v1092, %v1090
  %v1369 = vpack.c.b16 %v1095, %v1093
  %v1370 = vpack.c.b16 %v1096, %v1094
  %v1371 = vpack.c.b16 %v1099, %v1097
  %v1372 = vpack.c.b16 %v1100, %v1098
  %v1373 = vpack.c.b16 %v1103, %v1101
  %v1374 = vpack.c.b16 %v1104, %v1102
  %v1375 = vpack.c.b16 %v1107, %v1105
  %v1376 = vpack.c.b16 %v1108, %v1106
  %v1377 = vpack.c.b16 %v1111, %v1109
  %v1378 = vpack.c.b16 %v1112, %v1110
  %v1379 = vpack.c.b16 %v1115, %v1113
  %v1380 = vpack.c.b16 %v1116, %v1114
  %v1381 = vpack.c.b16 %v1119, %v1117
  %v1382 = vpack.c.b16 %v1120, %v1118
  %v1383 = vpack.c.b16 %v1123, %v1121
  %v1384 = vpack.c.b16 %v1124, %v1122
  %v1385 = vpack.c.b16 %v1127, %v1125
  %v1386 = vpack.c.b16 %v1128, %v1126
  %v1387 = vpack.c.b16 %v1131, %v1129
  %v1388 = vpack.c.b16 %v1132, %v1130
  %1645 = vmatprep.subr.bf16.mxu0 %v1134
  %1646 = vmatpush1.bf16.msra.mxu0 %v1133
  %1647 = vmatprep.subr.bf16.mxu0 %v1136
  %1648 = vmatpush1.bf16.msra.mxu0 %v1135
  %1649 = vmatprep.subr.bf16.mxu0 %v1138
  %1650 = vmatpush1.bf16.msra.mxu0 %v1137
  %1651 = vmatprep.subr.bf16.mxu0 %v1140
  %1652 = vmatpush1.bf16.msra.mxu0 %v1139
  %1653 = vmatprep.subr.bf16.mxu0 %v1142
  %1654 = vmatpush1.bf16.msra.mxu0 %v1141
  %1655 = vmatprep.subr.bf16.mxu0 %v1144
  %1656 = vmatpush1.bf16.msra.mxu0 %v1143
  %1657 = vmatprep.subr.bf16.mxu0 %v1146
  %1658 = vmatpush1.bf16.msra.mxu0 %v1145
  %1659 = vmatprep.subr.bf16.mxu0 %v1148
  %1660 = vmatpush1.bf16.msra.mxu0 %v1147
  %1661 = vmatprep.subr.bf16.mxu0 %v1150
  %1662 = vmatpush1.bf16.msra.mxu0 %v1149
  %1663 = vmatprep.subr.bf16.mxu0 %v1152
  %1664 = vmatpush1.bf16.msra.mxu0 %v1151
  %1665 = vmatprep.subr.bf16.mxu0 %v1154
  %1666 = vmatpush1.bf16.msra.mxu0 %v1153
  %1667 = vmatprep.subr.bf16.mxu0 %v1156
  %1668 = vmatpush1.bf16.msra.mxu0 %v1155
  %1669 = vmatprep.subr.bf16.mxu0 %v1158
  %1670 = vmatpush1.bf16.msra.mxu0 %v1157
  %1671 = vmatprep.subr.bf16.mxu0 %v1160
  %1672 = vmatpush1.bf16.msra.mxu0 %v1159
  %1673 = vmatprep.subr.bf16.mxu0 %v1162
  %1674 = vmatpush1.bf16.msra.mxu0 %v1161
  %1675 = vmatprep.subr.bf16.mxu0 %v1164
  %1676 = vmatpush1.bf16.msra.mxu0 %v1163
  %1677 = vmatprep.mubr.bf16.mxu0 %v334
  %1678 = vmatmul.mubr.bf16.gmra.mrb[0].mxu0 %v333
  %v1679 = vpop.f32.mrb[0].mxu0
  %v1680 = vadd.f32 0.0, %v1679
  %v1681 = vpop.f32.mrb[0].mxu0
  %v1682 = vadd.f32 0.0, %v1681
  %v1683 = vpop.f32.mrb[0].mxu0
  %v1684 = vadd.f32 0.0, %v1683
  %v1685 = vpop.f32.mrb[0].mxu0
  %v1686 = vadd.f32 0.0, %v1685
  %1687 = vdwg.mxu0
  %1688 = vmatprep.subr.bf16.mxu0 %v1166
  %1689 = vmatpush1.bf16.msra.mxu0 %v1165
  %1690 = vmatprep.subr.bf16.mxu0 %v1168
  %1691 = vmatpush1.bf16.msra.mxu0 %v1167
  %1692 = vmatprep.subr.bf16.mxu0 %v1170
  %1693 = vmatpush1.bf16.msra.mxu0 %v1169
  %1694 = vmatprep.subr.bf16.mxu0 %v1172
  %1695 = vmatpush1.bf16.msra.mxu0 %v1171
  %1696 = vmatprep.subr.bf16.mxu0 %v1174
  %1697 = vmatpush1.bf16.msra.mxu0 %v1173
  %1698 = vmatprep.subr.bf16.mxu0 %v1176
  %1699 = vmatpush1.bf16.msra.mxu0 %v1175
  %1700 = vmatprep.subr.bf16.mxu0 %v1178
  %1701 = vmatpush1.bf16.msra.mxu0 %v1177
  %1702 = vmatprep.subr.bf16.mxu0 %v1180
  %1703 = vmatpush1.bf16.msra.mxu0 %v1179
  %1704 = vmatprep.subr.bf16.mxu0 %v1182
  %1705 = vmatpush1.bf16.msra.mxu0 %v1181
  %1706 = vmatprep.subr.bf16.mxu0 %v1184
  %1707 = vmatpush1.bf16.msra.mxu0 %v1183
  %1708 = vmatprep.subr.bf16.mxu0 %v1186
  %1709 = vmatpush1.bf16.msra.mxu0 %v1185
  %1710 = vmatprep.subr.bf16.mxu0 %v1188
  %1711 = vmatpush1.bf16.msra.mxu0 %v1187
  %1712 = vmatprep.subr.bf16.mxu0 %v1190
  %1713 = vmatpush1.bf16.msra.mxu0 %v1189
  %1714 = vmatprep.subr.bf16.mxu0 %v1192
  %1715 = vmatpush1.bf16.msra.mxu0 %v1191
  %1716 = vmatprep.subr.bf16.mxu0 %v1194
  %1717 = vmatpush1.bf16.msra.mxu0 %v1193
  %1718 = vmatprep.subr.bf16.mxu0 %v1196
  %1719 = vmatpush1.bf16.msra.mxu0 %v1195
  %1720 = vmatprep.mubr.bf16.mxu0 %v336
  %1721 = vmatmul.mubr.bf16.gmra.mrb[0].mxu0 %v335
  %v1722 = vpop.f32.mrb[0].mxu0
  %v1723 = vadd.f32 %v1680, %v1722
  %v1724 = vpop.f32.mrb[0].mxu0
  %v1725 = vadd.f32 %v1682, %v1724
  %v1726 = vpop.f32.mrb[0].mxu0
  %v1727 = vadd.f32 %v1684, %v1726
  %v1728 = vpop.f32.mrb[0].mxu0
  %v1729 = vadd.f32 %v1686, %v1728
  %1730 = vdwg.mxu0
  %1731 = vmatprep.subr.bf16.mxu0 %v1198
  %1732 = vmatpush1.bf16.msra.mxu0 %v1197
  %1733 = vmatprep.subr.bf16.mxu0 %v1200
  %1734 = vmatpush1.bf16.msra.mxu0 %v1199
  %1735 = vmatprep.subr.bf16.mxu0 %v1202
  %1736 = vmatpush1.bf16.msra.mxu0 %v1201
  %1737 = vmatprep.subr.bf16.mxu0 %v1204
  %1738 = vmatpush1.bf16.msra.mxu0 %v1203
  %1739 = vmatprep.subr.bf16.mxu0 %v1206
  %1740 = vmatpush1.bf16.msra.mxu0 %v1205
  %1741 = vmatprep.subr.bf16.mxu0 %v1208
  %1742 = vmatpush1.bf16.msra.mxu0 %v1207
  %1743 = vmatprep.subr.bf16.mxu0 %v1210
  %1744 = vmatpush1.bf16.msra.mxu0 %v1209
  %1745 = vmatprep.subr.bf16.mxu0 %v1212
  %1746 = vmatpush1.bf16.msra.mxu0 %v1211
  %1747 = vmatprep.subr.bf16.mxu0 %v1214
  %1748 = vmatpush1.bf16.msra.mxu0 %v1213
  %1749 = vmatprep.subr.bf16.mxu0 %v1216
  %1750 = vmatpush1.bf16.msra.mxu0 %v1215
  %1751 = vmatprep.subr.bf16.mxu0 %v1218
  %1752 = vmatpush1.bf16.msra.mxu0 %v1217
  %1753 = vmatprep.subr.bf16.mxu0 %v1220
  %1754 = vmatpush1.bf16.msra.mxu0 %v1219
  %1755 = vmatprep.subr.bf16.mxu0 %v1222
  %1756 = vmatpush1.bf16.msra.mxu0 %v1221
  %1757 = vmatprep.subr.bf16.mxu0 %v1224
  %1758 = vmatpush1.bf16.msra.mxu0 %v1223
  %1759 = vmatprep.subr.bf16.mxu0 %v1226
  %1760 = vmatpush1.bf16.msra.mxu0 %v1225
  %1761 = vmatprep.subr.bf16.mxu0 %v1228
  %1762 = vmatpush1.bf16.msra.mxu0 %v1227
  %1763 = vmatprep.mubr.bf16.mxu0 %v338
  %1764 = vmatmul.mubr.bf16.gmra.mrb[0].mxu0 %v337
  %v1765 = vpop.f32.mrb[0].mxu0
  %v1766 = vadd.f32 %v1723, %v1765
  %v1767 = vpop.f32.mrb[0].mxu0
  %v1768 = vadd.f32 %v1725, %v1767
  %v1769 = vpop.f32.mrb[0].mxu0
  %v1770 = vadd.f32 %v1727, %v1769
  %v1771 = vpop.f32.mrb[0].mxu0
  %v1772 = vadd.f32 %v1729, %v1771
  %1773 = vdwg.mxu0
  %1774 = vmatprep.subr.bf16.mxu0 %v1230
  %1775 = vmatpush1.bf16.msra.mxu0 %v1229
  %1776 = vmatprep.subr.bf16.mxu0 %v1232
  %1777 = vmatpush1.bf16.msra.mxu0 %v1231
  %1778 = vmatprep.subr.bf16.mxu0 %v1234
  %1779 = vmatpush1.bf16.msra.mxu0 %v1233
  %1780 = vmatprep.subr.bf16.mxu0 %v1236
  %1781 = vmatpush1.bf16.msra.mxu0 %v1235
  %1782 = vmatprep.subr.bf16.mxu0 %v1238
  %1783 = vmatpush1.bf16.msra.mxu0 %v1237
  %1784 = vmatprep.subr.bf16.mxu0 %v1240
  %1785 = vmatpush1.bf16.msra.mxu0 %v1239
  %1786 = vmatprep.subr.bf16.mxu0 %v1242
  %1787 = vmatpush1.bf16.msra.mxu0 %v1241
  %1788 = vmatprep.subr.bf16.mxu0 %v1244
  %1789 = vmatpush1.bf16.msra.mxu0 %v1243
  %1790 = vmatprep.subr.bf16.mxu0 %v1246
  %1791 = vmatpush1.bf16.msra.mxu0 %v1245
  %1792 = vmatprep.subr.bf16.mxu0 %v1248
  %1793 = vmatpush1.bf16.msra.mxu0 %v1247
  %1794 = vmatprep.subr.bf16.mxu0 %v1250
  %1795 = vmatpush1.bf16.msra.mxu0 %v1249
  %1796 = vmatprep.subr.bf16.mxu0 %v1252
  %1797 = vmatpush1.bf16.msra.mxu0 %v1251
  %1798 = vmatprep.subr.bf16.mxu0 %v1254
  %1799 = vmatpush1.bf16.msra.mxu0 %v1253
  %1800 = vmatprep.subr.bf16.mxu0 %v1256
  %1801 = vmatpush1.bf16.msra.mxu0 %v1255
  %1802 = vmatprep.subr.bf16.mxu0 %v1258
  %1803 = vmatpush1.bf16.msra.mxu0 %v1257
  %1804 = vmatprep.subr.bf16.mxu0 %v1260
  %1805 = vmatpush1.bf16.msra.mxu0 %v1259
  %1806 = vmatprep.mubr.bf16.mxu0 %v340
  %1807 = vmatmul.mubr.bf16.gmra.mrb[0].mxu0 %v339
  %v1808 = vpop.f32.mrb[0].mxu0
  %v1809 = vadd.f32 %v1766, %v1808
  %v1810 = vpop.f32.mrb[0].mxu0
  %v1811 = vadd.f32 %v1768, %v1810
  %v1812 = vpop.f32.mrb[0].mxu0
  %v1813 = vadd.f32 %v1770, %v1812
  %v1814 = vpop.f32.mrb[0].mxu0
  %v1815 = vadd.f32 %v1772, %v1814
  %1816 = vdwg.mxu0
  %1817 = vmatprep.subr.bf16.mxu0 %v1262
  %1818 = vmatpush1.bf16.msra.mxu0 %v1261
  %1819 = vmatprep.subr.bf16.mxu0 %v1264
  %1820 = vmatpush1.bf16.msra.mxu0 %v1263
  %1821 = vmatprep.subr.bf16.mxu0 %v1266
  %1822 = vmatpush1.bf16.msra.mxu0 %v1265
  %1823 = vmatprep.subr.bf16.mxu0 %v1268
  %1824 = vmatpush1.bf16.msra.mxu0 %v1267
  %1825 = vmatprep.subr.bf16.mxu0 %v1270
  %1826 = vmatpush1.bf16.msra.mxu0 %v1269
  %1827 = vmatprep.subr.bf16.mxu0 %v1272
  %1828 = vmatpush1.bf16.msra.mxu0 %v1271
  %1829 = vmatprep.subr.bf16.mxu0 %v1274
  %1830 = vmatpush1.bf16.msra.mxu0 %v1273
  %1831 = vmatprep.subr.bf16.mxu0 %v1276
  %1832 = vmatpush1.bf16.msra.mxu0 %v1275
  %1833 = vmatprep.subr.bf16.mxu0 %v1278
  %1834 = vmatpush1.bf16.msra.mxu0 %v1277
  %1835 = vmatprep.subr.bf16.mxu0 %v1280
  %1836 = vmatpush1.bf16.msra.mxu0 %v1279
  %1837 = vmatprep.subr.bf16.mxu0 %v1282
  %1838 = vmatpush1.bf16.msra.mxu0 %v1281
  %1839 = vmatprep.subr.bf16.mxu0 %v1284
  %1840 = vmatpush1.bf16.msra.mxu0 %v1283
  %1841 = vmatprep.subr.bf16.mxu0 %v1286
  %1842 = vmatpush1.bf16.msra.mxu0 %v1285
  %1843 = vmatprep.subr.bf16.mxu0 %v1288
  %1844 = vmatpush1.bf16.msra.mxu0 %v1287
  %1845 = vmatprep.subr.bf16.mxu0 %v1290
  %1846 = vmatpush1.bf16.msra.mxu0 %v1289
  %1847 = vmatprep.subr.bf16.mxu0 %v1292
  %1848 = vmatpush1.bf16.msra.mxu0 %v1291
  %1849 = vmatprep.mubr.bf16.mxu0 %v342
  %1850 = vmatmul.mubr.bf16.gmra.mrb[0].mxu0 %v341
  %v1851 = vpop.f32.mrb[0].mxu0
  %v1852 = vadd.f32 %v1809, %v1851
  %v1853 = vpop.f32.mrb[0].mxu0
  %v1854 = vadd.f32 %v1811, %v1853
  %v1855 = vpop.f32.mrb[0].mxu0
  %v1856 = vadd.f32 %v1813, %v1855
  %v1857 = vpop.f32.mrb[0].mxu0
  %v1858 = vadd.f32 %v1815, %v1857
  %1859 = vdwg.mxu0
  %1860 = vmatprep.subr.bf16.mxu0 %v1294
  %1861 = vmatpush1.bf16.msra.mxu0 %v1293
  %1862 = vmatprep.subr.bf16.mxu0 %v1296
  %1863 = vmatpush1.bf16.msra.mxu0 %v1295
  %1864 = vmatprep.subr.bf16.mxu0 %v1298
  %1865 = vmatpush1.bf16.msra.mxu0 %v1297
  %1866 = vmatprep.subr.bf16.mxu0 %v1300
  %1867 = vmatpush1.bf16.msra.mxu0 %v1299
  %1868 = vmatprep.subr.bf16.mxu0 %v1302
  %1869 = vmatpush1.bf16.msra.mxu0 %v1301
  %1870 = vmatprep.subr.bf16.mxu0 %v1304
  %1871 = vmatpush1.bf16.msra.mxu0 %v1303
  %1872 = vmatprep.subr.bf16.mxu0 %v1306
  %1873 = vmatpush1.bf16.msra.mxu0 %v1305
  %1874 = vmatprep.subr.bf16.mxu0 %v1308
  %1875 = vmatpush1.bf16.msra.mxu0 %v1307
  %1876 = vmatprep.subr.bf16.mxu0 %v1310
  %1877 = vmatpush1.bf16.msra.mxu0 %v1309
  %1878 = vmatprep.subr.bf16.mxu0 %v1312
  %1879 = vmatpush1.bf16.msra.mxu0 %v1311
  %1880 = vmatprep.subr.bf16.mxu0 %v1314
  %1881 = vmatpush1.bf16.msra.mxu0 %v1313
  %1882 = vmatprep.subr.bf16.mxu0 %v1316
  %1883 = vmatpush1.bf16.msra.mxu0 %v1315
  %1884 = vmatprep.subr.bf16.mxu0 %v1318
  %1885 = vmatpush1.bf16.msra.mxu0 %v1317
  %1886 = vmatprep.subr.bf16.mxu0 %v1320
  %1887 = vmatpush1.bf16.msra.mxu0 %v1319
  %1888 = vmatprep.subr.bf16.mxu0 %v1322
  %1889 = vmatpush1.bf16.msra.mxu0 %v1321
  %1890 = vmatprep.subr.bf16.mxu0 %v1324
  %1891 = vmatpush1.bf16.msra.mxu0 %v1323
  %1892 = vmatprep.mubr.bf16.mxu0 %v344
  %1893 = vmatmul.mubr.bf16.gmra.mrb[0].mxu0 %v343
  %v1894 = vpop.f32.mrb[0].mxu0
  %v1895 = vadd.f32 %v1852, %v1894
  %v1896 = vpop.f32.mrb[0].mxu0
  %v1897 = vadd.f32 %v1854, %v1896
  %v1898 = vpop.f32.mrb[0].mxu0
  %v1899 = vadd.f32 %v1856, %v1898
  %v1900 = vpop.f32.mrb[0].mxu0
  %v1901 = vadd.f32 %v1858, %v1900
  %1902 = vdwg.mxu0
  %1903 = vmatprep.subr.bf16.mxu0 %v1326
  %1904 = vmatpush1.bf16.msra.mxu0 %v1325
  %1905 = vmatprep.subr.bf16.mxu0 %v1328
  %1906 = vmatpush1.bf16.msra.mxu0 %v1327
  %1907 = vmatprep.subr.bf16.mxu0 %v1330
  %1908 = vmatpush1.bf16.msra.mxu0 %v1329
  %1909 = vmatprep.subr.bf16.mxu0 %v1332
  %1910 = vmatpush1.bf16.msra.mxu0 %v1331
  %1911 = vmatprep.subr.bf16.mxu0 %v1334
  %1912 = vmatpush1.bf16.msra.mxu0 %v1333
  %1913 = vmatprep.subr.bf16.mxu0 %v1336
  %1914 = vmatpush1.bf16.msra.mxu0 %v1335
  %1915 = vmatprep.subr.bf16.mxu0 %v1338
  %1916 = vmatpush1.bf16.msra.mxu0 %v1337
  %1917 = vmatprep.subr.bf16.mxu0 %v1340
  %1918 = vmatpush1.bf16.msra.mxu0 %v1339
  %1919 = vmatprep.subr.bf16.mxu0 %v1342
  %1920 = vmatpush1.bf16.msra.mxu0 %v1341
  %1921 = vmatprep.subr.bf16.mxu0 %v1344
  %1922 = vmatpush1.bf16.msra.mxu0 %v1343
  %1923 = vmatprep.subr.bf16.mxu0 %v1346
  %1924 = vmatpush1.bf16.msra.mxu0 %v1345
  %1925 = vmatprep.subr.bf16.mxu0 %v1348
  %1926 = vmatpush1.bf16.msra.mxu0 %v1347
  %1927 = vmatprep.subr.bf16.mxu0 %v1350
  %1928 = vmatpush1.bf16.msra.mxu0 %v1349
  %1929 = vmatprep.subr.bf16.mxu0 %v1352
  %1930 = vmatpush1.bf16.msra.mxu0 %v1351
  %1931 = vmatprep.subr.bf16.mxu0 %v1354
  %1932 = vmatpush1.bf16.msra.mxu0 %v1353
  %1933 = vmatprep.subr.bf16.mxu0 %v1356
  %1934 = vmatpush1.bf16.msra.mxu0 %v1355
  %1935 = vmatprep.mubr.bf16.mxu0 %v346
  %1936 = vmatmul.mubr.bf16.gmra.mrb[0].mxu0 %v345
  %v1937 = vpop.f32.mrb[0].mxu0
  %v1938 = vadd.f32 %v1895, %v1937
  %v1939 = vpop.f32.mrb[0].mxu0
  %v1940 = vadd.f32 %v1897, %v1939
  %v1941 = vpop.f32.mrb[0].mxu0
  %v1942 = vadd.f32 %v1899, %v1941
  %v1943 = vpop.f32.mrb[0].mxu0
  %v1944 = vadd.f32 %v1901, %v1943
  %1945 = vdwg.mxu0
  %1946 = vmatprep.subr.bf16.mxu0 %v1358
  %1947 = vmatpush1.bf16.msra.mxu0 %v1357
  %1948 = vmatprep.subr.bf16.mxu0 %v1360
  %1949 = vmatpush1.bf16.msra.mxu0 %v1359
  %1950 = vmatprep.subr.bf16.mxu0 %v1362
  %1951 = vmatpush1.bf16.msra.mxu0 %v1361
  %1952 = vmatprep.subr.bf16.mxu0 %v1364
  %1953 = vmatpush1.bf16.msra.mxu0 %v1363
  %1954 = vmatprep.subr.bf16.mxu0 %v1366
  %1955 = vmatpush1.bf16.msra.mxu0 %v1365
  %1956 = vmatprep.subr.bf16.mxu0 %v1368
  %1957 = vmatpush1.bf16.msra.mxu0 %v1367
  %1958 = vmatprep.subr.bf16.mxu0 %v1370
  %1959 = vmatpush1.bf16.msra.mxu0 %v1369
  %1960 = vmatprep.subr.bf16.mxu0 %v1372
  %1961 = vmatpush1.bf16.msra.mxu0 %v1371
  %1962 = vmatprep.subr.bf16.mxu0 %v1374
  %1963 = vmatpush1.bf16.msra.mxu0 %v1373
  %1964 = vmatprep.subr.bf16.mxu0 %v1376
  %1965 = vmatpush1.bf16.msra.mxu0 %v1375
  %1966 = vmatprep.subr.bf16.mxu0 %v1378
  %1967 = vmatpush1.bf16.msra.mxu0 %v1377
  %1968 = vmatprep.subr.bf16.mxu0 %v1380
  %1969 = vmatpush1.bf16.msra.mxu0 %v1379
  %1970 = vmatprep.subr.bf16.mxu0 %v1382
  %1971 = vmatpush1.bf16.msra.mxu0 %v1381
  %1972 = vmatprep.subr.bf16.mxu0 %v1384
  %1973 = vmatpush1.bf16.msra.mxu0 %v1383
  %1974 = vmatprep.subr.bf16.mxu0 %v1386
  %1975 = vmatpush1.bf16.msra.mxu0 %v1385
  %1976 = vmatprep.subr.bf16.mxu0 %v1388
  %1977 = vmatpush1.bf16.msra.mxu0 %v1387
  %1978 = vmatprep.mubr.bf16.mxu0 %v348
  %1979 = vmatmul.mubr.bf16.gmra.mrb[0].mxu0 %v347
  %v1980 = vpop.f32.mrb[0].mxu0
  %v1981 = vadd.f32 %v1938, %v1980
  %v1982 = vpop.f32.mrb[0].mxu0
  %v1983 = vadd.f32 %v1940, %v1982
  %v1984 = vpop.f32.mrb[0].mxu0
  %v1985 = vadd.f32 %v1942, %v1984
  %v1986 = vpop.f32.mrb[0].mxu0
  %v1987 = vadd.f32 %v1944, %v1986
  %1988 = vdwg.mxu0
  %v1989 = vpack.c.bf16 %v1985, %v1981
  %v1990 = vpack.c.bf16 %v1987, %v1983
  %v1993 = vunpack.c.l.b16 %v1989
  %v1994 = vunpack.c.l.b16 %v1990
  %v1995 = vunpack.c.h.b16 %v1989
  %v1996 = vunpack.c.h.b16 %v1990
  %v1997 = vpack.c.b16 %v1994, %v1993
  %v1998 = vpack.c.b16 %v1996, %v1995
  %2001 = vst [vmem:[%s2] sm:$0xff] %v1997
  %2002 = vst [vmem:[%s2 + $0x8] sm:$0xff] %v1998
  %v2003 = vadd.f32 %v1981, %v1985
  %v2004 = vrot.slane %v2003, 4
  %v2005 = vadd.f32 %v2003, %v2004
  %v2006 = vrot.slane %v2005, 2
  %v2007 = vadd.f32 %v2005, %v2006
  %v2008 = vrot.slane %v2007, 1
  %v2009 = vadd.f32 %v2007, %v2008
  %v2010 = vadd.f32 %v1983, %v1987
  %v2011 = vrot.slane %v2010, 4
  %v2012 = vadd.f32 %v2010, %v2011
  %v2013 = vrot.slane %v2012, 2
  %v2014 = vadd.f32 %v2012, %v2013
  %v2015 = vrot.slane %v2014, 1
  %v2016 = vadd.f32 %v2014, %v2015
  %v2017 = vmul.f32 %v1981, %v1981
  %v2018 = vmul.f32 %v1983, %v1983
  %v2019 = vmul.f32 %v1985, %v1985
  %v2020 = vmul.f32 %v1987, %v1987
  %v2021 = vadd.f32 %v2017, %v2019
  %v2022 = vrot.slane %v2021, 4
  %v2023 = vadd.f32 %v2021, %v2022
  %v2024 = vrot.slane %v2023, 2
  %v2025 = vadd.f32 %v2023, %v2024
  %v2026 = vrot.slane %v2025, 1
  %v2027 = vadd.f32 %v2025, %v2026
  %v2028 = vadd.f32 %v2018, %v2020
  %v2029 = vrot.slane %v2028, 4
  %v2030 = vadd.f32 %v2028, %v2029
  %v2031 = vrot.slane %v2030, 2
  %v2032 = vadd.f32 %v2030, %v2031
  %v2033 = vrot.slane %v2032, 1
  %v2034 = vadd.f32 %v2032, %v2033
  %vm2035 = vcmask 1040384
  %v2036 = vsel %vm2035, %v2009, %v2027
  %v2037 = vsel %vm2035, %v2016, %v2034
  %v2040 = vcombine.low %v2036, %v2037
  %v2042 = vunpack.c.l.s4 1983009808
  %v2043 = vunpack.c.0.s8 %v2042
  %v2044 = vlaneseq
  %v2045 = vshrl.u32 %v2044, 7
  %v2046 = vsub.s32 %v2043, %v2045
  %v2047 = vrot.slane %v2040, %v2046
  %2049 = vst [vmem:[%s3] sm:$0xf] %v2047
  // Predicated region
  $region10: #{discriminator_forward.6} parent=0 // pred_check
    _
  $region11: #{discriminator_forward.6} parent=0 // pred_check_branch
    %2051 = sbr.rel (0) target = $region13
  $region12: #{discriminator_forward.6} parent=0 // pred_region
    _
  $region13: #{discriminator_forward.6} parent=0 // pred_fallthru
    _
  // Predicated region
  $region14: #{discriminator_forward.6} parent=0 // pred_check
    _
  $region15: #{discriminator_forward.6} parent=0 // pred_check_branch
    %2053 = sbr.rel (0) target = $region17
  $region16: #{discriminator_forward.6} parent=0 // pred_region
    _
  $region17: #{discriminator_forward.6} parent=0 // pred_fallthru
    _
  // Predicated region
  $region18: #{discriminator_forward.6} parent=0 // pred_check
    _
  $region19: #{discriminator_forward.6} parent=0 // pred_check_branch
    %2055 = sbr.rel (0) target = $region21
  $region20: #{discriminator_forward.6} parent=0 // pred_region
    _
  $region21: #{discriminator_forward.6} parent=0 // pred_fallthru
    _
  // Predicated region
  $region22: #{discriminator_forward.6} parent=0 // pred_check
    _
  $region23: #{discriminator_forward.6} parent=0 // pred_check_branch
    %2057 = sbr.rel (0) target = $region25
  $region24: #{discriminator_forward.6} parent=0 // pred_region
    _
  $region25: #{discriminator_forward.6} parent=0 // pred_fallthru
    _

// kernel: discriminator_forward.7
$region0: #{discriminator_forward.7}
  #allocation0 [shape = 'u32[]', space=smem, size = 0x4, offset = 0x4, fixed_abs, tag = 'smem constant byte address 0x4 - core index']
  #allocation1 [shape = 'u32[144,128]{1,0:T(1,128)}', space=vmem, size = 0x12000, scoped, tag = 'internal scratch']
  %s0 = inlined_call_operand.vmem [shape: bf16[16,4096], index: 0, kind: input, shape index: {}]
  %s1 = inlined_call_operand.vmem [shape: bf16[4096,128], index: 1, kind: input, shape index: {}]
  %s2 = inlined_call_operand.vmem [shape: f32[1,128], index: 2, kind: input, shape index: {}]
  %s3 = inlined_call_operand.vmem [shape: f32[16,128], index: 3, kind: output, shape index: {}]
  %s4 = sld [smem:[#allocation0]]
  $region22: #{discriminator_forward.7} parent=0
    _
  %s6 = ssub.s32 1, %s4
  %s7 = scalar_select 0, %s6, %s4
  // Predicated region
  $region2: #{discriminator_forward.7} parent=0 // pred_check
    _
  $region3: #{discriminator_forward.7} parent=0 // pred_check_branch
    %9 = sbr.rel (0) target = $region5
  $region4: #{discriminator_forward.7} parent=0 // pred_region
    _
  $region5: #{discriminator_forward.7} parent=0 // pred_fallthru
    _
  // Predicated region
  $region6: #{discriminator_forward.7} parent=0 // pred_check
    _
  $region7: #{discriminator_forward.7} parent=0 // pred_check_branch
    %11 = sbr.rel (0) target = $region9
  $region8: #{discriminator_forward.7} parent=0 // pred_region
    _
  $region9: #{discriminator_forward.7} parent=0 // pred_fallthru
    _
  // Predicated region
  $region10: #{discriminator_forward.7} parent=0 // pred_check
    _
  $region11: #{discriminator_forward.7} parent=0 // pred_check_branch
    %13 = sbr.rel (0) target = $region13
  $region12: #{discriminator_forward.7} parent=0 // pred_region
    _
  $region13: #{discriminator_forward.7} parent=0 // pred_fallthru
    _
  %v15 = vld [vmem:[%s0] sm:$0xff]
  %v16 = vld [vmem:[%s0 + $0x8] sm:$0xff]
  %v17 = vld [vmem:[%s0 + $0x10] sm:$0xff]
  %v18 = vld [vmem:[%s0 + $0x18] sm:$0xff]
  %v19 = vld [vmem:[%s0 + $0x20] sm:$0xff]
  %v20 = vld [vmem:[%s0 + $0x28] sm:$0xff]
  %v21 = vld [vmem:[%s0 + $0x30] sm:$0xff]
  %v22 = vld [vmem:[%s0 + $0x38] sm:$0xff]
  %v23 = vld [vmem:[%s0 + $0x40] sm:$0xff]
  %v24 = vld [vmem:[%s0 + $0x48] sm:$0xff]
  %v25 = vld [vmem:[%s0 + $0x50] sm:$0xff]
  %v26 = vld [vmem:[%s0 + $0x58] sm:$0xff]
  %v27 = vld [vmem:[%s0 + $0x60] sm:$0xff]
  %v28 = vld [vmem:[%s0 + $0x68] sm:$0xff]
  %v29 = vld [vmem:[%s0 + $0x70] sm:$0xff]
  %v30 = vld [vmem:[%s0 + $0x78] sm:$0xff]
  %v31 = vld [vmem:[%s0 + $0x80] sm:$0xff]
  %v32 = vld [vmem:[%s0 + $0x88] sm:$0xff]
  %v33 = vld [vmem:[%s0 + $0x90] sm:$0xff]
  %v34 = vld [vmem:[%s0 + $0x98] sm:$0xff]
  %v35 = vld [vmem:[%s0 + $0xa0] sm:$0xff]
  %v36 = vld [vmem:[%s0 + $0xa8] sm:$0xff]
  %v37 = vld [vmem:[%s0 + $0xb0] sm:$0xff]
  %v38 = vld [vmem:[%s0 + $0xb8] sm:$0xff]
  %v39 = vld [vmem:[%s0 + $0xc0] sm:$0xff]
  %v40 = vld [vmem:[%s0 + $0xc8] sm:$0xff]
  %v41 = vld [vmem:[%s0 + $0xd0] sm:$0xff]
  %v42 = vld [vmem:[%s0 + $0xd8] sm:$0xff]
  %v43 = vld [vmem:[%s0 + $0xe0] sm:$0xff]
  %v44 = vld [vmem:[%s0 + $0xe8] sm:$0xff]
  %v45 = vld [vmem:[%s0 + $0xf0] sm:$0xff]
  %v46 = vld [vmem:[%s0 + $0xf8] sm:$0xff]
  %v47 = vld [vmem:[%s1] sm:$0xf]
  %v48 = vld [vmem:[%s1 + $0x4] sm:$0xf]
  %v49 = vld [vmem:[%s1 + $0x8] sm:$0xf]
  %v50 = vld [vmem:[%s1 + $0xc] sm:$0xf]
  %v51 = vld [vmem:[%s1 + $0x10] sm:$0xf]
  %v52 = vld [vmem:[%s1 + $0x14] sm:$0xf]
  %v53 = vld [vmem:[%s1 + $0x18] sm:$0xf]
  %v54 = vld [vmem:[%s1 + $0x1c] sm:$0xf]
  %v55 = vld [vmem:[%s1 + $0x20] sm:$0xf]
  %v56 = vld [vmem:[%s1 + $0x24] sm:$0xf]
  %v57 = vld [vmem:[%s1 + $0x28] sm:$0xf]
  %v58 = vld [vmem:[%s1 + $0x2c] sm:$0xf]
  %v59 = vld [vmem:[%s1 + $0x30] sm:$0xf]
  %v60 = vld [vmem:[%s1 + $0x34] sm:$0xf]
  %v61 = vld [vmem:[%s1 + $0x38] sm:$0xf]
  %v62 = vld [vmem:[%s1 + $0x3c] sm:$0xf]
  %v63 = vld [vmem:[%s1 + $0x40] sm:$0xf]
  %v64 = vld [vmem:[%s1 + $0x44] sm:$0xf]
  %v65 = vld [vmem:[%s1 + $0x48] sm:$0xf]
  %v66 = vld [vmem:[%s1 + $0x4c] sm:$0xf]
  %v67 = vld [vmem:[%s1 + $0x50] sm:$0xf]
  %v68 = vld [vmem:[%s1 + $0x54] sm:$0xf]
  %v69 = vld [vmem:[%s1 + $0x58] sm:$0xf]
  %v70 = vld [vmem:[%s1 + $0x5c] sm:$0xf]
  %v71 = vld [vmem:[%s1 + $0x60] sm:$0xf]
  %v72 = vld [vmem:[%s1 + $0x64] sm:$0xf]
  %v73 = vld [vmem:[%s1 + $0x68] sm:$0xf]
  %v74 = vld [vmem:[%s1 + $0x6c] sm:$0xf]
  %v75 = vld [vmem:[%s1 + $0x70] sm:$0xf]
  %v76 = vld [vmem:[%s1 + $0x74] sm:$0xf]
  %v77 = vld [vmem:[%s1 + $0x78] sm:$0xf]
  %v78 = vld [vmem:[%s1 + $0x7c] sm:$0xf]
  %v79 = vld [vmem:[%s1 + $0x80] sm:$0xf]
  %v80 = vld [vmem:[%s1 + $0x84] sm:$0xf]
  %v81 = vld [vmem:[%s1 + $0x88] sm:$0xf]
  %v82 = vld [vmem:[%s1 + $0x8c] sm:$0xf]
  %v83 = vld [vmem:[%s1 + $0x90] sm:$0xf]
  %v84 = vld [vmem:[%s1 + $0x94] sm:$0xf]
  %v85 = vld [vmem:[%s1 + $0x98] sm:$0xf]
  %v86 = vld [vmem:[%s1 + $0x9c] sm:$0xf]
  %v87 = vld [vmem:[%s1 + $0xa0] sm:$0xf]
  %v88 = vld [vmem:[%s1 + $0xa4] sm:$0xf]
  %v89 = vld [vmem:[%s1 + $0xa8] sm:$0xf]
  %v90 = vld [vmem:[%s1 + $0xac] sm:$0xf]
  %v91 = vld [vmem:[%s1 + $0xb0] sm:$0xf]
  %v92 = vld [vmem:[%s1 + $0xb4] sm:$0xf]
  %v93 = vld [vmem:[%s1 + $0xb8] sm:$0xf]
  %v94 = vld [vmem:[%s1 + $0xbc] sm:$0xf]
  %v95 = vld [vmem:[%s1 + $0xc0] sm:$0xf]
  %v96 = vld [vmem:[%s1 + $0xc4] sm:$0xf]
  %v97 = vld [vmem:[%s1 + $0xc8] sm:$0xf]
  %v98 = vld [vmem:[%s1 + $0xcc] sm:$0xf]
  %v99 = vld [vmem:[%s1 + $0xd0] sm:$0xf]
  %v100 = vld [vmem:[%s1 + $0xd4] sm:$0xf]
  %v101 = vld [vmem:[%s1 + $0xd8] sm:$0xf]
  %v102 = vld [vmem:[%s1 + $0xdc] sm:$0xf]
  %v103 = vld [vmem:[%s1 + $0xe0] sm:$0xf]
  %v104 = vld [vmem:[%s1 + $0xe4] sm:$0xf]
  %v105 = vld [vmem:[%s1 + $0xe8] sm:$0xf]
  %v106 = vld [vmem:[%s1 + $0xec] sm:$0xf]
  %v107 = vld [vmem:[%s1 + $0xf0] sm:$0xf]
  %v108 = vld [vmem:[%s1 + $0xf4] sm:$0xf]
  %v109 = vld [vmem:[%s1 + $0xf8] sm:$0xf]
  %v110 = vld [vmem:[%s1 + $0xfc] sm:$0xf]
  %v111 = vld [vmem:[%s1 + $0x100] sm:$0xf]
  %v112 = vld [vmem:[%s1 + $0x104] sm:$0xf]
  %v113 = vld [vmem:[%s1 + $0x108] sm:$0xf]
  %v114 = vld [vmem:[%s1 + $0x10c] sm:$0xf]
  %v115 = vld [vmem:[%s1 + $0x110] sm:$0xf]
  %v116 = vld [vmem:[%s1 + $0x114] sm:$0xf]
  %v117 = vld [vmem:[%s1 + $0x118] sm:$0xf]
  %v118 = vld [vmem:[%s1 + $0x11c] sm:$0xf]
  %v119 = vld [vmem:[%s1 + $0x120] sm:$0xf]
  %v120 = vld [vmem:[%s1 + $0x124] sm:$0xf]
  %v121 = vld [vmem:[%s1 + $0x128] sm:$0xf]
  %v122 = vld [vmem:[%s1 + $0x12c] sm:$0xf]
  %v123 = vld [vmem:[%s1 + $0x130] sm:$0xf]
  %v124 = vld [vmem:[%s1 + $0x134] sm:$0xf]
  %v125 = vld [vmem:[%s1 + $0x138] sm:$0xf]
  %v126 = vld [vmem:[%s1 + $0x13c] sm:$0xf]
  %v127 = vld [vmem:[%s1 + $0x140] sm:$0xf]
  %v128 = vld [vmem:[%s1 + $0x144] sm:$0xf]
  %v129 = vld [vmem:[%s1 + $0x148] sm:$0xf]
  %v130 = vld [vmem:[%s1 + $0x14c] sm:$0xf]
  %v131 = vld [vmem:[%s1 + $0x150] sm:$0xf]
  %v132 = vld [vmem:[%s1 + $0x154] sm:$0xf]
  %v133 = vld [vmem:[%s1 + $0x158] sm:$0xf]
  %v134 = vld [vmem:[%s1 + $0x15c] sm:$0xf]
  %v135 = vld [vmem:[%s1 + $0x160] sm:$0xf]
  %v136 = vld [vmem:[%s1 + $0x164] sm:$0xf]
  %v137 = vld [vmem:[%s1 + $0x168] sm:$0xf]
  %v138 = vld [vmem:[%s1 + $0x16c] sm:$0xf]
  %v139 = vld [vmem:[%s1 + $0x170] sm:$0xf]
  %v140 = vld [vmem:[%s1 + $0x174] sm:$0xf]
  %v141 = vld [vmem:[%s1 + $0x178] sm:$0xf]
  %v142 = vld [vmem:[%s1 + $0x17c] sm:$0xf]
  %v143 = vld [vmem:[%s1 + $0x180] sm:$0xf]
  %v144 = vld [vmem:[%s1 + $0x184] sm:$0xf]
  %v145 = vld [vmem:[%s1 + $0x188] sm:$0xf]
  %v146 = vld [vmem:[%s1 + $0x18c] sm:$0xf]
  %v147 = vld [vmem:[%s1 + $0x190] sm:$0xf]
  %v148 = vld [vmem:[%s1 + $0x194] sm:$0xf]
  %v149 = vld [vmem:[%s1 + $0x198] sm:$0xf]
  %v150 = vld [vmem:[%s1 + $0x19c] sm:$0xf]
  %v151 = vld [vmem:[%s1 + $0x1a0] sm:$0xf]
  %v152 = vld [vmem:[%s1 + $0x1a4] sm:$0xf]
  %v153 = vld [vmem:[%s1 + $0x1a8] sm:$0xf]
  %v154 = vld [vmem:[%s1 + $0x1ac] sm:$0xf]
  %v155 = vld [vmem:[%s1 + $0x1b0] sm:$0xf]
  %v156 = vld [vmem:[%s1 + $0x1b4] sm:$0xf]
  %v157 = vld [vmem:[%s1 + $0x1b8] sm:$0xf]
  %v158 = vld [vmem:[%s1 + $0x1bc] sm:$0xf]
  %v159 = vld [vmem:[%s1 + $0x1c0] sm:$0xf]
  %v160 = vld [vmem:[%s1 + $0x1c4] sm:$0xf]
  %v161 = vld [vmem:[%s1 + $0x1c8] sm:$0xf]
  %v162 = vld [vmem:[%s1 + $0x1cc] sm:$0xf]
  %v163 = vld [vmem:[%s1 + $0x1d0] sm:$0xf]
  %v164 = vld [vmem:[%s1 + $0x1d4] sm:$0xf]
  %v165 = vld [vmem:[%s1 + $0x1d8] sm:$0xf]
  %v166 = vld [vmem:[%s1 + $0x1dc] sm:$0xf]
  %v167 = vld [vmem:[%s1 + $0x1e0] sm:$0xf]
  %v168 = vld [vmem:[%s1 + $0x1e4] sm:$0xf]
  %v169 = vld [vmem:[%s1 + $0x1e8] sm:$0xf]
  %v170 = vld [vmem:[%s1 + $0x1ec] sm:$0xf]
  %v171 = vld [vmem:[%s1 + $0x1f0] sm:$0xf]
  %v172 = vld [vmem:[%s1 + $0x1f4] sm:$0xf]
  %v173 = vld [vmem:[%s1 + $0x1f8] sm:$0xf]
  %v174 = vld [vmem:[%s1 + $0x1fc] sm:$0xf]
  %v175 = vld [vmem:[%s1 + $0x200] sm:$0xf]
  %v176 = vld [vmem:[%s1 + $0x204] sm:$0xf]
  %v177 = vld [vmem:[%s1 + $0x208] sm:$0xf]
  %v178 = vld [vmem:[%s1 + $0x20c] sm:$0xf]
  %v179 = vld [vmem:[%s1 + $0x210] sm:$0xf]
  %v180 = vld [vmem:[%s1 + $0x214] sm:$0xf]
  %v181 = vld [vmem:[%s1 + $0x218] sm:$0xf]
  %v182 = vld [vmem:[%s1 + $0x21c] sm:$0xf]
  %v183 = vld [vmem:[%s1 + $0x220] sm:$0xf]
  %v184 = vld [vmem:[%s1 + $0x224] sm:$0xf]
  %v185 = vld [vmem:[%s1 + $0x228] sm:$0xf]
  %v186 = vld [vmem:[%s1 + $0x22c] sm:$0xf]
  %v187 = vld [vmem:[%s1 + $0x230] sm:$0xf]
  %v188 = vld [vmem:[%s1 + $0x234] sm:$0xf]
  %v189 = vld [vmem:[%s1 + $0x238] sm:$0xf]
  %v190 = vld [vmem:[%s1 + $0x23c] sm:$0xf]
  %v191 = vld [vmem:[%s1 + $0x240] sm:$0xf]
  %v192 = vld [vmem:[%s1 + $0x244] sm:$0xf]
  %v193 = vld [vmem:[%s1 + $0x248] sm:$0xf]
  %v194 = vld [vmem:[%s1 + $0x24c] sm:$0xf]
  %v195 = vld [vmem:[%s1 + $0x250] sm:$0xf]
  %v196 = vld [vmem:[%s1 + $0x254] sm:$0xf]
  %v197 = vld [vmem:[%s1 + $0x258] sm:$0xf]
  %v198 = vld [vmem:[%s1 + $0x25c] sm:$0xf]
  %v199 = vld [vmem:[%s1 + $0x260] sm:$0xf]
  %v200 = vld [vmem:[%s1 + $0x264] sm:$0xf]
  %v201 = vld [vmem:[%s1 + $0x268] sm:$0xf]
  %v202 = vld [vmem:[%s1 + $0x26c] sm:$0xf]
  %v203 = vld [vmem:[%s1 + $0x270] sm:$0xf]
  %v204 = vld [vmem:[%s1 + $0x274] sm:$0xf]
  %v205 = vld [vmem:[%s1 + $0x278] sm:$0xf]
  %v206 = vld [vmem:[%s1 + $0x27c] sm:$0xf]
  %v207 = vld [vmem:[%s1 + $0x280] sm:$0xf]
  %v208 = vld [vmem:[%s1 + $0x284] sm:$0xf]
  %v209 = vld [vmem:[%s1 + $0x288] sm:$0xf]
  %v210 = vld [vmem:[%s1 + $0x28c] sm:$0xf]
  %v211 = vld [vmem:[%s1 + $0x290] sm:$0xf]
  %v212 = vld [vmem:[%s1 + $0x294] sm:$0xf]
  %v213 = vld [vmem:[%s1 + $0x298] sm:$0xf]
  %v214 = vld [vmem:[%s1 + $0x29c] sm:$0xf]
  %v215 = vld [vmem:[%s1 + $0x2a0] sm:$0xf]
  %v216 = vld [vmem:[%s1 + $0x2a4] sm:$0xf]
  %v217 = vld [vmem:[%s1 + $0x2a8] sm:$0xf]
  %v218 = vld [vmem:[%s1 + $0x2ac] sm:$0xf]
  %v219 = vld [vmem:[%s1 + $0x2b0] sm:$0xf]
  %v220 = vld [vmem:[%s1 + $0x2b4] sm:$0xf]
  %v221 = vld [vmem:[%s1 + $0x2b8] sm:$0xf]
  %v222 = vld [vmem:[%s1 + $0x2bc] sm:$0xf]
  %v223 = vld [vmem:[%s1 + $0x2c0] sm:$0xf]
  %v224 = vld [vmem:[%s1 + $0x2c4] sm:$0xf]
  %v225 = vld [vmem:[%s1 + $0x2c8] sm:$0xf]
  %v226 = vld [vmem:[%s1 + $0x2cc] sm:$0xf]
  %v227 = vld [vmem:[%s1 + $0x2d0] sm:$0xf]
  %v228 = vld [vmem:[%s1 + $0x2d4] sm:$0xf]
  %v229 = vld [vmem:[%s1 + $0x2d8] sm:$0xf]
  %v230 = vld [vmem:[%s1 + $0x2dc] sm:$0xf]
  %v231 = vld [vmem:[%s1 + $0x2e0] sm:$0xf]
  %v232 = vld [vmem:[%s1 + $0x2e4] sm:$0xf]
  %v233 = vld [vmem:[%s1 + $0x2e8] sm:$0xf]
  %v234 = vld [vmem:[%s1 + $0x2ec] sm:$0xf]
  %v235 = vld [vmem:[%s1 + $0x2f0] sm:$0xf]
  %v236 = vld [vmem:[%s1 + $0x2f4] sm:$0xf]
  %v237 = vld [vmem:[%s1 + $0x2f8] sm:$0xf]
  %v238 = vld [vmem:[%s1 + $0x2fc] sm:$0xf]
  %v239 = vld [vmem:[%s1 + $0x300] sm:$0xf]
  %v240 = vld [vmem:[%s1 + $0x304] sm:$0xf]
  %v241 = vld [vmem:[%s1 + $0x308] sm:$0xf]
  %v242 = vld [vmem:[%s1 + $0x30c] sm:$0xf]
  %v243 = vld [vmem:[%s1 + $0x310] sm:$0xf]
  %v244 = vld [vmem:[%s1 + $0x314] sm:$0xf]
  %v245 = vld [vmem:[%s1 + $0x318] sm:$0xf]
  %v246 = vld [vmem:[%s1 + $0x31c] sm:$0xf]
  %v247 = vld [vmem:[%s1 + $0x320] sm:$0xf]
  %v248 = vld [vmem:[%s1 + $0x324] sm:$0xf]
  %v249 = vld [vmem:[%s1 + $0x328] sm:$0xf]
  %v250 = vld [vmem:[%s1 + $0x32c] sm:$0xf]
  %v251 = vld [vmem:[%s1 + $0x330] sm:$0xf]
  %v252 = vld [vmem:[%s1 + $0x334] sm:$0xf]
  %v253 = vld [vmem:[%s1 + $0x338] sm:$0xf]
  %v254 = vld [vmem:[%s1 + $0x33c] sm:$0xf]
  %v255 = vld [vmem:[%s1 + $0x340] sm:$0xf]
  %v256 = vld [vmem:[%s1 + $0x344] sm:$0xf]
  %v257 = vld [vmem:[%s1 + $0x348] sm:$0xf]
  %v258 = vld [vmem:[%s1 + $0x34c] sm:$0xf]
  %v259 = vld [vmem:[%s1 + $0x350] sm:$0xf]
  %v260 = vld [vmem:[%s1 + $0x354] sm:$0xf]
  %v261 = vld [vmem:[%s1 + $0x358] sm:$0xf]
  %v262 = vld [vmem:[%s1 + $0x35c] sm:$0xf]
  %v263 = vld [vmem:[%s1 + $0x360] sm:$0xf]
  %v264 = vld [vmem:[%s1 + $0x364] sm:$0xf]
  %v265 = vld [vmem:[%s1 + $0x368] sm:$0xf]
  %v266 = vld [vmem:[%s1 + $0x36c] sm:$0xf]
  %v267 = vld [vmem:[%s1 + $0x370] sm:$0xf]
  %v268 = vld [vmem:[%s1 + $0x374] sm:$0xf]
  %v269 = vld [vmem:[%s1 + $0x378] sm:$0xf]
  %v270 = vld [vmem:[%s1 + $0x37c] sm:$0xf]
  %v271 = vld [vmem:[%s1 + $0x380] sm:$0xf]
  %v272 = vld [vmem:[%s1 + $0x384] sm:$0xf]
  %v273 = vld [vmem:[%s1 + $0x388] sm:$0xf]
  %v274 = vld [vmem:[%s1 + $0x38c] sm:$0xf]
  %v275 = vld [vmem:[%s1 + $0x390] sm:$0xf]
  %v276 = vld [vmem:[%s1 + $0x394] sm:$0xf]
  %v277 = vld [vmem:[%s1 + $0x398] sm:$0xf]
  %v278 = vld [vmem:[%s1 + $0x39c] sm:$0xf]
  %v279 = vld [vmem:[%s1 + $0x3a0] sm:$0xf]
  %v280 = vld [vmem:[%s1 + $0x3a4] sm:$0xf]
  %v281 = vld [vmem:[%s1 + $0x3a8] sm:$0xf]
  %v282 = vld [vmem:[%s1 + $0x3ac] sm:$0xf]
  %v283 = vld [vmem:[%s1 + $0x3b0] sm:$0xf]
  %v284 = vld [vmem:[%s1 + $0x3b4] sm:$0xf]
  %v285 = vld [vmem:[%s1 + $0x3b8] sm:$0xf]
  %v286 = vld [vmem:[%s1 + $0x3bc] sm:$0xf]
  %v287 = vld [vmem:[%s1 + $0x3c0] sm:$0xf]
  %v288 = vld [vmem:[%s1 + $0x3c4] sm:$0xf]
  %v289 = vld [vmem:[%s1 + $0x3c8] sm:$0xf]
  %v290 = vld [vmem:[%s1 + $0x3cc] sm:$0xf]
  %v291 = vld [vmem:[%s1 + $0x3d0] sm:$0xf]
  %v292 = vld [vmem:[%s1 + $0x3d4] sm:$0xf]
  %v293 = vld [vmem:[%s1 + $0x3d8] sm:$0xf]
  %v294 = vld [vmem:[%s1 + $0x3dc] sm:$0xf]
  %v295 = vld [vmem:[%s1 + $0x3e0] sm:$0xf]
  %v296 = vld [vmem:[%s1 + $0x3e4] sm:$0xf]
  %v297 = vld [vmem:[%s1 + $0x3e8] sm:$0xf]
  %v298 = vld [vmem:[%s1 + $0x3ec] sm:$0xf]
  %v299 = vld [vmem:[%s1 + $0x3f0] sm:$0xf]
  %v300 = vld [vmem:[%s1 + $0x3f4] sm:$0xf]
  %v301 = vld [vmem:[%s1 + $0x3f8] sm:$0xf]
  %v302 = vld [vmem:[%s1 + $0x3fc] sm:$0xf]
  %v303 = vld [vmem:[%s1 + $0x400] sm:$0xf]
  %v304 = vld [vmem:[%s1 + $0x404] sm:$0xf]
  %v305 = vld [vmem:[%s1 + $0x408] sm:$0xf]
  %v306 = vld [vmem:[%s1 + $0x40c] sm:$0xf]
  %v307 = vld [vmem:[%s1 + $0x410] sm:$0xf]
  %v308 = vld [vmem:[%s1 + $0x414] sm:$0xf]
  %v309 = vld [vmem:[%s1 + $0x418] sm:$0xf]
  %v310 = vld [vmem:[%s1 + $0x41c] sm:$0xf]
  %v311 = vld [vmem:[%s1 + $0x420] sm:$0xf]
  %v312 = vld [vmem:[%s1 + $0x424] sm:$0xf]
  %v313 = vld [vmem:[%s1 + $0x428] sm:$0xf]
  %v314 = vld [vmem:[%s1 + $0x42c] sm:$0xf]
  %v315 = vld [vmem:[%s1 + $0x430] sm:$0xf]
  %v316 = vld [vmem:[%s1 + $0x434] sm:$0xf]
  %v317 = vld [vmem:[%s1 + $0x438] sm:$0xf]
  %v318 = vld [vmem:[%s1 + $0x43c] sm:$0xf]
  %v319 = vld [vmem:[%s1 + $0x440] sm:$0xf]
  %v320 = vld [vmem:[%s1 + $0x444] sm:$0xf]
  %v321 = vld [vmem:[%s1 + $0x448] sm:$0xf]
  %v322 = vld [vmem:[%s1 + $0x44c] sm:$0xf]
  %v323 = vld [vmem:[%s1 + $0x450] sm:$0xf]
  %v324 = vld [vmem:[%s1 + $0x454] sm:$0xf]
  %v325 = vld [vmem:[%s1 + $0x458] sm:$0xf]
  %v326 = vld [vmem:[%s1 + $0x45c] sm:$0xf]
  %v327 = vld [vmem:[%s1 + $0x460] sm:$0xf]
  %v328 = vld [vmem:[%s1 + $0x464] sm:$0xf]
  %v329 = vld [vmem:[%s1 + $0x468] sm:$0xf]
  %v330 = vld [vmem:[%s1 + $0x46c] sm:$0xf]
  %v331 = vld [vmem:[%s1 + $0x470] sm:$0xf]
  %v332 = vld [vmem:[%s1 + $0x474] sm:$0xf]
  %v333 = vld [vmem:[%s1 + $0x478] sm:$0xf]
  %v334 = vld [vmem:[%s1 + $0x47c] sm:$0xf]
  %v335 = vld [vmem:[%s1 + $0x480] sm:$0xf]
  %v336 = vld [vmem:[%s1 + $0x484] sm:$0xf]
  %v337 = vld [vmem:[%s1 + $0x488] sm:$0xf]
  %v338 = vld [vmem:[%s1 + $0x48c] sm:$0xf]
  %v339 = vld [vmem:[%s1 + $0x490] sm:$0xf]
  %v340 = vld [vmem:[%s1 + $0x494] sm:$0xf]
  %v341 = vld [vmem:[%s1 + $0x498] sm:$0xf]
  %v342 = vld [vmem:[%s1 + $0x49c] sm:$0xf]
  %v343 = vld [vmem:[%s1 + $0x4a0] sm:$0xf]
  %v344 = vld [vmem:[%s1 + $0x4a4] sm:$0xf]
  %v345 = vld [vmem:[%s1 + $0x4a8] sm:$0xf]
  %v346 = vld [vmem:[%s1 + $0x4ac] sm:$0xf]
  %v347 = vld [vmem:[%s1 + $0x4b0] sm:$0xf]
  %v348 = vld [vmem:[%s1 + $0x4b4] sm:$0xf]
  %v349 = vld [vmem:[%s1 + $0x4b8] sm:$0xf]
  %v350 = vld [vmem:[%s1 + $0x4bc] sm:$0xf]
  %v351 = vld [vmem:[%s1 + $0x4c0] sm:$0xf]
  %v352 = vld [vmem:[%s1 + $0x4c4] sm:$0xf]
  %v353 = vld [vmem:[%s1 + $0x4c8] sm:$0xf]
  %v354 = vld [vmem:[%s1 + $0x4cc] sm:$0xf]
  %v355 = vld [vmem:[%s1 + $0x4d0] sm:$0xf]
  %v356 = vld [vmem:[%s1 + $0x4d4] sm:$0xf]
  %v357 = vld [vmem:[%s1 + $0x4d8] sm:$0xf]
  %v358 = vld [vmem:[%s1 + $0x4dc] sm:$0xf]
  %v359 = vld [vmem:[%s1 + $0x4e0] sm:$0xf]
  %v360 = vld [vmem:[%s1 + $0x4e4] sm:$0xf]
  %v361 = vld [vmem:[%s1 + $0x4e8] sm:$0xf]
  %v362 = vld [vmem:[%s1 + $0x4ec] sm:$0xf]
  %v363 = vld [vmem:[%s1 + $0x4f0] sm:$0xf]
  %v364 = vld [vmem:[%s1 + $0x4f4] sm:$0xf]
  %v365 = vld [vmem:[%s1 + $0x4f8] sm:$0xf]
  %v366 = vld [vmem:[%s1 + $0x4fc] sm:$0xf]
  %v367 = vld [vmem:[%s1 + $0x500] sm:$0xf]
  %v368 = vld [vmem:[%s1 + $0x504] sm:$0xf]
  %v369 = vld [vmem:[%s1 + $0x508] sm:$0xf]
  %v370 = vld [vmem:[%s1 + $0x50c] sm:$0xf]
  %v371 = vld [vmem:[%s1 + $0x510] sm:$0xf]
  %v372 = vld [vmem:[%s1 + $0x514] sm:$0xf]
  %v373 = vld [vmem:[%s1 + $0x518] sm:$0xf]
  %v374 = vld [vmem:[%s1 + $0x51c] sm:$0xf]
  %v375 = vld [vmem:[%s1 + $0x520] sm:$0xf]
  %v376 = vld [vmem:[%s1 + $0x524] sm:$0xf]
  %v377 = vld [vmem:[%s1 + $0x528] sm:$0xf]
  %v378 = vld [vmem:[%s1 + $0x52c] sm:$0xf]
  %v379 = vld [vmem:[%s1 + $0x530] sm:$0xf]
  %v380 = vld [vmem:[%s1 + $0x534] sm:$0xf]
  %v381 = vld [vmem:[%s1 + $0x538] sm:$0xf]
  %v382 = vld [vmem:[%s1 + $0x53c] sm:$0xf]
  %v383 = vld [vmem:[%s1 + $0x540] sm:$0xf]
  %v384 = vld [vmem:[%s1 + $0x544] sm:$0xf]
  %v385 = vld [vmem:[%s1 + $0x548] sm:$0xf]
  %v386 = vld [vmem:[%s1 + $0x54c] sm:$0xf]
  %v387 = vld [vmem:[%s1 + $0x550] sm:$0xf]
  %v388 = vld [vmem:[%s1 + $0x554] sm:$0xf]
  %v389 = vld [vmem:[%s1 + $0x558] sm:$0xf]
  %v390 = vld [vmem:[%s1 + $0x55c] sm:$0xf]
  %v391 = vld [vmem:[%s1 + $0x560] sm:$0xf]
  %v392 = vld [vmem:[%s1 + $0x564] sm:$0xf]
  %v393 = vld [vmem:[%s1 + $0x568] sm:$0xf]
  %v394 = vld [vmem:[%s1 + $0x56c] sm:$0xf]
  %v395 = vld [vmem:[%s1 + $0x570] sm:$0xf]
  %v396 = vld [vmem:[%s1 + $0x574] sm:$0xf]
  %v397 = vld [vmem:[%s1 + $0x578] sm:$0xf]
  %v398 = vld [vmem:[%s1 + $0x57c] sm:$0xf]
  %v399 = vld [vmem:[%s1 + $0x580] sm:$0xf]
  %v400 = vld [vmem:[%s1 + $0x584] sm:$0xf]
  %v401 = vld [vmem:[%s1 + $0x588] sm:$0xf]
  %v402 = vld [vmem:[%s1 + $0x58c] sm:$0xf]
  %v403 = vld [vmem:[%s1 + $0x590] sm:$0xf]
  %v404 = vld [vmem:[%s1 + $0x594] sm:$0xf]
  %v405 = vld [vmem:[%s1 + $0x598] sm:$0xf]
  %v406 = vld [vmem:[%s1 + $0x59c] sm:$0xf]
  %v407 = vld [vmem:[%s1 + $0x5a0] sm:$0xf]
  %v408 = vld [vmem:[%s1 + $0x5a4] sm:$0xf]
  %v409 = vld [vmem:[%s1 + $0x5a8] sm:$0xf]
  %v410 = vld [vmem:[%s1 + $0x5ac] sm:$0xf]
  %v411 = vld [vmem:[%s1 + $0x5b0] sm:$0xf]
  %v412 = vld [vmem:[%s1 + $0x5b4] sm:$0xf]
  %v413 = vld [vmem:[%s1 + $0x5b8] sm:$0xf]
  %v414 = vld [vmem:[%s1 + $0x5bc] sm:$0xf]
  %v415 = vld [vmem:[%s1 + $0x5c0] sm:$0xf]
  %v416 = vld [vmem:[%s1 + $0x5c4] sm:$0xf]
  %v417 = vld [vmem:[%s1 + $0x5c8] sm:$0xf]
  %v418 = vld [vmem:[%s1 + $0x5cc] sm:$0xf]
  %v419 = vld [vmem:[%s1 + $0x5d0] sm:$0xf]
  %v420 = vld [vmem:[%s1 + $0x5d4] sm:$0xf]
  %v421 = vld [vmem:[%s1 + $0x5d8] sm:$0xf]
  %v422 = vld [vmem:[%s1 + $0x5dc] sm:$0xf]
  %v423 = vld [vmem:[%s1 + $0x5e0] sm:$0xf]
  %v424 = vld [vmem:[%s1 + $0x5e4] sm:$0xf]
  %v425 = vld [vmem:[%s1 + $0x5e8] sm:$0xf]
  %v426 = vld [vmem:[%s1 + $0x5ec] sm:$0xf]
  %v427 = vld [vmem:[%s1 + $0x5f0] sm:$0xf]
  %v428 = vld [vmem:[%s1 + $0x5f4] sm:$0xf]
  %v429 = vld [vmem:[%s1 + $0x5f8] sm:$0xf]
  %v430 = vld [vmem:[%s1 + $0x5fc] sm:$0xf]
  %v431 = vld [vmem:[%s1 + $0x600] sm:$0xf]
  %v432 = vld [vmem:[%s1 + $0x604] sm:$0xf]
  %v433 = vld [vmem:[%s1 + $0x608] sm:$0xf]
  %v434 = vld [vmem:[%s1 + $0x60c] sm:$0xf]
  %v435 = vld [vmem:[%s1 + $0x610] sm:$0xf]
  %v436 = vld [vmem:[%s1 + $0x614] sm:$0xf]
  %v437 = vld [vmem:[%s1 + $0x618] sm:$0xf]
  %v438 = vld [vmem:[%s1 + $0x61c] sm:$0xf]
  %v439 = vld [vmem:[%s1 + $0x620] sm:$0xf]
  %v440 = vld [vmem:[%s1 + $0x624] sm:$0xf]
  %v441 = vld [vmem:[%s1 + $0x628] sm:$0xf]
  %v442 = vld [vmem:[%s1 + $0x62c] sm:$0xf]
  %v443 = vld [vmem:[%s1 + $0x630] sm:$0xf]
  %v444 = vld [vmem:[%s1 + $0x634] sm:$0xf]
  %v445 = vld [vmem:[%s1 + $0x638] sm:$0xf]
  %v446 = vld [vmem:[%s1 + $0x63c] sm:$0xf]
  %v447 = vld [vmem:[%s1 + $0x640] sm:$0xf]
  %v448 = vld [vmem:[%s1 + $0x644] sm:$0xf]
  %v449 = vld [vmem:[%s1 + $0x648] sm:$0xf]
  %v450 = vld [vmem:[%s1 + $0x64c] sm:$0xf]
  %v451 = vld [vmem:[%s1 + $0x650] sm:$0xf]
  %v452 = vld [vmem:[%s1 + $0x654] sm:$0xf]
  %v453 = vld [vmem:[%s1 + $0x658] sm:$0xf]
  %v454 = vld [vmem:[%s1 + $0x65c] sm:$0xf]
  %v455 = vld [vmem:[%s1 + $0x660] sm:$0xf]
  %v456 = vld [vmem:[%s1 + $0x664] sm:$0xf]
  %v457 = vld [vmem:[%s1 + $0x668] sm:$0xf]
  %v458 = vld [vmem:[%s1 + $0x66c] sm:$0xf]
  %v459 = vld [vmem:[%s1 + $0x670] sm:$0xf]
  %v460 = vld [vmem:[%s1 + $0x674] sm:$0xf]
  %v461 = vld [vmem:[%s1 + $0x678] sm:$0xf]
  %v462 = vld [vmem:[%s1 + $0x67c] sm:$0xf]
  %v463 = vld [vmem:[%s1 + $0x680] sm:$0xf]
  %v464 = vld [vmem:[%s1 + $0x684] sm:$0xf]
  %v465 = vld [vmem:[%s1 + $0x688] sm:$0xf]
  %v466 = vld [vmem:[%s1 + $0x68c] sm:$0xf]
  %v467 = vld [vmem:[%s1 + $0x690] sm:$0xf]
  %v468 = vld [vmem:[%s1 + $0x694] sm:$0xf]
  %v469 = vld [vmem:[%s1 + $0x698] sm:$0xf]
  %v470 = vld [vmem:[%s1 + $0x69c] sm:$0xf]
  %v471 = vld [vmem:[%s1 + $0x6a0] sm:$0xf]
  %v472 = vld [vmem:[%s1 + $0x6a4] sm:$0xf]
  %v473 = vld [vmem:[%s1 + $0x6a8] sm:$0xf]
  %v474 = vld [vmem:[%s1 + $0x6ac] sm:$0xf]
  %v475 = vld [vmem:[%s1 + $0x6b0] sm:$0xf]
  %v476 = vld [vmem:[%s1 + $0x6b4] sm:$0xf]
  %v477 = vld [vmem:[%s1 + $0x6b8] sm:$0xf]
  %v478 = vld [vmem:[%s1 + $0x6bc] sm:$0xf]
  %v479 = vld [vmem:[%s1 + $0x6c0] sm:$0xf]
  %v480 = vld [vmem:[%s1 + $0x6c4] sm:$0xf]
  %v481 = vld [vmem:[%s1 + $0x6c8] sm:$0xf]
  %v482 = vld [vmem:[%s1 + $0x6cc] sm:$0xf]
  %v483 = vld [vmem:[%s1 + $0x6d0] sm:$0xf]
  %v484 = vld [vmem:[%s1 + $0x6d4] sm:$0xf]
  %v485 = vld [vmem:[%s1 + $0x6d8] sm:$0xf]
  %v486 = vld [vmem:[%s1 + $0x6dc] sm:$0xf]
  %v487 = vld [vmem:[%s1 + $0x6e0] sm:$0xf]
  %v488 = vld [vmem:[%s1 + $0x6e4] sm:$0xf]
  %v489 = vld [vmem:[%s1 + $0x6e8] sm:$0xf]
  %v490 = vld [vmem:[%s1 + $0x6ec] sm:$0xf]
  %v491 = vld [vmem:[%s1 + $0x6f0] sm:$0xf]
  %v492 = vld [vmem:[%s1 + $0x6f4] sm:$0xf]
  %v493 = vld [vmem:[%s1 + $0x6f8] sm:$0xf]
  %v494 = vld [vmem:[%s1 + $0x6fc] sm:$0xf]
  %v495 = vld [vmem:[%s1 + $0x700] sm:$0xf]
  %v496 = vld [vmem:[%s1 + $0x704] sm:$0xf]
  %v497 = vld [vmem:[%s1 + $0x708] sm:$0xf]
  %v498 = vld [vmem:[%s1 + $0x70c] sm:$0xf]
  %v499 = vld [vmem:[%s1 + $0x710] sm:$0xf]
  %v500 = vld [vmem:[%s1 + $0x714] sm:$0xf]
  %v501 = vld [vmem:[%s1 + $0x718] sm:$0xf]
  %v502 = vld [vmem:[%s1 + $0x71c] sm:$0xf]
  %v503 = vld [vmem:[%s1 + $0x720] sm:$0xf]
  %v504 = vld [vmem:[%s1 + $0x724] sm:$0xf]
  %v505 = vld [vmem:[%s1 + $0x728] sm:$0xf]
  %v506 = vld [vmem:[%s1 + $0x72c] sm:$0xf]
  %v507 = vld [vmem:[%s1 + $0x730] sm:$0xf]
  %v508 = vld [vmem:[%s1 + $0x734] sm:$0xf]
  %v509 = vld [vmem:[%s1 + $0x738] sm:$0xf]
  %v510 = vld [vmem:[%s1 + $0x73c] sm:$0xf]
  %v511 = vld [vmem:[%s1 + $0x740] sm:$0xf]
  %v512 = vld [vmem:[%s1 + $0x744] sm:$0xf]
  %v513 = vld [vmem:[%s1 + $0x748] sm:$0xf]
  %v514 = vld [vmem:[%s1 + $0x74c] sm:$0xf]
  %v515 = vld [vmem:[%s1 + $0x750] sm:$0xf]
  %v516 = vld [vmem:[%s1 + $0x754] sm:$0xf]
  %v517 = vld [vmem:[%s1 + $0x758] sm:$0xf]
  %v518 = vld [vmem:[%s1 + $0x75c] sm:$0xf]
  %v519 = vld [vmem:[%s1 + $0x760] sm:$0xf]
  %v520 = vld [vmem:[%s1 + $0x764] sm:$0xf]
  %v521 = vld [vmem:[%s1 + $0x768] sm:$0xf]
  %v522 = vld [vmem:[%s1 + $0x76c] sm:$0xf]
  %v523 = vld [vmem:[%s1 + $0x770] sm:$0xf]
  %v524 = vld [vmem:[%s1 + $0x774] sm:$0xf]
  %v525 = vld [vmem:[%s1 + $0x778] sm:$0xf]
  %v526 = vld [vmem:[%s1 + $0x77c] sm:$0xf]
  %v527 = vld [vmem:[%s1 + $0x780] sm:$0xf]
  %v528 = vld [vmem:[%s1 + $0x784] sm:$0xf]
  %v529 = vld [vmem:[%s1 + $0x788] sm:$0xf]
  %v530 = vld [vmem:[%s1 + $0x78c] sm:$0xf]
  %v531 = vld [vmem:[%s1 + $0x790] sm:$0xf]
  %v532 = vld [vmem:[%s1 + $0x794] sm:$0xf]
  %v533 = vld [vmem:[%s1 + $0x798] sm:$0xf]
  %v534 = vld [vmem:[%s1 + $0x79c] sm:$0xf]
  %v535 = vld [vmem:[%s1 + $0x7a0] sm:$0xf]
  %v536 = vld [vmem:[%s1 + $0x7a4] sm:$0xf]
  %v537 = vld [vmem:[%s1 + $0x7a8] sm:$0xf]
  %v538 = vld [vmem:[%s1 + $0x7ac] sm:$0xf]
  %v539 = vld [vmem:[%s1 + $0x7b0] sm:$0xf]
  %v540 = vld [vmem:[%s1 + $0x7b4] sm:$0xf]
  %v541 = vld [vmem:[%s1 + $0x7b8] sm:$0xf]
  %v542 = vld [vmem:[%s1 + $0x7bc] sm:$0xf]
  %v543 = vld [vmem:[%s1 + $0x7c0] sm:$0xf]
  %v544 = vld [vmem:[%s1 + $0x7c4] sm:$0xf]
  %v545 = vld [vmem:[%s1 + $0x7c8] sm:$0xf]
  %v546 = vld [vmem:[%s1 + $0x7cc] sm:$0xf]
  %v547 = vld [vmem:[%s1 + $0x7d0] sm:$0xf]
  %v548 = vld [vmem:[%s1 + $0x7d4] sm:$0xf]
  %v549 = vld [vmem:[%s1 + $0x7d8] sm:$0xf]
  %v550 = vld [vmem:[%s1 + $0x7dc] sm:$0xf]
  %v551 = vld [vmem:[%s1 + $0x7e0] sm:$0xf]
  %v552 = vld [vmem:[%s1 + $0x7e4] sm:$0xf]
  %v553 = vld [vmem:[%s1 + $0x7e8] sm:$0xf]
  %v554 = vld [vmem:[%s1 + $0x7ec] sm:$0xf]
  %v555 = vld [vmem:[%s1 + $0x7f0] sm:$0xf]
  %v556 = vld [vmem:[%s1 + $0x7f4] sm:$0xf]
  %v557 = vld [vmem:[%s1 + $0x7f8] sm:$0xf]
  %v558 = vld [vmem:[%s1 + $0x7fc] sm:$0xf]
  %v559 = vld [vmem:[%s2] sm:$0x1]
  %v561 = vlaneseq
  %v562 = vshrl.u32 %v561, 7
  %v563 = vsub.s32 0, %v562
  %v564 = vrot.slane %v559, %v563
  %v598 = vunpack.c.l.b16 %v15
  %v599 = vunpack.c.h.b16 %v15
  %v600 = vunpack.c.l.b16 %v16
  %v601 = vunpack.c.h.b16 %v16
  %v602 = vunpack.c.l.b16 %v17
  %v603 = vunpack.c.h.b16 %v17
  %v604 = vunpack.c.l.b16 %v18
  %v605 = vunpack.c.h.b16 %v18
  %v606 = vunpack.c.l.b16 %v19
  %v607 = vunpack.c.h.b16 %v19
  %v608 = vunpack.c.l.b16 %v20
  %v609 = vunpack.c.h.b16 %v20
  %v610 = vunpack.c.l.b16 %v21
  %v611 = vunpack.c.h.b16 %v21
  %v612 = vunpack.c.l.b16 %v22
  %v613 = vunpack.c.h.b16 %v22
  %v614 = vunpack.c.l.b16 %v23
  %v615 = vunpack.c.h.b16 %v23
  %v616 = vunpack.c.l.b16 %v24
  %v617 = vunpack.c.h.b16 %v24
  %v618 = vunpack.c.l.b16 %v25
  %v619 = vunpack.c.h.b16 %v25
  %v620 = vunpack.c.l.b16 %v26
  %v621 = vunpack.c.h.b16 %v26
  %v622 = vunpack.c.l.b16 %v27
  %v623 = vunpack.c.h.b16 %v27
  %v624 = vunpack.c.l.b16 %v28
  %v625 = vunpack.c.h.b16 %v28
  %v626 = vunpack.c.l.b16 %v29
  %v627 = vunpack.c.h.b16 %v29
  %v628 = vunpack.c.l.b16 %v30
  %v629 = vunpack.c.h.b16 %v30
  %v630 = vunpack.c.l.b16 %v31
  %v631 = vunpack.c.h.b16 %v31
  %v632 = vunpack.c.l.b16 %v32
  %v633 = vunpack.c.h.b16 %v32
  %v634 = vunpack.c.l.b16 %v33
  %v635 = vunpack.c.h.b16 %v33
  %v636 = vunpack.c.l.b16 %v34
  %v637 = vunpack.c.h.b16 %v34
  %v638 = vunpack.c.l.b16 %v35
  %v639 = vunpack.c.h.b16 %v35
  %v640 = vunpack.c.l.b16 %v36
  %v641 = vunpack.c.h.b16 %v36
  %v642 = vunpack.c.l.b16 %v37
  %v643 = vunpack.c.h.b16 %v37
  %v644 = vunpack.c.l.b16 %v38
  %v645 = vunpack.c.h.b16 %v38
  %v646 = vunpack.c.l.b16 %v39
  %v647 = vunpack.c.h.b16 %v39
  %v648 = vunpack.c.l.b16 %v40
  %v649 = vunpack.c.h.b16 %v40
  %v650 = vunpack.c.l.b16 %v41
  %v651 = vunpack.c.h.b16 %v41
  %v652 = vunpack.c.l.b16 %v42
  %v653 = vunpack.c.h.b16 %v42
  %v654 = vunpack.c.l.b16 %v43
  %v655 = vunpack.c.h.b16 %v43
  %v656 = vunpack.c.l.b16 %v44
  %v657 = vunpack.c.h.b16 %v44
  %v658 = vunpack.c.l.b16 %v45
  %v659 = vunpack.c.h.b16 %v45
  %v660 = vunpack.c.l.b16 %v46
  %v661 = vunpack.c.h.b16 %v46
  %v662 = vpack.c.b16 %v630, %v598
  %v663 = vpack.c.b16 %v631, %v599
  %v664 = vpack.c.b16 %v632, %v600
  %v665 = vpack.c.b16 %v633, %v601
  %v666 = vpack.c.b16 %v634, %v602
  %v667 = vpack.c.b16 %v635, %v603
  %v668 = vpack.c.b16 %v636, %v604
  %v669 = vpack.c.b16 %v637, %v605
  %v670 = vpack.c.b16 %v638, %v606
  %v671 = vpack.c.b16 %v639, %v607
  %v672 = vpack.c.b16 %v640, %v608
  %v673 = vpack.c.b16 %v641, %v609
  %v674 = vpack.c.b16 %v642, %v610
  %v675 = vpack.c.b16 %v643, %v611
  %v676 = vpack.c.b16 %v644, %v612
  %v677 = vpack.c.b16 %v645, %v613
  %v678 = vpack.c.b16 %v646, %v614
  %v679 = vpack.c.b16 %v647, %v615
  %v680 = vpack.c.b16 %v648, %v616
  %v681 = vpack.c.b16 %v649, %v617
  %v682 = vpack.c.b16 %v650, %v618
  %v683 = vpack.c.b16 %v651, %v619
  %v684 = vpack.c.b16 %v652, %v620
  %v685 = vpack.c.b16 %v653, %v621
  %v686 = vpack.c.b16 %v654, %v622
  %v687 = vpack.c.b16 %v655, %v623
  %v688 = vpack.c.b16 %v656, %v624
  %v689 = vpack.c.b16 %v657, %v625
  %v690 = vpack.c.b16 %v658, %v626
  %v691 = vpack.c.b16 %v659, %v627
  %v692 = vpack.c.b16 %v660, %v628
  %v693 = vpack.c.b16 %v661, %v629
  %v1238 = vunpack.c.l.b16 %v47
  %v1239 = vunpack.c.l.b16 %v48
  %v1240 = vunpack.c.l.b16 %v49
  %v1241 = vunpack.c.l.b16 %v50
  %v1242 = vunpack.c.l.b16 %v51
  %v1243 = vunpack.c.l.b16 %v52
  %v1244 = vunpack.c.l.b16 %v53
  %v1245 = vunpack.c.l.b16 %v54
  %v1246 = vunpack.c.l.b16 %v55
  %v1247 = vunpack.c.l.b16 %v56
  %v1248 = vunpack.c.l.b16 %v57
  %v1249 = vunpack.c.l.b16 %v58
  %v1250 = vunpack.c.l.b16 %v59
  %v1251 = vunpack.c.l.b16 %v60
  %v1252 = vunpack.c.l.b16 %v61
  %v1253 = vunpack.c.l.b16 %v62
  %v1254 = vunpack.c.l.b16 %v63
  %v1255 = vunpack.c.l.b16 %v64
  %v1256 = vunpack.c.l.b16 %v65
  %v1257 = vunpack.c.l.b16 %v66
  %v1258 = vunpack.c.l.b16 %v67
  %v1259 = vunpack.c.l.b16 %v68
  %v1260 = vunpack.c.l.b16 %v69
  %v1261 = vunpack.c.l.b16 %v70
  %v1262 = vunpack.c.l.b16 %v71
  %v1263 = vunpack.c.l.b16 %v72
  %v1264 = vunpack.c.l.b16 %v73
  %v1265 = vunpack.c.l.b16 %v74
  %v1266 = vunpack.c.l.b16 %v75
  %v1267 = vunpack.c.l.b16 %v76
  %v1268 = vunpack.c.l.b16 %v77
  %v1269 = vunpack.c.l.b16 %v78
  %v1270 = vunpack.c.l.b16 %v79
  %v1271 = vunpack.c.l.b16 %v80
  %v1272 = vunpack.c.l.b16 %v81
  %v1273 = vunpack.c.l.b16 %v82
  %v1274 = vunpack.c.l.b16 %v83
  %v1275 = vunpack.c.l.b16 %v84
  %v1276 = vunpack.c.l.b16 %v85
  %v1277 = vunpack.c.l.b16 %v86
  %v1278 = vunpack.c.l.b16 %v87
  %v1279 = vunpack.c.l.b16 %v88
  %v1280 = vunpack.c.l.b16 %v89
  %v1281 = vunpack.c.l.b16 %v90
  %v1282 = vunpack.c.l.b16 %v91
  %v1283 = vunpack.c.l.b16 %v92
  %v1284 = vunpack.c.l.b16 %v93
  %v1285 = vunpack.c.l.b16 %v94
  %v1286 = vunpack.c.l.b16 %v95
  %v1287 = vunpack.c.l.b16 %v96
  %v1288 = vunpack.c.l.b16 %v97
  %v1289 = vunpack.c.l.b16 %v98
  %v1290 = vunpack.c.l.b16 %v99
  %v1291 = vunpack.c.l.b16 %v100
  %v1292 = vunpack.c.l.b16 %v101
  %v1293 = vunpack.c.l.b16 %v102
  %v1294 = vunpack.c.l.b16 %v103
  %v1295 = vunpack.c.l.b16 %v104
  %v1296 = vunpack.c.l.b16 %v105
  %v1297 = vunpack.c.l.b16 %v106
  %v1298 = vunpack.c.l.b16 %v107
  %v1299 = vunpack.c.l.b16 %v108
  %v1300 = vunpack.c.l.b16 %v109
  %v1301 = vunpack.c.l.b16 %v110
  %v1302 = vunpack.c.l.b16 %v111
  %v1303 = vunpack.c.l.b16 %v112
  %v1304 = vunpack.c.l.b16 %v113
  %v1305 = vunpack.c.l.b16 %v114
  %v1306 = vunpack.c.l.b16 %v115
  %v1307 = vunpack.c.l.b16 %v116
  %v1308 = vunpack.c.l.b16 %v117
  %v1309 = vunpack.c.l.b16 %v118
  %v1310 = vunpack.c.l.b16 %v119
  %v1311 = vunpack.c.l.b16 %v120
  %v1312 = vunpack.c.l.b16 %v121
  %v1313 = vunpack.c.l.b16 %v122
  %v1314 = vunpack.c.l.b16 %v123
  %v1315 = vunpack.c.l.b16 %v124
  %v1316 = vunpack.c.l.b16 %v125
  %v1317 = vunpack.c.l.b16 %v126
  %v1318 = vunpack.c.l.b16 %v127
  %v1319 = vunpack.c.l.b16 %v128
  %v1320 = vunpack.c.l.b16 %v129
  %v1321 = vunpack.c.l.b16 %v130
  %v1322 = vunpack.c.l.b16 %v131
  %v1323 = vunpack.c.l.b16 %v132
  %v1324 = vunpack.c.l.b16 %v133
  %v1325 = vunpack.c.l.b16 %v134
  %v1326 = vunpack.c.l.b16 %v135
  %v1327 = vunpack.c.l.b16 %v136
  %v1328 = vunpack.c.l.b16 %v137
  %v1329 = vunpack.c.l.b16 %v138
  %v1330 = vunpack.c.l.b16 %v139
  %v1331 = vunpack.c.l.b16 %v140
  %v1332 = vunpack.c.l.b16 %v141
  %v1333 = vunpack.c.l.b16 %v142
  %v1334 = vunpack.c.l.b16 %v143
  %v1335 = vunpack.c.l.b16 %v144
  %v1336 = vunpack.c.l.b16 %v145
  %v1337 = vunpack.c.l.b16 %v146
  %v1338 = vunpack.c.l.b16 %v147
  %v1339 = vunpack.c.l.b16 %v148
  %v1340 = vunpack.c.l.b16 %v149
  %v1341 = vunpack.c.l.b16 %v150
  %v1342 = vunpack.c.l.b16 %v151
  %v1343 = vunpack.c.l.b16 %v152
  %v1344 = vunpack.c.l.b16 %v153
  %v1345 = vunpack.c.l.b16 %v154
  %v1346 = vunpack.c.l.b16 %v155
  %v1347 = vunpack.c.l.b16 %v156
  %v1348 = vunpack.c.l.b16 %v157
  %v1349 = vunpack.c.l.b16 %v158
  %v1350 = vunpack.c.l.b16 %v159
  %v1351 = vunpack.c.l.b16 %v160
  %v1352 = vunpack.c.l.b16 %v161
  %v1353 = vunpack.c.l.b16 %v162
  %v1354 = vunpack.c.l.b16 %v163
  %v1355 = vunpack.c.l.b16 %v164
  %v1356 = vunpack.c.l.b16 %v165
  %v1357 = vunpack.c.l.b16 %v166
  %v1358 = vunpack.c.l.b16 %v167
  %v1359 = vunpack.c.l.b16 %v168
  %v1360 = vunpack.c.l.b16 %v169
  %v1361 = vunpack.c.l.b16 %v170
  %v1362 = vunpack.c.l.b16 %v171
  %v1363 = vunpack.c.l.b16 %v172
  %v1364 = vunpack.c.l.b16 %v173
  %v1365 = vunpack.c.l.b16 %v174
  %v1366 = vunpack.c.l.b16 %v175
  %v1367 = vunpack.c.l.b16 %v176
  %v1368 = vunpack.c.l.b16 %v177
  %v1369 = vunpack.c.l.b16 %v178
  %v1370 = vunpack.c.l.b16 %v179
  %v1371 = vunpack.c.l.b16 %v180
  %v1372 = vunpack.c.l.b16 %v181
  %v1373 = vunpack.c.l.b16 %v182
  %v1374 = vunpack.c.l.b16 %v183
  %v1375 = vunpack.c.l.b16 %v184
  %v1376 = vunpack.c.l.b16 %v185
  %v1377 = vunpack.c.l.b16 %v186
  %v1378 = vunpack.c.l.b16 %v187
  %v1379 = vunpack.c.l.b16 %v188
  %v1380 = vunpack.c.l.b16 %v189
  %v1381 = vunpack.c.l.b16 %v190
  %v1382 = vunpack.c.l.b16 %v191
  %v1383 = vunpack.c.l.b16 %v192
  %v1384 = vunpack.c.l.b16 %v193
  %v1385 = vunpack.c.l.b16 %v194
  %v1386 = vunpack.c.l.b16 %v195
  %v1387 = vunpack.c.l.b16 %v196
  %v1388 = vunpack.c.l.b16 %v197
  %v1389 = vunpack.c.l.b16 %v198
  %v1390 = vunpack.c.l.b16 %v199
  %v1391 = vunpack.c.l.b16 %v200
  %v1392 = vunpack.c.l.b16 %v201
  %v1393 = vunpack.c.l.b16 %v202
  %v1394 = vunpack.c.l.b16 %v203
  %v1395 = vunpack.c.l.b16 %v204
  %v1396 = vunpack.c.l.b16 %v205
  %v1397 = vunpack.c.l.b16 %v206
  %v1398 = vunpack.c.l.b16 %v207
  %v1399 = vunpack.c.l.b16 %v208
  %v1400 = vunpack.c.l.b16 %v209
  %v1401 = vunpack.c.l.b16 %v210
  %v1402 = vunpack.c.l.b16 %v211
  %v1403 = vunpack.c.l.b16 %v212
  %v1404 = vunpack.c.l.b16 %v213
  %v1405 = vunpack.c.l.b16 %v214
  %v1406 = vunpack.c.l.b16 %v215
  %v1407 = vunpack.c.l.b16 %v216
  %v1408 = vunpack.c.l.b16 %v217
  %v1409 = vunpack.c.l.b16 %v218
  %v1410 = vunpack.c.l.b16 %v219
  %v1411 = vunpack.c.l.b16 %v220
  %v1412 = vunpack.c.l.b16 %v221
  %v1413 = vunpack.c.l.b16 %v222
  %v1414 = vunpack.c.l.b16 %v223
  %v1415 = vunpack.c.l.b16 %v224
  %v1416 = vunpack.c.l.b16 %v225
  %v1417 = vunpack.c.l.b16 %v226
  %v1418 = vunpack.c.l.b16 %v227
  %v1419 = vunpack.c.l.b16 %v228
  %v1420 = vunpack.c.l.b16 %v229
  %v1421 = vunpack.c.l.b16 %v230
  %v1422 = vunpack.c.l.b16 %v231
  %v1423 = vunpack.c.l.b16 %v232
  %v1424 = vunpack.c.l.b16 %v233
  %v1425 = vunpack.c.l.b16 %v234
  %v1426 = vunpack.c.l.b16 %v235
  %v1427 = vunpack.c.l.b16 %v236
  %v1428 = vunpack.c.l.b16 %v237
  %v1429 = vunpack.c.l.b16 %v238
  %v1430 = vunpack.c.l.b16 %v239
  %v1431 = vunpack.c.l.b16 %v240
  %v1432 = vunpack.c.l.b16 %v241
  %v1433 = vunpack.c.l.b16 %v242
  %v1434 = vunpack.c.l.b16 %v243
  %v1435 = vunpack.c.l.b16 %v244
  %v1436 = vunpack.c.l.b16 %v245
  %v1437 = vunpack.c.l.b16 %v246
  %v1438 = vunpack.c.l.b16 %v247
  %v1439 = vunpack.c.l.b16 %v248
  %v1440 = vunpack.c.l.b16 %v249
  %v1441 = vunpack.c.l.b16 %v250
  %v1442 = vunpack.c.l.b16 %v251
  %v1443 = vunpack.c.l.b16 %v252
  %v1444 = vunpack.c.l.b16 %v253
  %v1445 = vunpack.c.l.b16 %v254
  %v1446 = vunpack.c.l.b16 %v255
  %v1447 = vunpack.c.l.b16 %v256
  %v1448 = vunpack.c.l.b16 %v257
  %v1449 = vunpack.c.l.b16 %v258
  %v1450 = vunpack.c.l.b16 %v259
  %v1451 = vunpack.c.l.b16 %v260
  %v1452 = vunpack.c.l.b16 %v261
  %v1453 = vunpack.c.l.b16 %v262
  %v1454 = vunpack.c.l.b16 %v263
  %v1455 = vunpack.c.l.b16 %v264
  %v1456 = vunpack.c.l.b16 %v265
  %v1457 = vunpack.c.l.b16 %v266
  %v1458 = vunpack.c.l.b16 %v267
  %v1459 = vunpack.c.l.b16 %v268
  %v1460 = vunpack.c.l.b16 %v269
  %v1461 = vunpack.c.l.b16 %v270
  %v1462 = vunpack.c.l.b16 %v271
  %v1463 = vunpack.c.l.b16 %v272
  %v1464 = vunpack.c.l.b16 %v273
  %v1465 = vunpack.c.l.b16 %v274
  %v1466 = vunpack.c.l.b16 %v275
  %v1467 = vunpack.c.l.b16 %v276
  %v1468 = vunpack.c.l.b16 %v277
  %v1469 = vunpack.c.l.b16 %v278
  %v1470 = vunpack.c.l.b16 %v279
  %v1471 = vunpack.c.l.b16 %v280
  %v1472 = vunpack.c.l.b16 %v281
  %v1473 = vunpack.c.l.b16 %v282
  %v1474 = vunpack.c.l.b16 %v283
  %v1475 = vunpack.c.l.b16 %v284
  %v1476 = vunpack.c.l.b16 %v285
  %v1477 = vunpack.c.l.b16 %v286
  %v1478 = vunpack.c.l.b16 %v287
  %v1479 = vunpack.c.l.b16 %v288
  %v1480 = vunpack.c.l.b16 %v289
  %v1481 = vunpack.c.l.b16 %v290
  %v1482 = vunpack.c.l.b16 %v291
  %v1483 = vunpack.c.l.b16 %v292
  %v1484 = vunpack.c.l.b16 %v293
  %v1485 = vunpack.c.l.b16 %v294
  %v1486 = vunpack.c.l.b16 %v295
  %v1487 = vunpack.c.l.b16 %v296
  %v1488 = vunpack.c.l.b16 %v297
  %v1489 = vunpack.c.l.b16 %v298
  %v1490 = vunpack.c.l.b16 %v299
  %v1491 = vunpack.c.l.b16 %v300
  %v1492 = vunpack.c.l.b16 %v301
  %v1493 = vunpack.c.l.b16 %v302
  %v1494 = vunpack.c.l.b16 %v303
  %v1495 = vunpack.c.l.b16 %v304
  %v1496 = vunpack.c.l.b16 %v305
  %v1497 = vunpack.c.l.b16 %v306
  %v1498 = vunpack.c.l.b16 %v307
  %v1499 = vunpack.c.l.b16 %v308
  %v1500 = vunpack.c.l.b16 %v309
  %v1501 = vunpack.c.l.b16 %v310
  %v1502 = vunpack.c.l.b16 %v311
  %v1503 = vunpack.c.l.b16 %v312
  %v1504 = vunpack.c.l.b16 %v313
  %v1505 = vunpack.c.l.b16 %v314
  %v1506 = vunpack.c.l.b16 %v315
  %v1507 = vunpack.c.l.b16 %v316
  %v1508 = vunpack.c.l.b16 %v317
  %v1509 = vunpack.c.l.b16 %v318
  %v1510 = vunpack.c.l.b16 %v319
  %v1511 = vunpack.c.l.b16 %v320
  %v1512 = vunpack.c.l.b16 %v321
  %v1513 = vunpack.c.l.b16 %v322
  %v1514 = vunpack.c.l.b16 %v323
  %v1515 = vunpack.c.l.b16 %v324
  %v1516 = vunpack.c.l.b16 %v325
  %v1517 = vunpack.c.l.b16 %v326
  %v1518 = vunpack.c.l.b16 %v327
  %v1519 = vunpack.c.l.b16 %v328
  %v1520 = vunpack.c.l.b16 %v329
  %v1521 = vunpack.c.l.b16 %v330
  %v1522 = vunpack.c.l.b16 %v331
  %v1523 = vunpack.c.l.b16 %v332
  %v1524 = vunpack.c.l.b16 %v333
  %v1525 = vunpack.c.l.b16 %v334
  %v1526 = vunpack.c.l.b16 %v335
  %v1527 = vunpack.c.l.b16 %v336
  %v1528 = vunpack.c.l.b16 %v337
  %v1529 = vunpack.c.l.b16 %v338
  %v1530 = vunpack.c.l.b16 %v339
  %v1531 = vunpack.c.l.b16 %v340
  %v1532 = vunpack.c.l.b16 %v341
  %v1533 = vunpack.c.l.b16 %v342
  %v1534 = vunpack.c.l.b16 %v343
  %v1535 = vunpack.c.l.b16 %v344
  %v1536 = vunpack.c.l.b16 %v345
  %v1537 = vunpack.c.l.b16 %v346
  %v1538 = vunpack.c.l.b16 %v347
  %v1539 = vunpack.c.l.b16 %v348
  %v1540 = vunpack.c.l.b16 %v349
  %v1541 = vunpack.c.l.b16 %v350
  %v1542 = vunpack.c.l.b16 %v351
  %v1543 = vunpack.c.l.b16 %v352
  %v1544 = vunpack.c.l.b16 %v353
  %v1545 = vunpack.c.l.b16 %v354
  %v1546 = vunpack.c.l.b16 %v355
  %v1547 = vunpack.c.l.b16 %v356
  %v1548 = vunpack.c.l.b16 %v357
  %v1549 = vunpack.c.l.b16 %v358
  %v1550 = vunpack.c.l.b16 %v359
  %v1551 = vunpack.c.l.b16 %v360
  %v1552 = vunpack.c.l.b16 %v361
  %v1553 = vunpack.c.l.b16 %v362
  %v1554 = vunpack.c.l.b16 %v363
  %v1555 = vunpack.c.l.b16 %v364
  %v1556 = vunpack.c.l.b16 %v365
  %v1557 = vunpack.c.l.b16 %v366
  %v1558 = vunpack.c.l.b16 %v367
  %v1559 = vunpack.c.l.b16 %v368
  %v1560 = vunpack.c.l.b16 %v369
  %v1561 = vunpack.c.l.b16 %v370
  %v1562 = vunpack.c.l.b16 %v371
  %v1563 = vunpack.c.l.b16 %v372
  %v1564 = vunpack.c.l.b16 %v373
  %v1565 = vunpack.c.l.b16 %v374
  %v1566 = vunpack.c.l.b16 %v375
  %v1567 = vunpack.c.l.b16 %v376
  %v1568 = vunpack.c.l.b16 %v377
  %v1569 = vunpack.c.l.b16 %v378
  %v1570 = vunpack.c.l.b16 %v379
  %v1571 = vunpack.c.l.b16 %v380
  %v1572 = vunpack.c.l.b16 %v381
  %v1573 = vunpack.c.l.b16 %v382
  %v1574 = vunpack.c.l.b16 %v383
  %v1575 = vunpack.c.l.b16 %v384
  %v1576 = vunpack.c.l.b16 %v385
  %v1577 = vunpack.c.l.b16 %v386
  %v1578 = vunpack.c.l.b16 %v387
  %v1579 = vunpack.c.l.b16 %v388
  %v1580 = vunpack.c.l.b16 %v389
  %v1581 = vunpack.c.l.b16 %v390
  %v1582 = vunpack.c.l.b16 %v391
  %v1583 = vunpack.c.l.b16 %v392
  %v1584 = vunpack.c.l.b16 %v393
  %v1585 = vunpack.c.l.b16 %v394
  %v1586 = vunpack.c.l.b16 %v395
  %v1587 = vunpack.c.l.b16 %v396
  %v1588 = vunpack.c.l.b16 %v397
  %v1589 = vunpack.c.l.b16 %v398
  %v1590 = vunpack.c.l.b16 %v399
  %v1591 = vunpack.c.l.b16 %v400
  %v1592 = vunpack.c.l.b16 %v401
  %v1593 = vunpack.c.l.b16 %v402
  %v1594 = vunpack.c.l.b16 %v403
  %v1595 = vunpack.c.l.b16 %v404
  %v1596 = vunpack.c.l.b16 %v405
  %v1597 = vunpack.c.l.b16 %v406
  %v1598 = vunpack.c.l.b16 %v407
  %v1599 = vunpack.c.l.b16 %v408
  %v1600 = vunpack.c.l.b16 %v409
  %v1601 = vunpack.c.l.b16 %v410
  %v1602 = vunpack.c.l.b16 %v411
  %v1603 = vunpack.c.l.b16 %v412
  %v1604 = vunpack.c.l.b16 %v413
  %v1605 = vunpack.c.l.b16 %v414
  %v1606 = vunpack.c.l.b16 %v415
  %v1607 = vunpack.c.l.b16 %v416
  %v1608 = vunpack.c.l.b16 %v417
  %v1609 = vunpack.c.l.b16 %v418
  %v1610 = vunpack.c.l.b16 %v419
  %v1611 = vunpack.c.l.b16 %v420
  %v1612 = vunpack.c.l.b16 %v421
  %v1613 = vunpack.c.l.b16 %v422
  %v1614 = vunpack.c.l.b16 %v423
  %v1615 = vunpack.c.l.b16 %v424
  %v1616 = vunpack.c.l.b16 %v425
  %v1617 = vunpack.c.l.b16 %v426
  %v1618 = vunpack.c.l.b16 %v427
  %v1619 = vunpack.c.l.b16 %v428
  %v1620 = vunpack.c.l.b16 %v429
  %v1621 = vunpack.c.l.b16 %v430
  %v1622 = vunpack.c.l.b16 %v431
  %v1623 = vunpack.c.l.b16 %v432
  %v1624 = vunpack.c.l.b16 %v433
  %v1625 = vunpack.c.l.b16 %v434
  %v1626 = vunpack.c.l.b16 %v435
  %v1627 = vunpack.c.l.b16 %v436
  %v1628 = vunpack.c.l.b16 %v437
  %v1629 = vunpack.c.l.b16 %v438
  %v1630 = vunpack.c.l.b16 %v439
  %v1631 = vunpack.c.l.b16 %v440
  %v1632 = vunpack.c.l.b16 %v441
  %v1633 = vunpack.c.l.b16 %v442
  %v1634 = vunpack.c.l.b16 %v443
  %v1635 = vunpack.c.l.b16 %v444
  %v1636 = vunpack.c.l.b16 %v445
  %v1637 = vunpack.c.l.b16 %v446
  %v1638 = vunpack.c.l.b16 %v447
  %v1639 = vunpack.c.l.b16 %v448
  %v1640 = vunpack.c.l.b16 %v449
  %v1641 = vunpack.c.l.b16 %v450
  %v1642 = vunpack.c.l.b16 %v451
  %v1643 = vunpack.c.l.b16 %v452
  %v1644 = vunpack.c.l.b16 %v453
  %v1645 = vunpack.c.l.b16 %v454
  %v1646 = vunpack.c.l.b16 %v455
  %v1647 = vunpack.c.l.b16 %v456
  %v1648 = vunpack.c.l.b16 %v457
  %v1649 = vunpack.c.l.b16 %v458
  %v1650 = vunpack.c.l.b16 %v459
  %v1651 = vunpack.c.l.b16 %v460
  %v1652 = vunpack.c.l.b16 %v461
  %v1653 = vunpack.c.l.b16 %v462
  %v1654 = vunpack.c.l.b16 %v463
  %v1655 = vunpack.c.l.b16 %v464
  %v1656 = vunpack.c.l.b16 %v465
  %v1657 = vunpack.c.l.b16 %v466
  %v1658 = vunpack.c.l.b16 %v467
  %v1659 = vunpack.c.l.b16 %v468
  %v1660 = vunpack.c.l.b16 %v469
  %v1661 = vunpack.c.l.b16 %v470
  %v1662 = vunpack.c.l.b16 %v471
  %v1663 = vunpack.c.l.b16 %v472
  %v1664 = vunpack.c.l.b16 %v473
  %v1665 = vunpack.c.l.b16 %v474
  %v1666 = vunpack.c.l.b16 %v475
  %v1667 = vunpack.c.l.b16 %v476
  %v1668 = vunpack.c.l.b16 %v477
  %v1669 = vunpack.c.l.b16 %v478
  %v1670 = vunpack.c.l.b16 %v479
  %v1671 = vunpack.c.l.b16 %v480
  %v1672 = vunpack.c.l.b16 %v481
  %v1673 = vunpack.c.l.b16 %v482
  %v1674 = vunpack.c.l.b16 %v483
  %v1675 = vunpack.c.l.b16 %v484
  %v1676 = vunpack.c.l.b16 %v485
  %v1677 = vunpack.c.l.b16 %v486
  %v1678 = vunpack.c.l.b16 %v487
  %v1679 = vunpack.c.l.b16 %v488
  %v1680 = vunpack.c.l.b16 %v489
  %v1681 = vunpack.c.l.b16 %v490
  %v1682 = vunpack.c.l.b16 %v491
  %v1683 = vunpack.c.l.b16 %v492
  %v1684 = vunpack.c.l.b16 %v493
  %v1685 = vunpack.c.l.b16 %v494
  %v1686 = vunpack.c.l.b16 %v495
  %v1687 = vunpack.c.l.b16 %v496
  %v1688 = vunpack.c.l.b16 %v497
  %v1689 = vunpack.c.l.b16 %v498
  %v1690 = vunpack.c.l.b16 %v499
  %v1691 = vunpack.c.l.b16 %v500
  %v1692 = vunpack.c.l.b16 %v501
  %v1693 = vunpack.c.l.b16 %v502
  %v1694 = vunpack.c.l.b16 %v503
  %v1695 = vunpack.c.l.b16 %v504
  %v1696 = vunpack.c.l.b16 %v505
  %v1697 = vunpack.c.l.b16 %v506
  %v1698 = vunpack.c.l.b16 %v507
  %v1699 = vunpack.c.l.b16 %v508
  %v1700 = vunpack.c.l.b16 %v509
  %v1701 = vunpack.c.l.b16 %v510
  %v1702 = vunpack.c.l.b16 %v511
  %v1703 = vunpack.c.l.b16 %v512
  %v1704 = vunpack.c.l.b16 %v513
  %v1705 = vunpack.c.l.b16 %v514
  %v1706 = vunpack.c.l.b16 %v515
  %v1707 = vunpack.c.l.b16 %v516
  %v1708 = vunpack.c.l.b16 %v517
  %v1709 = vunpack.c.l.b16 %v518
  %v1710 = vunpack.c.l.b16 %v519
  %v1711 = vunpack.c.l.b16 %v520
  %v1712 = vunpack.c.l.b16 %v521
  %v1713 = vunpack.c.l.b16 %v522
  %v1714 = vunpack.c.l.b16 %v523
  %v1715 = vunpack.c.l.b16 %v524
  %v1716 = vunpack.c.l.b16 %v525
  %v1717 = vunpack.c.l.b16 %v526
  %v1718 = vunpack.c.l.b16 %v527
  %v1719 = vunpack.c.l.b16 %v528
  %v1720 = vunpack.c.l.b16 %v529
  %v1721 = vunpack.c.l.b16 %v530
  %v1722 = vunpack.c.l.b16 %v531
  %v1723 = vunpack.c.l.b16 %v532
  %v1724 = vunpack.c.l.b16 %v533
  %v1725 = vunpack.c.l.b16 %v534
  %v1726 = vunpack.c.l.b16 %v535
  %v1727 = vunpack.c.l.b16 %v536
  %v1728 = vunpack.c.l.b16 %v537
  %v1729 = vunpack.c.l.b16 %v538
  %v1730 = vunpack.c.l.b16 %v539
  %v1731 = vunpack.c.l.b16 %v540
  %v1732 = vunpack.c.l.b16 %v541
  %v1733 = vunpack.c.l.b16 %v542
  %v1734 = vunpack.c.l.b16 %v543
  %v1735 = vunpack.c.l.b16 %v544
  %v1736 = vunpack.c.l.b16 %v545
  %v1737 = vunpack.c.l.b16 %v546
  %v1738 = vunpack.c.l.b16 %v547
  %v1739 = vunpack.c.l.b16 %v548
  %v1740 = vunpack.c.l.b16 %v549
  %v1741 = vunpack.c.l.b16 %v550
  %v1742 = vunpack.c.l.b16 %v551
  %v1743 = vunpack.c.l.b16 %v552
  %v1744 = vunpack.c.l.b16 %v553
  %v1745 = vunpack.c.l.b16 %v554
  %v1746 = vunpack.c.l.b16 %v555
  %v1747 = vunpack.c.l.b16 %v556
  %v1748 = vunpack.c.l.b16 %v557
  %v1749 = vunpack.c.l.b16 %v558
  %v1750 = vpack.c.b16 %v1239, %v1238
  %v1751 = vpack.c.b16 %v1241, %v1240
  %v1752 = vpack.c.b16 %v1243, %v1242
  %v1753 = vpack.c.b16 %v1245, %v1244
  %v1754 = vpack.c.b16 %v1247, %v1246
  %v1755 = vpack.c.b16 %v1249, %v1248
  %v1756 = vpack.c.b16 %v1251, %v1250
  %v1757 = vpack.c.b16 %v1253, %v1252
  %v1758 = vpack.c.b16 %v1255, %v1254
  %v1759 = vpack.c.b16 %v1257, %v1256
  %v1760 = vpack.c.b16 %v1259, %v1258
  %v1761 = vpack.c.b16 %v1261, %v1260
  %v1762 = vpack.c.b16 %v1263, %v1262
  %v1763 = vpack.c.b16 %v1265, %v1264
  %v1764 = vpack.c.b16 %v1267, %v1266
  %v1765 = vpack.c.b16 %v1269, %v1268
  %v1766 = vpack.c.b16 %v1271, %v1270
  %v1767 = vpack.c.b16 %v1273, %v1272
  %v1768 = vpack.c.b16 %v1275, %v1274
  %v1769 = vpack.c.b16 %v1277, %v1276
  %v1770 = vpack.c.b16 %v1279, %v1278
  %v1771 = vpack.c.b16 %v1281, %v1280
  %v1772 = vpack.c.b16 %v1283, %v1282
  %v1773 = vpack.c.b16 %v1285, %v1284
  %v1774 = vpack.c.b16 %v1287, %v1286
  %v1775 = vpack.c.b16 %v1289, %v1288
  %v1776 = vpack.c.b16 %v1291, %v1290
  %v1777 = vpack.c.b16 %v1293, %v1292
  %v1778 = vpack.c.b16 %v1295, %v1294
  %v1779 = vpack.c.b16 %v1297, %v1296
  %v1780 = vpack.c.b16 %v1299, %v1298
  %v1781 = vpack.c.b16 %v1301, %v1300
  %v1782 = vpack.c.b16 %v1303, %v1302
  %v1783 = vpack.c.b16 %v1305, %v1304
  %v1784 = vpack.c.b16 %v1307, %v1306
  %v1785 = vpack.c.b16 %v1309, %v1308
  %v1786 = vpack.c.b16 %v1311, %v1310
  %v1787 = vpack.c.b16 %v1313, %v1312
  %v1788 = vpack.c.b16 %v1315, %v1314
  %v1789 = vpack.c.b16 %v1317, %v1316
  %v1790 = vpack.c.b16 %v1319, %v1318
  %v1791 = vpack.c.b16 %v1321, %v1320
  %v1792 = vpack.c.b16 %v1323, %v1322
  %v1793 = vpack.c.b16 %v1325, %v1324
  %v1794 = vpack.c.b16 %v1327, %v1326
  %v1795 = vpack.c.b16 %v1329, %v1328
  %v1796 = vpack.c.b16 %v1331, %v1330
  %v1797 = vpack.c.b16 %v1333, %v1332
  %v1798 = vpack.c.b16 %v1335, %v1334
  %v1799 = vpack.c.b16 %v1337, %v1336
  %v1800 = vpack.c.b16 %v1339, %v1338
  %v1801 = vpack.c.b16 %v1341, %v1340
  %v1802 = vpack.c.b16 %v1343, %v1342
  %v1803 = vpack.c.b16 %v1345, %v1344
  %v1804 = vpack.c.b16 %v1347, %v1346
  %v1805 = vpack.c.b16 %v1349, %v1348
  %v1806 = vpack.c.b16 %v1351, %v1350
  %v1807 = vpack.c.b16 %v1353, %v1352
  %v1808 = vpack.c.b16 %v1355, %v1354
  %v1809 = vpack.c.b16 %v1357, %v1356
  %v1810 = vpack.c.b16 %v1359, %v1358
  %v1811 = vpack.c.b16 %v1361, %v1360
  %v1812 = vpack.c.b16 %v1363, %v1362
  %v1813 = vpack.c.b16 %v1365, %v1364
  %v1814 = vpack.c.b16 %v1367, %v1366
  %v1815 = vpack.c.b16 %v1369, %v1368
  %v1816 = vpack.c.b16 %v1371, %v1370
  %v1817 = vpack.c.b16 %v1373, %v1372
  %v1818 = vpack.c.b16 %v1375, %v1374
  %v1819 = vpack.c.b16 %v1377, %v1376
  %v1820 = vpack.c.b16 %v1379, %v1378
  %v1821 = vpack.c.b16 %v1381, %v1380
  %v1822 = vpack.c.b16 %v1383, %v1382
  %v1823 = vpack.c.b16 %v1385, %v1384
  %v1824 = vpack.c.b16 %v1387, %v1386
  %v1825 = vpack.c.b16 %v1389, %v1388
  %v1826 = vpack.c.b16 %v1391, %v1390
  %v1827 = vpack.c.b16 %v1393, %v1392
  %v1828 = vpack.c.b16 %v1395, %v1394
  %v1829 = vpack.c.b16 %v1397, %v1396
  %v1830 = vpack.c.b16 %v1399, %v1398
  %v1831 = vpack.c.b16 %v1401, %v1400
  %v1832 = vpack.c.b16 %v1403, %v1402
  %v1833 = vpack.c.b16 %v1405, %v1404
  %v1834 = vpack.c.b16 %v1407, %v1406
  %v1835 = vpack.c.b16 %v1409, %v1408
  %v1836 = vpack.c.b16 %v1411, %v1410
  %v1837 = vpack.c.b16 %v1413, %v1412
  %v1838 = vpack.c.b16 %v1415, %v1414
  %v1839 = vpack.c.b16 %v1417, %v1416
  %v1840 = vpack.c.b16 %v1419, %v1418
  %v1841 = vpack.c.b16 %v1421, %v1420
  %v1842 = vpack.c.b16 %v1423, %v1422
  %v1843 = vpack.c.b16 %v1425, %v1424
  %v1844 = vpack.c.b16 %v1427, %v1426
  %v1845 = vpack.c.b16 %v1429, %v1428
  %v1846 = vpack.c.b16 %v1431, %v1430
  %v1847 = vpack.c.b16 %v1433, %v1432
  %v1848 = vpack.c.b16 %v1435, %v1434
  %v1849 = vpack.c.b16 %v1437, %v1436
  %v1850 = vpack.c.b16 %v1439, %v1438
  %v1851 = vpack.c.b16 %v1441, %v1440
  %v1852 = vpack.c.b16 %v1443, %v1442
  %v1853 = vpack.c.b16 %v1445, %v1444
  %v1854 = vpack.c.b16 %v1447, %v1446
  %v1855 = vpack.c.b16 %v1449, %v1448
  %v1856 = vpack.c.b16 %v1451, %v1450
  %v1857 = vpack.c.b16 %v1453, %v1452
  %v1858 = vpack.c.b16 %v1455, %v1454
  %v1859 = vpack.c.b16 %v1457, %v1456
  %v1860 = vpack.c.b16 %v1459, %v1458
  %v1861 = vpack.c.b16 %v1461, %v1460
  %v1862 = vpack.c.b16 %v1463, %v1462
  %v1863 = vpack.c.b16 %v1465, %v1464
  %v1864 = vpack.c.b16 %v1467, %v1466
  %v1865 = vpack.c.b16 %v1469, %v1468
  %v1866 = vpack.c.b16 %v1471, %v1470
  %v1867 = vpack.c.b16 %v1473, %v1472
  %v1868 = vpack.c.b16 %v1475, %v1474
  %v1869 = vpack.c.b16 %v1477, %v1476
  %v1870 = vpack.c.b16 %v1479, %v1478
  %v1871 = vpack.c.b16 %v1481, %v1480
  %v1872 = vpack.c.b16 %v1483, %v1482
  %v1873 = vpack.c.b16 %v1485, %v1484
  %v1874 = vpack.c.b16 %v1487, %v1486
  %v1875 = vpack.c.b16 %v1489, %v1488
  %v1876 = vpack.c.b16 %v1491, %v1490
  %v1877 = vpack.c.b16 %v1493, %v1492
  %v1878 = vpack.c.b16 %v1495, %v1494
  %v1879 = vpack.c.b16 %v1497, %v1496
  %v1880 = vpack.c.b16 %v1499, %v1498
  %v1881 = vpack.c.b16 %v1501, %v1500
  %v1882 = vpack.c.b16 %v1503, %v1502
  %v1883 = vpack.c.b16 %v1505, %v1504
  %v1884 = vpack.c.b16 %v1507, %v1506
  %v1885 = vpack.c.b16 %v1509, %v1508
  %v1886 = vpack.c.b16 %v1511, %v1510
  %v1887 = vpack.c.b16 %v1513, %v1512
  %v1888 = vpack.c.b16 %v1515, %v1514
  %v1889 = vpack.c.b16 %v1517, %v1516
  %v1890 = vpack.c.b16 %v1519, %v1518
  %v1891 = vpack.c.b16 %v1521, %v1520
  %v1892 = vpack.c.b16 %v1523, %v1522
  %v1893 = vpack.c.b16 %v1525, %v1524
  %v1894 = vpack.c.b16 %v1527, %v1526
  %v1895 = vpack.c.b16 %v1529, %v1528
  %v1896 = vpack.c.b16 %v1531, %v1530
  %v1897 = vpack.c.b16 %v1533, %v1532
  %v1898 = vpack.c.b16 %v1535, %v1534
  %v1899 = vpack.c.b16 %v1537, %v1536
  %v1900 = vpack.c.b16 %v1539, %v1538
  %v1901 = vpack.c.b16 %v1541, %v1540
  %v1902 = vpack.c.b16 %v1543, %v1542
  %v1903 = vpack.c.b16 %v1545, %v1544
  %v1904 = vpack.c.b16 %v1547, %v1546
  %v1905 = vpack.c.b16 %v1549, %v1548
  %v1906 = vpack.c.b16 %v1551, %v1550
  %v1907 = vpack.c.b16 %v1553, %v1552
  %v1908 = vpack.c.b16 %v1555, %v1554
  %v1909 = vpack.c.b16 %v1557, %v1556
  %v1910 = vpack.c.b16 %v1559, %v1558
  %v1911 = vpack.c.b16 %v1561, %v1560
  %v1912 = vpack.c.b16 %v1563, %v1562
  %v1913 = vpack.c.b16 %v1565, %v1564
  %v1914 = vpack.c.b16 %v1567, %v1566
  %v1915 = vpack.c.b16 %v1569, %v1568
  %v1916 = vpack.c.b16 %v1571, %v1570
  %v1917 = vpack.c.b16 %v1573, %v1572
  %v1918 = vpack.c.b16 %v1575, %v1574
  %v1919 = vpack.c.b16 %v1577, %v1576
  %v1920 = vpack.c.b16 %v1579, %v1578
  %v1921 = vpack.c.b16 %v1581, %v1580
  %v1922 = vpack.c.b16 %v1583, %v1582
  %v1923 = vpack.c.b16 %v1585, %v1584
  %v1924 = vpack.c.b16 %v1587, %v1586
  %v1925 = vpack.c.b16 %v1589, %v1588
  %v1926 = vpack.c.b16 %v1591, %v1590
  %v1927 = vpack.c.b16 %v1593, %v1592
  %v1928 = vpack.c.b16 %v1595, %v1594
  %v1929 = vpack.c.b16 %v1597, %v1596
  %v1930 = vpack.c.b16 %v1599, %v1598
  %v1931 = vpack.c.b16 %v1601, %v1600
  %v1932 = vpack.c.b16 %v1603, %v1602
  %v1933 = vpack.c.b16 %v1605, %v1604
  %v1934 = vpack.c.b16 %v1607, %v1606
  %v1935 = vpack.c.b16 %v1609, %v1608
  %v1936 = vpack.c.b16 %v1611, %v1610
  %v1937 = vpack.c.b16 %v1613, %v1612
  %v1938 = vpack.c.b16 %v1615, %v1614
  %v1939 = vpack.c.b16 %v1617, %v1616
  %v1940 = vpack.c.b16 %v1619, %v1618
  %v1941 = vpack.c.b16 %v1621, %v1620
  %v1942 = vpack.c.b16 %v1623, %v1622
  %v1943 = vpack.c.b16 %v1625, %v1624
  %v1944 = vpack.c.b16 %v1627, %v1626
  %v1945 = vpack.c.b16 %v1629, %v1628
  %v1946 = vpack.c.b16 %v1631, %v1630
  %v1947 = vpack.c.b16 %v1633, %v1632
  %v1948 = vpack.c.b16 %v1635, %v1634
  %v1949 = vpack.c.b16 %v1637, %v1636
  %v1950 = vpack.c.b16 %v1639, %v1638
  %v1951 = vpack.c.b16 %v1641, %v1640
  %v1952 = vpack.c.b16 %v1643, %v1642
  %v1953 = vpack.c.b16 %v1645, %v1644
  %v1954 = vpack.c.b16 %v1647, %v1646
  %v1955 = vpack.c.b16 %v1649, %v1648
  %v1956 = vpack.c.b16 %v1651, %v1650
  %v1957 = vpack.c.b16 %v1653, %v1652
  %v1958 = vpack.c.b16 %v1655, %v1654
  %v1959 = vpack.c.b16 %v1657, %v1656
  %v1960 = vpack.c.b16 %v1659, %v1658
  %v1961 = vpack.c.b16 %v1661, %v1660
  %v1962 = vpack.c.b16 %v1663, %v1662
  %v1963 = vpack.c.b16 %v1665, %v1664
  %v1964 = vpack.c.b16 %v1667, %v1666
  %v1965 = vpack.c.b16 %v1669, %v1668
  %v1966 = vpack.c.b16 %v1671, %v1670
  %v1967 = vpack.c.b16 %v1673, %v1672
  %v1968 = vpack.c.b16 %v1675, %v1674
  %v1969 = vpack.c.b16 %v1677, %v1676
  %v1970 = vpack.c.b16 %v1679, %v1678
  %v1971 = vpack.c.b16 %v1681, %v1680
  %v1972 = vpack.c.b16 %v1683, %v1682
  %v1973 = vpack.c.b16 %v1685, %v1684
  %v1974 = vpack.c.b16 %v1687, %v1686
  %v1975 = vpack.c.b16 %v1689, %v1688
  %v1976 = vpack.c.b16 %v1691, %v1690
  %v1977 = vpack.c.b16 %v1693, %v1692
  %v1978 = vpack.c.b16 %v1695, %v1694
  %v1979 = vpack.c.b16 %v1697, %v1696
  %v1980 = vpack.c.b16 %v1699, %v1698
  %v1981 = vpack.c.b16 %v1701, %v1700
  %v1982 = vpack.c.b16 %v1703, %v1702
  %v1983 = vpack.c.b16 %v1705, %v1704
  %v1984 = vpack.c.b16 %v1707, %v1706
  %v1985 = vpack.c.b16 %v1709, %v1708
  %v1986 = vpack.c.b16 %v1711, %v1710
  %v1987 = vpack.c.b16 %v1713, %v1712
  %v1988 = vpack.c.b16 %v1715, %v1714
  %v1989 = vpack.c.b16 %v1717, %v1716
  %v1990 = vpack.c.b16 %v1719, %v1718
  %v1991 = vpack.c.b16 %v1721, %v1720
  %v1992 = vpack.c.b16 %v1723, %v1722
  %v1993 = vpack.c.b16 %v1725, %v1724
  %v1994 = vpack.c.b16 %v1727, %v1726
  %v1995 = vpack.c.b16 %v1729, %v1728
  %v1996 = vpack.c.b16 %v1731, %v1730
  %v1997 = vpack.c.b16 %v1733, %v1732
  %v1998 = vpack.c.b16 %v1735, %v1734
  %v1999 = vpack.c.b16 %v1737, %v1736
  %v2000 = vpack.c.b16 %v1739, %v1738
  %v2001 = vpack.c.b16 %v1741, %v1740
  %v2002 = vpack.c.b16 %v1743, %v1742
  %v2003 = vpack.c.b16 %v1745, %v1744
  %v2004 = vpack.c.b16 %v1747, %v1746
  %v2005 = vpack.c.b16 %v1749, %v1748
  %2262 = vmatprep.subr.bf16.mxu0 0
  %2263 = vmatpush1.bf16.msra.mxu0 %v1750
  %2264 = vmatprep.subr.bf16.mxu0 0
  %2265 = vmatpush1.bf16.msra.mxu0 %v1751
  %2266 = vmatprep.subr.bf16.mxu0 0
  %2267 = vmatpush1.bf16.msra.mxu0 %v1752
  %2268 = vmatprep.subr.bf16.mxu0 0
  %2269 = vmatpush1.bf16.msra.mxu0 %v1753
  %2270 = vmatprep.subr.bf16.mxu0 0
  %2271 = vmatpush1.bf16.msra.mxu0 %v1754
  %2272 = vmatprep.subr.bf16.mxu0 0
  %2273 = vmatpush1.bf16.msra.mxu0 %v1755
  %2274 = vmatprep.subr.bf16.mxu0 0
  %2275 = vmatpush1.bf16.msra.mxu0 %v1756
  %2276 = vmatprep.subr.bf16.mxu0 0
  %2277 = vmatpush1.bf16.msra.mxu0 %v1757
  %2278 = vmatprep.subr.bf16.mxu0 0
  %2279 = vmatpush1.bf16.msra.mxu0 %v1758
  %2280 = vmatprep.subr.bf16.mxu0 0
  %2281 = vmatpush1.bf16.msra.mxu0 %v1759
  %2282 = vmatprep.subr.bf16.mxu0 0
  %2283 = vmatpush1.bf16.msra.mxu0 %v1760
  %2284 = vmatprep.subr.bf16.mxu0 0
  %2285 = vmatpush1.bf16.msra.mxu0 %v1761
  %2286 = vmatprep.subr.bf16.mxu0 0
  %2287 = vmatpush1.bf16.msra.mxu0 %v1762
  %2288 = vmatprep.subr.bf16.mxu0 0
  %2289 = vmatpush1.bf16.msra.mxu0 %v1763
  %2290 = vmatprep.subr.bf16.mxu0 0
  %2291 = vmatpush1.bf16.msra.mxu0 %v1764
  %2292 = vmatprep.subr.bf16.mxu0 0
  %2293 = vmatpush1.bf16.msra.mxu0 %v1765
  %2294 = vmatprep.mubr.bf16.mxu0 %v663
  %2295 = vmatmul.mubr.bf16.gmra.mrb[0].mxu0 %v662
  %v2296 = vpop.f32.mrb[0].mxu0
  %v2297 = vadd.f32 %v564, %v2296
  %v2298 = vpop.f32.mrb[0].mxu0
  %v2299 = vpop.f32.mrb[0].mxu0
  %v2300 = vadd.f32 %v564, %v2299
  %v2301 = vpop.f32.mrb[0].mxu0
  %2302 = vdwg.mxu0
  %2303 = vmatprep.subr.bf16.mxu0 0
  %2304 = vmatpush1.bf16.msra.mxu0 %v1766
  %2305 = vmatprep.subr.bf16.mxu0 0
  %2306 = vmatpush1.bf16.msra.mxu0 %v1767
  %2307 = vmatprep.subr.bf16.mxu0 0
  %2308 = vmatpush1.bf16.msra.mxu0 %v1768
  %2309 = vmatprep.subr.bf16.mxu0 0
  %2310 = vmatpush1.bf16.msra.mxu0 %v1769
  %2311 = vmatprep.subr.bf16.mxu0 0
  %2312 = vmatpush1.bf16.msra.mxu0 %v1770
  %2313 = vmatprep.subr.bf16.mxu0 0
  %2314 = vmatpush1.bf16.msra.mxu0 %v1771
  %2315 = vmatprep.subr.bf16.mxu0 0
  %2316 = vmatpush1.bf16.msra.mxu0 %v1772
  %2317 = vmatprep.subr.bf16.mxu0 0
  %2318 = vmatpush1.bf16.msra.mxu0 %v1773
  %2319 = vmatprep.subr.bf16.mxu0 0
  %2320 = vmatpush1.bf16.msra.mxu0 %v1774
  %2321 = vmatprep.subr.bf16.mxu0 0
  %2322 = vmatpush1.bf16.msra.mxu0 %v1775
  %2323 = vmatprep.subr.bf16.mxu0 0
  %2324 = vmatpush1.bf16.msra.mxu0 %v1776
  %2325 = vmatprep.subr.bf16.mxu0 0
  %2326 = vmatpush1.bf16.msra.mxu0 %v1777
  %2327 = vmatprep.subr.bf16.mxu0 0
  %2328 = vmatpush1.bf16.msra.mxu0 %v1778
  %2329 = vmatprep.subr.bf16.mxu0 0
  %2330 = vmatpush1.bf16.msra.mxu0 %v1779
  %2331 = vmatprep.subr.bf16.mxu0 0
  %2332 = vmatpush1.bf16.msra.mxu0 %v1780
  %2333 = vmatprep.subr.bf16.mxu0 0
  %2334 = vmatpush1.bf16.msra.mxu0 %v1781
  %2335 = vmatprep.mubr.bf16.mxu0 %v665
  %2336 = vmatmul.mubr.bf16.gmra.mrb[0].mxu0 %v664
  %v2337 = vpop.f32.mrb[0].mxu0
  %v2338 = vadd.f32 %v2297, %v2337
  %v2339 = vpop.f32.mrb[0].mxu0
  %v2340 = vpop.f32.mrb[0].mxu0
  %v2341 = vadd.f32 %v2300, %v2340
  %v2342 = vpop.f32.mrb[0].mxu0
  %2343 = vdwg.mxu0
  %2344 = vmatprep.subr.bf16.mxu0 0
  %2345 = vmatpush1.bf16.msra.mxu0 %v1782
  %2346 = vmatprep.subr.bf16.mxu0 0
  %2347 = vmatpush1.bf16.msra.mxu0 %v1783
  %2348 = vmatprep.subr.bf16.mxu0 0
  %2349 = vmatpush1.bf16.msra.mxu0 %v1784
  %2350 = vmatprep.subr.bf16.mxu0 0
  %2351 = vmatpush1.bf16.msra.mxu0 %v1785
  %2352 = vmatprep.subr.bf16.mxu0 0
  %2353 = vmatpush1.bf16.msra.mxu0 %v1786
  %2354 = vmatprep.subr.bf16.mxu0 0
  %2355 = vmatpush1.bf16.msra.mxu0 %v1787
  %2356 = vmatprep.subr.bf16.mxu0 0
  %2357 = vmatpush1.bf16.msra.mxu0 %v1788
  %2358 = vmatprep.subr.bf16.mxu0 0
  %2359 = vmatpush1.bf16.msra.mxu0 %v1789
  %2360 = vmatprep.subr.bf16.mxu0 0
  %2361 = vmatpush1.bf16.msra.mxu0 %v1790
  %2362 = vmatprep.subr.bf16.mxu0 0
  %2363 = vmatpush1.bf16.msra.mxu0 %v1791
  %2364 = vmatprep.subr.bf16.mxu0 0
  %2365 = vmatpush1.bf16.msra.mxu0 %v1792
  %2366 = vmatprep.subr.bf16.mxu0 0
  %2367 = vmatpush1.bf16.msra.mxu0 %v1793
  %2368 = vmatprep.subr.bf16.mxu0 0
  %2369 = vmatpush1.bf16.msra.mxu0 %v1794
  %2370 = vmatprep.subr.bf16.mxu0 0
  %2371 = vmatpush1.bf16.msra.mxu0 %v1795
  %2372 = vmatprep.subr.bf16.mxu0 0
  %2373 = vmatpush1.bf16.msra.mxu0 %v1796
  %2374 = vmatprep.subr.bf16.mxu0 0
  %2375 = vmatpush1.bf16.msra.mxu0 %v1797
  %2376 = vmatprep.mubr.bf16.mxu0 %v667
  %2377 = vmatmul.mubr.bf16.gmra.mrb[0].mxu0 %v666
  %v2378 = vpop.f32.mrb[0].mxu0
  %v2379 = vadd.f32 %v2338, %v2378
  %v2380 = vpop.f32.mrb[0].mxu0
  %v2381 = vpop.f32.mrb[0].mxu0
  %v2382 = vadd.f32 %v2341, %v2381
  %v2383 = vpop.f32.mrb[0].mxu0
  %2384 = vdwg.mxu0
  %2385 = vmatprep.subr.bf16.mxu0 0
  %2386 = vmatpush1.bf16.msra.mxu0 %v1798
  %2387 = vmatprep.subr.bf16.mxu0 0
  %2388 = vmatpush1.bf16.msra.mxu0 %v1799
  %2389 = vmatprep.subr.bf16.mxu0 0
  %2390 = vmatpush1.bf16.msra.mxu0 %v1800
  %2391 = vmatprep.subr.bf16.mxu0 0
  %2392 = vmatpush1.bf16.msra.mxu0 %v1801
  %2393 = vmatprep.subr.bf16.mxu0 0
  %2394 = vmatpush1.bf16.msra.mxu0 %v1802
  %2395 = vmatprep.subr.bf16.mxu0 0
  %2396 = vmatpush1.bf16.msra.mxu0 %v1803
  %2397 = vmatprep.subr.bf16.mxu0 0
  %2398 = vmatpush1.bf16.msra.mxu0 %v1804
  %2399 = vmatprep.subr.bf16.mxu0 0
  %2400 = vmatpush1.bf16.msra.mxu0 %v1805
  %2401 = vmatprep.subr.bf16.mxu0 0
  %2402 = vmatpush1.bf16.msra.mxu0 %v1806
  %2403 = vmatprep.subr.bf16.mxu0 0
  %2404 = vmatpush1.bf16.msra.mxu0 %v1807
  %2405 = vmatprep.subr.bf16.mxu0 0
  %2406 = vmatpush1.bf16.msra.mxu0 %v1808
  %2407 = vmatprep.subr.bf16.mxu0 0
  %2408 = vmatpush1.bf16.msra.mxu0 %v1809
  %2409 = vmatprep.subr.bf16.mxu0 0
  %2410 = vmatpush1.bf16.msra.mxu0 %v1810
  %2411 = vmatprep.subr.bf16.mxu0 0
  %2412 = vmatpush1.bf16.msra.mxu0 %v1811
  %2413 = vmatprep.subr.bf16.mxu0 0
  %2414 = vmatpush1.bf16.msra.mxu0 %v1812
  %2415 = vmatprep.subr.bf16.mxu0 0
  %2416 = vmatpush1.bf16.msra.mxu0 %v1813
  %2417 = vmatprep.mubr.bf16.mxu0 %v669
  %2418 = vmatmul.mubr.bf16.gmra.mrb[0].mxu0 %v668
  %v2419 = vpop.f32.mrb[0].mxu0
  %v2420 = vadd.f32 %v2379, %v2419
  %v2421 = vpop.f32.mrb[0].mxu0
  %v2422 = vpop.f32.mrb[0].mxu0
  %v2423 = vadd.f32 %v2382, %v2422
  %v2424 = vpop.f32.mrb[0].mxu0
  %2425 = vdwg.mxu0
  %2426 = vmatprep.subr.bf16.mxu0 0
  %2427 = vmatpush1.bf16.msra.mxu0 %v1814
  %2428 = vmatprep.subr.bf16.mxu0 0
  %2429 = vmatpush1.bf16.msra.mxu0 %v1815
  %2430 = vmatprep.subr.bf16.mxu0 0
  %2431 = vmatpush1.bf16.msra.mxu0 %v1816
  %2432 = vmatprep.subr.bf16.mxu0 0
  %2433 = vmatpush1.bf16.msra.mxu0 %v1817
  %2434 = vmatprep.subr.bf16.mxu0 0
  %2435 = vmatpush1.bf16.msra.mxu0 %v1818
  %2436 = vmatprep.subr.bf16.mxu0 0
  %2437 = vmatpush1.bf16.msra.mxu0 %v1819
  %2438 = vmatprep.subr.bf16.mxu0 0
  %2439 = vmatpush1.bf16.msra.mxu0 %v1820
  %2440 = vmatprep.subr.bf16.mxu0 0
  %2441 = vmatpush1.bf16.msra.mxu0 %v1821
  %2442 = vmatprep.subr.bf16.mxu0 0
  %2443 = vmatpush1.bf16.msra.mxu0 %v1822
  %2444 = vmatprep.subr.bf16.mxu0 0
  %2445 = vmatpush1.bf16.msra.mxu0 %v1823
  %2446 = vmatprep.subr.bf16.mxu0 0
  %2447 = vmatpush1.bf16.msra.mxu0 %v1824
  %2448 = vmatprep.subr.bf16.mxu0 0
  %2449 = vmatpush1.bf16.msra.mxu0 %v1825
  %2450 = vmatprep.subr.bf16.mxu0 0
  %2451 = vmatpush1.bf16.msra.mxu0 %v1826
  %2452 = vmatprep.subr.bf16.mxu0 0
  %2453 = vmatpush1.bf16.msra.mxu0 %v1827
  %2454 = vmatprep.subr.bf16.mxu0 0
  %2455 = vmatpush1.bf16.msra.mxu0 %v1828
  %2456 = vmatprep.subr.bf16.mxu0 0
  %2457 = vmatpush1.bf16.msra.mxu0 %v1829
  %2458 = vmatprep.mubr.bf16.mxu0 %v671
  %2459 = vmatmul.mubr.bf16.gmra.mrb[0].mxu0 %v670
  %v2460 = vpop.f32.mrb[0].mxu0
  %v2461 = vadd.f32 %v2420, %v2460
  %v2462 = vpop.f32.mrb[0].mxu0
  %v2463 = vpop.f32.mrb[0].mxu0
  %v2464 = vadd.f32 %v2423, %v2463
  %v2465 = vpop.f32.mrb[0].mxu0
  %2466 = vdwg.mxu0
  %2467 = vmatprep.subr.bf16.mxu0 0
  %2468 = vmatpush1.bf16.msra.mxu0 %v1830
  %2469 = vmatprep.subr.bf16.mxu0 0
  %2470 = vmatpush1.bf16.msra.mxu0 %v1831
  %2471 = vmatprep.subr.bf16.mxu0 0
  %2472 = vmatpush1.bf16.msra.mxu0 %v1832
  %2473 = vmatprep.subr.bf16.mxu0 0
  %2474 = vmatpush1.bf16.msra.mxu0 %v1833
  %2475 = vmatprep.subr.bf16.mxu0 0
  %2476 = vmatpush1.bf16.msra.mxu0 %v1834
  %2477 = vmatprep.subr.bf16.mxu0 0
  %2478 = vmatpush1.bf16.msra.mxu0 %v1835
  %2479 = vmatprep.subr.bf16.mxu0 0
  %2480 = vmatpush1.bf16.msra.mxu0 %v1836
  %2481 = vmatprep.subr.bf16.mxu0 0
  %2482 = vmatpush1.bf16.msra.mxu0 %v1837
  %2483 = vmatprep.subr.bf16.mxu0 0
  %2484 = vmatpush1.bf16.msra.mxu0 %v1838
  %2485 = vmatprep.subr.bf16.mxu0 0
  %2486 = vmatpush1.bf16.msra.mxu0 %v1839
  %2487 = vmatprep.subr.bf16.mxu0 0
  %2488 = vmatpush1.bf16.msra.mxu0 %v1840
  %2489 = vmatprep.subr.bf16.mxu0 0
  %2490 = vmatpush1.bf16.msra.mxu0 %v1841
  %2491 = vmatprep.subr.bf16.mxu0 0
  %2492 = vmatpush1.bf16.msra.mxu0 %v1842
  %2493 = vmatprep.subr.bf16.mxu0 0
  %2494 = vmatpush1.bf16.msra.mxu0 %v1843
  %2495 = vmatprep.subr.bf16.mxu0 0
  %2496 = vmatpush1.bf16.msra.mxu0 %v1844
  %2497 = vmatprep.subr.bf16.mxu0 0
  %2498 = vmatpush1.bf16.msra.mxu0 %v1845
  %2499 = vmatprep.mubr.bf16.mxu0 %v673
  %2500 = vmatmul.mubr.bf16.gmra.mrb[0].mxu0 %v672
  %v2501 = vpop.f32.mrb[0].mxu0
  %v2502 = vadd.f32 %v2461, %v2501
  %v2503 = vpop.f32.mrb[0].mxu0
  %v2504 = vpop.f32.mrb[0].mxu0
  %v2505 = vadd.f32 %v2464, %v2504
  %v2506 = vpop.f32.mrb[0].mxu0
  %2507 = vdwg.mxu0
  %2508 = vmatprep.subr.bf16.mxu0 0
  %2509 = vmatpush1.bf16.msra.mxu0 %v1846
  %2510 = vmatprep.subr.bf16.mxu0 0
  %2511 = vmatpush1.bf16.msra.mxu0 %v1847
  %2512 = vmatprep.subr.bf16.mxu0 0
  %2513 = vmatpush1.bf16.msra.mxu0 %v1848
  %2514 = vmatprep.subr.bf16.mxu0 0
  %2515 = vmatpush1.bf16.msra.mxu0 %v1849
  %2516 = vmatprep.subr.bf16.mxu0 0
  %2517 = vmatpush1.bf16.msra.mxu0 %v1850
  %2518 = vmatprep.subr.bf16.mxu0 0
  %2519 = vmatpush1.bf16.msra.mxu0 %v1851
  %2520 = vmatprep.subr.bf16.mxu0 0
  %2521 = vmatpush1.bf16.msra.mxu0 %v1852
  %2522 = vmatprep.subr.bf16.mxu0 0
  %2523 = vmatpush1.bf16.msra.mxu0 %v1853
  %2524 = vmatprep.subr.bf16.mxu0 0
  %2525 = vmatpush1.bf16.msra.mxu0 %v1854
  %2526 = vmatprep.subr.bf16.mxu0 0
  %2527 = vmatpush1.bf16.msra.mxu0 %v1855
  %2528 = vmatprep.subr.bf16.mxu0 0
  %2529 = vmatpush1.bf16.msra.mxu0 %v1856
  %2530 = vmatprep.subr.bf16.mxu0 0
  %2531 = vmatpush1.bf16.msra.mxu0 %v1857
  %2532 = vmatprep.subr.bf16.mxu0 0
  %2533 = vmatpush1.bf16.msra.mxu0 %v1858
  %2534 = vmatprep.subr.bf16.mxu0 0
  %2535 = vmatpush1.bf16.msra.mxu0 %v1859
  %2536 = vmatprep.subr.bf16.mxu0 0
  %2537 = vmatpush1.bf16.msra.mxu0 %v1860
  %2538 = vmatprep.subr.bf16.mxu0 0
  %2539 = vmatpush1.bf16.msra.mxu0 %v1861
  %2540 = vmatprep.mubr.bf16.mxu0 %v675
  %2541 = vmatmul.mubr.bf16.gmra.mrb[0].mxu0 %v674
  %v2542 = vpop.f32.mrb[0].mxu0
  %v2543 = vadd.f32 %v2502, %v2542
  %v2544 = vpop.f32.mrb[0].mxu0
  %v2545 = vpop.f32.mrb[0].mxu0
  %v2546 = vadd.f32 %v2505, %v2545
  %v2547 = vpop.f32.mrb[0].mxu0
  %2548 = vdwg.mxu0
  %2549 = vmatprep.subr.bf16.mxu0 0
  %2550 = vmatpush1.bf16.msra.mxu0 %v1862
  %2551 = vmatprep.subr.bf16.mxu0 0
  %2552 = vmatpush1.bf16.msra.mxu0 %v1863
  %2553 = vmatprep.subr.bf16.mxu0 0
  %2554 = vmatpush1.bf16.msra.mxu0 %v1864
  %2555 = vmatprep.subr.bf16.mxu0 0
  %2556 = vmatpush1.bf16.msra.mxu0 %v1865
  %2557 = vmatprep.subr.bf16.mxu0 0
  %2558 = vmatpush1.bf16.msra.mxu0 %v1866
  %2559 = vmatprep.subr.bf16.mxu0 0
  %2560 = vmatpush1.bf16.msra.mxu0 %v1867
  %2561 = vmatprep.subr.bf16.mxu0 0
  %2562 = vmatpush1.bf16.msra.mxu0 %v1868
  %2563 = vmatprep.subr.bf16.mxu0 0
  %2564 = vmatpush1.bf16.msra.mxu0 %v1869
  %2565 = vmatprep.subr.bf16.mxu0 0
  %2566 = vmatpush1.bf16.msra.mxu0 %v1870
  %2567 = vmatprep.subr.bf16.mxu0 0
  %2568 = vmatpush1.bf16.msra.mxu0 %v1871
  %2569 = vmatprep.subr.bf16.mxu0 0
  %2570 = vmatpush1.bf16.msra.mxu0 %v1872
  %2571 = vmatprep.subr.bf16.mxu0 0
  %2572 = vmatpush1.bf16.msra.mxu0 %v1873
  %2573 = vmatprep.subr.bf16.mxu0 0
  %2574 = vmatpush1.bf16.msra.mxu0 %v1874
  %2575 = vmatprep.subr.bf16.mxu0 0
  %2576 = vmatpush1.bf16.msra.mxu0 %v1875
  %2577 = vmatprep.subr.bf16.mxu0 0
  %2578 = vmatpush1.bf16.msra.mxu0 %v1876
  %2579 = vmatprep.subr.bf16.mxu0 0
  %2580 = vmatpush1.bf16.msra.mxu0 %v1877
  %2581 = vmatprep.mubr.bf16.mxu0 %v677
  %2582 = vmatmul.mubr.bf16.gmra.mrb[0].mxu0 %v676
  %v2583 = vpop.f32.mrb[0].mxu0
  %v2584 = vadd.f32 %v2543, %v2583
  %v2585 = vpop.f32.mrb[0].mxu0
  %v2586 = vpop.f32.mrb[0].mxu0
  %v2587 = vadd.f32 %v2546, %v2586
  %v2588 = vpop.f32.mrb[0].mxu0
  %2589 = vdwg.mxu0
  %2590 = vmatprep.subr.bf16.mxu0 0
  %2591 = vmatpush1.bf16.msra.mxu0 %v1878
  %2592 = vmatprep.subr.bf16.mxu0 0
  %2593 = vmatpush1.bf16.msra.mxu0 %v1879
  %2594 = vmatprep.subr.bf16.mxu0 0
  %2595 = vmatpush1.bf16.msra.mxu0 %v1880
  %2596 = vmatprep.subr.bf16.mxu0 0
  %2597 = vmatpush1.bf16.msra.mxu0 %v1881
  %2598 = vmatprep.subr.bf16.mxu0 0
  %2599 = vmatpush1.bf16.msra.mxu0 %v1882
  %2600 = vmatprep.subr.bf16.mxu0 0
  %2601 = vmatpush1.bf16.msra.mxu0 %v1883
  %2602 = vmatprep.subr.bf16.mxu0 0
  %2603 = vmatpush1.bf16.msra.mxu0 %v1884
  %2604 = vmatprep.subr.bf16.mxu0 0
  %2605 = vmatpush1.bf16.msra.mxu0 %v1885
  %2606 = vmatprep.subr.bf16.mxu0 0
  %2607 = vmatpush1.bf16.msra.mxu0 %v1886
  %2608 = vmatprep.subr.bf16.mxu0 0
  %2609 = vmatpush1.bf16.msra.mxu0 %v1887
  %2610 = vmatprep.subr.bf16.mxu0 0
  %2611 = vmatpush1.bf16.msra.mxu0 %v1888
  %2612 = vmatprep.subr.bf16.mxu0 0
  %2613 = vmatpush1.bf16.msra.mxu0 %v1889
  %2614 = vmatprep.subr.bf16.mxu0 0
  %2615 = vmatpush1.bf16.msra.mxu0 %v1890
  %2616 = vmatprep.subr.bf16.mxu0 0
  %2617 = vmatpush1.bf16.msra.mxu0 %v1891
  %2618 = vmatprep.subr.bf16.mxu0 0
  %2619 = vmatpush1.bf16.msra.mxu0 %v1892
  %2620 = vmatprep.subr.bf16.mxu0 0
  %2621 = vmatpush1.bf16.msra.mxu0 %v1893
  %2622 = vmatprep.mubr.bf16.mxu0 %v679
  %2623 = vmatmul.mubr.bf16.gmra.mrb[0].mxu0 %v678
  %v2624 = vpop.f32.mrb[0].mxu0
  %v2625 = vadd.f32 %v2584, %v2624
  %v2626 = vpop.f32.mrb[0].mxu0
  %v2627 = vpop.f32.mrb[0].mxu0
  %v2628 = vadd.f32 %v2587, %v2627
  %v2629 = vpop.f32.mrb[0].mxu0
  %2630 = vdwg.mxu0
  %2631 = vmatprep.subr.bf16.mxu0 0
  %2632 = vmatpush1.bf16.msra.mxu0 %v1894
  %2633 = vmatprep.subr.bf16.mxu0 0
  %2634 = vmatpush1.bf16.msra.mxu0 %v1895
  %2635 = vmatprep.subr.bf16.mxu0 0
  %2636 = vmatpush1.bf16.msra.mxu0 %v1896
  %2637 = vmatprep.subr.bf16.mxu0 0
  %2638 = vmatpush1.bf16.msra.mxu0 %v1897
  %2639 = vmatprep.subr.bf16.mxu0 0
  %2640 = vmatpush1.bf16.msra.mxu0 %v1898
  %2641 = vmatprep.subr.bf16.mxu0 0
  %2642 = vmatpush1.bf16.msra.mxu0 %v1899
  %2643 = vmatprep.subr.bf16.mxu0 0
  %2644 = vmatpush1.bf16.msra.mxu0 %v1900
  %2645 = vmatprep.subr.bf16.mxu0 0
  %2646 = vmatpush1.bf16.msra.mxu0 %v1901
  %2647 = vmatprep.subr.bf16.mxu0 0
  %2648 = vmatpush1.bf16.msra.mxu0 %v1902
  %2649 = vmatprep.subr.bf16.mxu0 0
  %2650 = vmatpush1.bf16.msra.mxu0 %v1903
  %2651 = vmatprep.subr.bf16.mxu0 0
  %2652 = vmatpush1.bf16.msra.mxu0 %v1904
  %2653 = vmatprep.subr.bf16.mxu0 0
  %2654 = vmatpush1.bf16.msra.mxu0 %v1905
  %2655 = vmatprep.subr.bf16.mxu0 0
  %2656 = vmatpush1.bf16.msra.mxu0 %v1906
  %2657 = vmatprep.subr.bf16.mxu0 0
  %2658 = vmatpush1.bf16.msra.mxu0 %v1907
  %2659 = vmatprep.subr.bf16.mxu0 0
  %2660 = vmatpush1.bf16.msra.mxu0 %v1908
  %2661 = vmatprep.subr.bf16.mxu0 0
  %2662 = vmatpush1.bf16.msra.mxu0 %v1909
  %2663 = vmatprep.mubr.bf16.mxu0 %v681
  %2664 = vmatmul.mubr.bf16.gmra.mrb[0].mxu0 %v680
  %v2665 = vpop.f32.mrb[0].mxu0
  %v2666 = vadd.f32 %v2625, %v2665
  %v2667 = vpop.f32.mrb[0].mxu0
  %v2668 = vpop.f32.mrb[0].mxu0
  %v2669 = vadd.f32 %v2628, %v2668
  %v2670 = vpop.f32.mrb[0].mxu0
  %2671 = vdwg.mxu0
  %2672 = vmatprep.subr.bf16.mxu0 0
  %2673 = vmatpush1.bf16.msra.mxu0 %v1910
  %2674 = vmatprep.subr.bf16.mxu0 0
  %2675 = vmatpush1.bf16.msra.mxu0 %v1911
  %2676 = vmatprep.subr.bf16.mxu0 0
  %2677 = vmatpush1.bf16.msra.mxu0 %v1912
  %2678 = vmatprep.subr.bf16.mxu0 0
  %2679 = vmatpush1.bf16.msra.mxu0 %v1913
  %2680 = vmatprep.subr.bf16.mxu0 0
  %2681 = vmatpush1.bf16.msra.mxu0 %v1914
  %2682 = vmatprep.subr.bf16.mxu0 0
  %2683 = vmatpush1.bf16.msra.mxu0 %v1915
  %2684 = vmatprep.subr.bf16.mxu0 0
  %2685 = vmatpush1.bf16.msra.mxu0 %v1916
  %2686 = vmatprep.subr.bf16.mxu0 0
  %2687 = vmatpush1.bf16.msra.mxu0 %v1917
  %2688 = vmatprep.subr.bf16.mxu0 0
  %2689 = vmatpush1.bf16.msra.mxu0 %v1918
  %2690 = vmatprep.subr.bf16.mxu0 0
  %2691 = vmatpush1.bf16.msra.mxu0 %v1919
  %2692 = vmatprep.subr.bf16.mxu0 0
  %2693 = vmatpush1.bf16.msra.mxu0 %v1920
  %2694 = vmatprep.subr.bf16.mxu0 0
  %2695 = vmatpush1.bf16.msra.mxu0 %v1921
  %2696 = vmatprep.subr.bf16.mxu0 0
  %2697 = vmatpush1.bf16.msra.mxu0 %v1922
  %2698 = vmatprep.subr.bf16.mxu0 0
  %2699 = vmatpush1.bf16.msra.mxu0 %v1923
  %2700 = vmatprep.subr.bf16.mxu0 0
  %2701 = vmatpush1.bf16.msra.mxu0 %v1924
  %2702 = vmatprep.subr.bf16.mxu0 0
  %2703 = vmatpush1.bf16.msra.mxu0 %v1925
  %2704 = vmatprep.mubr.bf16.mxu0 %v683
  %2705 = vmatmul.mubr.bf16.gmra.mrb[0].mxu0 %v682
  %v2706 = vpop.f32.mrb[0].mxu0
  %v2707 = vadd.f32 %v2666, %v2706
  %v2708 = vpop.f32.mrb[0].mxu0
  %v2709 = vpop.f32.mrb[0].mxu0
  %v2710 = vadd.f32 %v2669, %v2709
  %v2711 = vpop.f32.mrb[0].mxu0
  %2712 = vdwg.mxu0
  %2713 = vmatprep.subr.bf16.mxu0 0
  %2714 = vmatpush1.bf16.msra.mxu0 %v1926
  %2715 = vmatprep.subr.bf16.mxu0 0
  %2716 = vmatpush1.bf16.msra.mxu0 %v1927
  %2717 = vmatprep.subr.bf16.mxu0 0
  %2718 = vmatpush1.bf16.msra.mxu0 %v1928
  %2719 = vmatprep.subr.bf16.mxu0 0
  %2720 = vmatpush1.bf16.msra.mxu0 %v1929
  %2721 = vmatprep.subr.bf16.mxu0 0
  %2722 = vmatpush1.bf16.msra.mxu0 %v1930
  %2723 = vmatprep.subr.bf16.mxu0 0
  %2724 = vmatpush1.bf16.msra.mxu0 %v1931
  %2725 = vmatprep.subr.bf16.mxu0 0
  %2726 = vmatpush1.bf16.msra.mxu0 %v1932
  %2727 = vmatprep.subr.bf16.mxu0 0
  %2728 = vmatpush1.bf16.msra.mxu0 %v1933
  %2729 = vmatprep.subr.bf16.mxu0 0
  %2730 = vmatpush1.bf16.msra.mxu0 %v1934
  %2731 = vmatprep.subr.bf16.mxu0 0
  %2732 = vmatpush1.bf16.msra.mxu0 %v1935
  %2733 = vmatprep.subr.bf16.mxu0 0
  %2734 = vmatpush1.bf16.msra.mxu0 %v1936
  %2735 = vmatprep.subr.bf16.mxu0 0
  %2736 = vmatpush1.bf16.msra.mxu0 %v1937
  %2737 = vmatprep.subr.bf16.mxu0 0
  %2738 = vmatpush1.bf16.msra.mxu0 %v1938
  %2739 = vmatprep.subr.bf16.mxu0 0
  %2740 = vmatpush1.bf16.msra.mxu0 %v1939
  %2741 = vmatprep.subr.bf16.mxu0 0
  %2742 = vmatpush1.bf16.msra.mxu0 %v1940
  %2743 = vmatprep.subr.bf16.mxu0 0
  %2744 = vmatpush1.bf16.msra.mxu0 %v1941
  %2745 = vmatprep.mubr.bf16.mxu0 %v685
  %2746 = vmatmul.mubr.bf16.gmra.mrb[0].mxu0 %v684
  %v2747 = vpop.f32.mrb[0].mxu0
  %v2748 = vadd.f32 %v2707, %v2747
  %v2749 = vpop.f32.mrb[0].mxu0
  %v2750 = vpop.f32.mrb[0].mxu0
  %v2751 = vadd.f32 %v2710, %v2750
  %v2752 = vpop.f32.mrb[0].mxu0
  %2753 = vdwg.mxu0
  %2754 = vmatprep.subr.bf16.mxu0 0
  %2755 = vmatpush1.bf16.msra.mxu0 %v1942
  %2756 = vmatprep.subr.bf16.mxu0 0
  %2757 = vmatpush1.bf16.msra.mxu0 %v1943
  %2758 = vmatprep.subr.bf16.mxu0 0
  %2759 = vmatpush1.bf16.msra.mxu0 %v1944
  %2760 = vmatprep.subr.bf16.mxu0 0
  %2761 = vmatpush1.bf16.msra.mxu0 %v1945
  %2762 = vmatprep.subr.bf16.mxu0 0
  %2763 = vmatpush1.bf16.msra.mxu0 %v1946
  %2764 = vmatprep.subr.bf16.mxu0 0
  %2765 = vmatpush1.bf16.msra.mxu0 %v1947
  %2766 = vmatprep.subr.bf16.mxu0 0
  %2767 = vmatpush1.bf16.msra.mxu0 %v1948
  %2768 = vmatprep.subr.bf16.mxu0 0
  %2769 = vmatpush1.bf16.msra.mxu0 %v1949
  %2770 = vmatprep.subr.bf16.mxu0 0
  %2771 = vmatpush1.bf16.msra.mxu0 %v1950
  %2772 = vmatprep.subr.bf16.mxu0 0
  %2773 = vmatpush1.bf16.msra.mxu0 %v1951
  %2774 = vmatprep.subr.bf16.mxu0 0
  %2775 = vmatpush1.bf16.msra.mxu0 %v1952
  %2776 = vmatprep.subr.bf16.mxu0 0
  %2777 = vmatpush1.bf16.msra.mxu0 %v1953
  %2778 = vmatprep.subr.bf16.mxu0 0
  %2779 = vmatpush1.bf16.msra.mxu0 %v1954
  %2780 = vmatprep.subr.bf16.mxu0 0
  %2781 = vmatpush1.bf16.msra.mxu0 %v1955
  %2782 = vmatprep.subr.bf16.mxu0 0
  %2783 = vmatpush1.bf16.msra.mxu0 %v1956
  %2784 = vmatprep.subr.bf16.mxu0 0
  %2785 = vmatpush1.bf16.msra.mxu0 %v1957
  %2786 = vmatprep.mubr.bf16.mxu0 %v687
  %2787 = vmatmul.mubr.bf16.gmra.mrb[0].mxu0 %v686
  %v2788 = vpop.f32.mrb[0].mxu0
  %v2789 = vadd.f32 %v2748, %v2788
  %v2790 = vpop.f32.mrb[0].mxu0
  %v2791 = vpop.f32.mrb[0].mxu0
  %v2792 = vadd.f32 %v2751, %v2791
  %v2793 = vpop.f32.mrb[0].mxu0
  %2794 = vdwg.mxu0
  %2795 = vmatprep.subr.bf16.mxu0 0
  %2796 = vmatpush1.bf16.msra.mxu0 %v1958
  %2797 = vmatprep.subr.bf16.mxu0 0
  %2798 = vmatpush1.bf16.msra.mxu0 %v1959
  %2799 = vmatprep.subr.bf16.mxu0 0
  %2800 = vmatpush1.bf16.msra.mxu0 %v1960
  %2801 = vmatprep.subr.bf16.mxu0 0
  %2802 = vmatpush1.bf16.msra.mxu0 %v1961
  %2803 = vmatprep.subr.bf16.mxu0 0
  %2804 = vmatpush1.bf16.msra.mxu0 %v1962
  %2805 = vmatprep.subr.bf16.mxu0 0
  %2806 = vmatpush1.bf16.msra.mxu0 %v1963
  %2807 = vmatprep.subr.bf16.mxu0 0
  %2808 = vmatpush1.bf16.msra.mxu0 %v1964
  %2809 = vmatprep.subr.bf16.mxu0 0
  %2810 = vmatpush1.bf16.msra.mxu0 %v1965
  %2811 = vmatprep.subr.bf16.mxu0 0
  %2812 = vmatpush1.bf16.msra.mxu0 %v1966
  %2813 = vmatprep.subr.bf16.mxu0 0
  %2814 = vmatpush1.bf16.msra.mxu0 %v1967
  %2815 = vmatprep.subr.bf16.mxu0 0
  %2816 = vmatpush1.bf16.msra.mxu0 %v1968
  %2817 = vmatprep.subr.bf16.mxu0 0
  %2818 = vmatpush1.bf16.msra.mxu0 %v1969
  %2819 = vmatprep.subr.bf16.mxu0 0
  %2820 = vmatpush1.bf16.msra.mxu0 %v1970
  %2821 = vmatprep.subr.bf16.mxu0 0
  %2822 = vmatpush1.bf16.msra.mxu0 %v1971
  %2823 = vmatprep.subr.bf16.mxu0 0
  %2824 = vmatpush1.bf16.msra.mxu0 %v1972
  %2825 = vmatprep.subr.bf16.mxu0 0
  %2826 = vmatpush1.bf16.msra.mxu0 %v1973
  %2827 = vmatprep.mubr.bf16.mxu0 %v689
  %2828 = vmatmul.mubr.bf16.gmra.mrb[0].mxu0 %v688
  %v2829 = vpop.f32.mrb[0].mxu0
  %v2830 = vadd.f32 %v2789, %v2829
  %v2831 = vpop.f32.mrb[0].mxu0
  %v2832 = vpop.f32.mrb[0].mxu0
  %v2833 = vadd.f32 %v2792, %v2832
  %v2834 = vpop.f32.mrb[0].mxu0
  %2835 = vdwg.mxu0
  %2836 = vmatprep.subr.bf16.mxu0 0
  %2837 = vmatpush1.bf16.msra.mxu0 %v1974
  %2838 = vmatprep.subr.bf16.mxu0 0
  %2839 = vmatpush1.bf16.msra.mxu0 %v1975
  %2840 = vmatprep.subr.bf16.mxu0 0
  %2841 = vmatpush1.bf16.msra.mxu0 %v1976
  %2842 = vmatprep.subr.bf16.mxu0 0
  %2843 = vmatpush1.bf16.msra.mxu0 %v1977
  %2844 = vmatprep.subr.bf16.mxu0 0
  %2845 = vmatpush1.bf16.msra.mxu0 %v1978
  %2846 = vmatprep.subr.bf16.mxu0 0
  %2847 = vmatpush1.bf16.msra.mxu0 %v1979
  %2848 = vmatprep.subr.bf16.mxu0 0
  %2849 = vmatpush1.bf16.msra.mxu0 %v1980
  %2850 = vmatprep.subr.bf16.mxu0 0
  %2851 = vmatpush1.bf16.msra.mxu0 %v1981
  %2852 = vmatprep.subr.bf16.mxu0 0
  %2853 = vmatpush1.bf16.msra.mxu0 %v1982
  %2854 = vmatprep.subr.bf16.mxu0 0
  %2855 = vmatpush1.bf16.msra.mxu0 %v1983
  %2856 = vmatprep.subr.bf16.mxu0 0
  %2857 = vmatpush1.bf16.msra.mxu0 %v1984
  %2858 = vmatprep.subr.bf16.mxu0 0
  %2859 = vmatpush1.bf16.msra.mxu0 %v1985
  %2860 = vmatprep.subr.bf16.mxu0 0
  %2861 = vmatpush1.bf16.msra.mxu0 %v1986
  %2862 = vmatprep.subr.bf16.mxu0 0
  %2863 = vmatpush1.bf16.msra.mxu0 %v1987
  %2864 = vmatprep.subr.bf16.mxu0 0
  %2865 = vmatpush1.bf16.msra.mxu0 %v1988
  %2866 = vmatprep.subr.bf16.mxu0 0
  %2867 = vmatpush1.bf16.msra.mxu0 %v1989
  %2868 = vmatprep.mubr.bf16.mxu0 %v691
  %2869 = vmatmul.mubr.bf16.gmra.mrb[0].mxu0 %v690
  %v2870 = vpop.f32.mrb[0].mxu0
  %v2871 = vadd.f32 %v2830, %v2870
  %v2872 = vpop.f32.mrb[0].mxu0
  %v2873 = vpop.f32.mrb[0].mxu0
  %v2874 = vadd.f32 %v2833, %v2873
  %v2875 = vpop.f32.mrb[0].mxu0
  %2876 = vdwg.mxu0
  %2877 = vmatprep.subr.bf16.mxu0 0
  %2878 = vmatpush1.bf16.msra.mxu0 %v1990
  %2879 = vmatprep.subr.bf16.mxu0 0
  %2880 = vmatpush1.bf16.msra.mxu0 %v1991
  %2881 = vmatprep.subr.bf16.mxu0 0
  %2882 = vmatpush1.bf16.msra.mxu0 %v1992
  %2883 = vmatprep.subr.bf16.mxu0 0
  %2884 = vmatpush1.bf16.msra.mxu0 %v1993
  %2885 = vmatprep.subr.bf16.mxu0 0
  %2886 = vmatpush1.bf16.msra.mxu0 %v1994
  %2887 = vmatprep.subr.bf16.mxu0 0
  %2888 = vmatpush1.bf16.msra.mxu0 %v1995
  %2889 = vmatprep.subr.bf16.mxu0 0
  %2890 = vmatpush1.bf16.msra.mxu0 %v1996
  %2891 = vmatprep.subr.bf16.mxu0 0
  %2892 = vmatpush1.bf16.msra.mxu0 %v1997
  %2893 = vmatprep.subr.bf16.mxu0 0
  %2894 = vmatpush1.bf16.msra.mxu0 %v1998
  %2895 = vmatprep.subr.bf16.mxu0 0
  %2896 = vmatpush1.bf16.msra.mxu0 %v1999
  %2897 = vmatprep.subr.bf16.mxu0 0
  %2898 = vmatpush1.bf16.msra.mxu0 %v2000
  %2899 = vmatprep.subr.bf16.mxu0 0
  %2900 = vmatpush1.bf16.msra.mxu0 %v2001
  %2901 = vmatprep.subr.bf16.mxu0 0
  %2902 = vmatpush1.bf16.msra.mxu0 %v2002
  %2903 = vmatprep.subr.bf16.mxu0 0
  %2904 = vmatpush1.bf16.msra.mxu0 %v2003
  %2905 = vmatprep.subr.bf16.mxu0 0
  %2906 = vmatpush1.bf16.msra.mxu0 %v2004
  %2907 = vmatprep.subr.bf16.mxu0 0
  %2908 = vmatpush1.bf16.msra.mxu0 %v2005
  %2909 = vmatprep.mubr.bf16.mxu0 %v693
  %2910 = vmatmul.mubr.bf16.gmra.mrb[0].mxu0 %v692
  %v2911 = vpop.f32.mrb[0].mxu0
  %v2912 = vadd.f32 %v2871, %v2911
  %v2913 = vpop.f32.mrb[0].mxu0
  %v2914 = vpop.f32.mrb[0].mxu0
  %v2915 = vadd.f32 %v2874, %v2914
  %v2916 = vpop.f32.mrb[0].mxu0
  %2917 = vdwg.mxu0
  %2918 = vst [vmem:[%s3] sm:$0xff] %v2912
  %2919 = vst [vmem:[%s3 + $0x8] sm:$0xff] %v2915
  // Predicated region
  $region14: #{discriminator_forward.7} parent=0 // pred_check
    _
  $region15: #{discriminator_forward.7} parent=0 // pred_check_branch
    %2921 = sbr.rel (0) target = $region17
  $region16: #{discriminator_forward.7} parent=0 // pred_region
    _
  $region17: #{discriminator_forward.7} parent=0 // pred_fallthru
    _
  // Predicated region
  $region18: #{discriminator_forward.7} parent=0 // pred_check
    _
  $region19: #{discriminator_forward.7} parent=0 // pred_check_branch
    %2923 = sbr.rel (0) target = $region21
  $region20: #{discriminator_forward.7} parent=0 // pred_region
    _
  $region21: #{discriminator_forward.7} parent=0 // pred_fallthru
    _

</llo_original>
